<compile_context>
chip_gen: v6e
topology: v6e:2x2x1
jax: 0.10.0
libtpu: 0.0.40
codegen_flags: <defaults>
</compile_context>

<pallas_src>
import math
from functools import partial

import jax
import jax.numpy as jnp
from jax import lax
from jax.experimental import pallas as pl
from jax.experimental.pallas import tpu as pltpu


# ----------------------------------------------------------------------------
# helpers
# ----------------------------------------------------------------------------
def _gelu_exact(x):
    # PyTorch nn.GELU() default (erf form), computed in f32.
    return 0.5 * x * (1.0 + lax.erf(x * 0.7071067811865476))


def _divisor_tile(dim, cap):
    """Largest multiple-of-8 divisor of `dim` that is <= cap (else full dim)."""
    if dim <= cap:
        return dim
    t = cap - (cap % 8)
    while t >= 8:
        if dim % t == 0:
            return t
        t -= 8
    return dim


def _tile_m(M, cap=256):
    # second-to-last block dim: either full extent or a multiple of 8 (cap is).
    return M if M <= cap else cap


def _tile_n(N, cap=512):
    # last block dim: either full extent or a multiple of 128 (cap is).
    return N if N <= cap else cap


# ----------------------------------------------------------------------------
# Pallas kernels
# ----------------------------------------------------------------------------
def _ln_linear_kernel(x_ref, g_ref, b_ref, w_ref, bias_ref, o_ref, *, eps, activation):
    """y = LN(x) @ W + bias [+ GELU]   (LN in f32, matmul inputs bf16, f32 acc)."""
    x = x_ref[...].astype(jnp.float32)
    mean = jnp.mean(x, axis=-1, keepdims=True)
    var = jnp.mean(jnp.square(x - mean), axis=-1, keepdims=True)
    y = (x - mean) * lax.rsqrt(var + eps)
    y = y * g_ref[...].astype(jnp.float32) + b_ref[...].astype(jnp.float32)
    acc = jnp.dot(y.astype(jnp.bfloat16), w_ref[...].astype(jnp.bfloat16),
                  preferred_element_type=jnp.float32)
    acc = acc + bias_ref[...].astype(jnp.float32)
    if activation == "gelu":
        acc = _gelu_exact(acc)
    o_ref[...] = acc.astype(o_ref.dtype)


def _linear_res_kernel(x_ref, w_ref, bias_ref, r_ref, o_ref):
    """y = x @ W + bias + residual   (matmul inputs bf16, f32 acc)."""
    acc = jnp.dot(x_ref[...].astype(jnp.bfloat16), w_ref[...].astype(jnp.bfloat16),
                  preferred_element_type=jnp.float32)
    acc = acc + bias_ref[...].astype(jnp.float32) + r_ref[...].astype(jnp.float32)
    o_ref[...] = acc.astype(o_ref.dtype)


def _attn_proj_kernel(qkv_ref, pw_ref, pb_ref, r_ref, o_ref, *,
                      num_heads, head_dim, scale):
    """All-heads attention + output projection + residual for one batch element.

    qkv_ref : (S, 3*D) bf16, packed as [q | k | v], each D = num_heads*head_dim
              wide, head h occupying columns [h*hd, (h+1)*hd) inside its
              section (matches the PyTorch reshape(B, S, 3, nH, hd)).
    The projection is accumulated per head:
        attn @ Wproj = sum_h oh @ Wproj[h*hd:(h+1)*hd, :]
    which avoids any in-kernel concat/transpose.  Softmax scale is applied to
    the f32 scores after the MXU matmul (equivalent to scaling q, but avoids an
    extra bf16 round-trip on q).
    """
    D = num_heads * head_dim
    qkv = qkv_ref[...]                                   # (S, 3D) bf16
    acc = pb_ref[...].astype(jnp.float32) + r_ref[...].astype(jnp.float32)   # (S, D)
    for h in range(num_heads):                           # static unroll over heads
        q = qkv[:, h * head_dim:(h + 1) * head_dim]
        k = qkv[:, D + h * head_dim:D + (h + 1) * head_dim]
        v = qkv[:, 2 * D + h * head_dim:2 * D + (h + 1) * head_dim]
        # scores = (q @ k^T) * scale  (contract last dims; no explicit transpose)
        s = lax.dot_general(q.astype(jnp.bfloat16), k.astype(jnp.bfloat16),
                            (((1,), (1,)), ((), ())),
                            preferred_element_type=jnp.float32) * scale      # (S, S)
        m = jnp.max(s, axis=-1, keepdims=True)
        p = jnp.exp(s - m)
        denom = jnp.sum(p, axis=-1, keepdims=True)
        oh = jnp.dot(p.astype(jnp.bfloat16), v.astype(jnp.bfloat16),
                     preferred_element_type=jnp.float32)                     # (S, hd)
        oh = oh * pl.reciprocal(denom, approx=True)
        pw_h = pw_ref[h * head_dim:(h + 1) * head_dim, :]                    # (hd, D)
        acc = acc + jnp.dot(oh.astype(jnp.bfloat16), pw_h.astype(jnp.bfloat16),
                            preferred_element_type=jnp.float32)
    o_ref[...] = acc.astype(o_ref.dtype)


# ----------------------------------------------------------------------------
# pallas_call wrappers
# ----------------------------------------------------------------------------
def ln_linear(x, gamma, beta, w, bias, *, eps=1e-6, activation=None, out_dtype=None):
    """Fused LayerNorm + Linear (+ GELU) over a (M, K) activation."""
    M, K = x.shape
    N = w.shape[1]
    out_dtype = x.dtype if out_dtype is None else out_dtype
    tm, tn = _tile_m(M), _tile_n(N)
    grid = (pl.cdiv(M, tm), pl.cdiv(N, tn))
    return pl.pallas_call(
        partial(_ln_linear_kernel, eps=eps, activation=activation),
        grid=grid,
        in_specs=[
            pl.BlockSpec((tm, K), lambda i, j: (i, 0)),
            pl.BlockSpec((1, K), lambda i, j: (0, 0)),
            pl.BlockSpec((1, K), lambda i, j: (0, 0)),
            pl.BlockSpec((K, tn), lambda i, j: (0, j)),
            pl.BlockSpec((1, tn), lambda i, j: (0, j)),
        ],
        out_specs=pl.BlockSpec((tm, tn), lambda i, j: (i, j)),
        out_shape=jax.ShapeDtypeStruct((M, N), out_dtype),
        compiler_params=pltpu.CompilerParams(
            dimension_semantics=("parallel", "parallel")),
    )(x, gamma.reshape(1, K), beta.reshape(1, K), w, bias.reshape(1, N))


def linear_res(x, w, bias, residual):
    """Fused Linear + bias + residual add over a (M, K) activation.

    Output dtype follows the residual (keeps the f32 residual stream even when
    the matmul input activation is stored bf16).
    """
    M, K = x.shape
    N = w.shape[1]
    tm, tn = _tile_m(M), _tile_n(N)
    grid = (pl.cdiv(M, tm), pl.cdiv(N, tn))
    return pl.pallas_call(
        _linear_res_kernel,
        grid=grid,
        in_specs=[
            pl.BlockSpec((tm, K), lambda i, j: (i, 0)),
            pl.BlockSpec((K, tn), lambda i, j: (0, j)),
            pl.BlockSpec((1, tn), lambda i, j: (0, j)),
            pl.BlockSpec((tm, tn), lambda i, j: (i, j)),
        ],
        out_specs=pl.BlockSpec((tm, tn), lambda i, j: (i, j)),
        out_shape=jax.ShapeDtypeStruct((M, N), residual.dtype),
        compiler_params=pltpu.CompilerParams(
            dimension_semantics=("parallel", "parallel")),
    )(x, w, bias.reshape(1, N), residual)


def embed_with_pos(x2d, w, bias, pos_sd, B, S):
    """Embed linear with the positional embedding fused as a per-S-tile residual.

    x2d : (B*S, C), pos_sd : (S, D) -- pos is indexed per S-tile (shared across
    batch via the index_map), so no (B, S, D) broadcast is ever materialized.
    """
    C = x2d.shape[1]
    D = w.shape[1]
    ts = _divisor_tile(S, 256)
    ns = S // ts
    x3 = x2d.reshape(B, S, C)
    out = pl.pallas_call(
        _linear_res_kernel,
        grid=(B, ns),
        in_specs=[
            pl.BlockSpec((None, ts, C), lambda b, s: (b, s, 0)),
            pl.BlockSpec((C, D), lambda b, s: (0, 0)),
            pl.BlockSpec((1, D), lambda b, s: (0, 0)),
            pl.BlockSpec((ts, D), lambda b, s: (s, 0)),      # pos, batch-invariant
        ],
        out_specs=pl.BlockSpec((None, ts, D), lambda b, s: (b, s, 0)),
        out_shape=jax.ShapeDtypeStruct((B, S, D), pos_sd.dtype),
        compiler_params=pltpu.CompilerParams(
            dimension_semantics=("parallel", "parallel")),
    )(x3, w, bias.reshape(1, D), pos_sd)
    return out.reshape(B * S, D)


def attn_proj(qkv2d, proj_w, proj_b, residual2d, B, S, num_heads, head_dim, scale):
    """Fused multi-head attention + output projection + residual, grid over batch."""
    D = num_heads * head_dim
    qkv = qkv2d.reshape(B, S, 3 * D)
    res = residual2d.reshape(B, S, D)
    out = pl.pallas_call(
        partial(_attn_proj_kernel, num_heads=num_heads, head_dim=head_dim, scale=scale),
        grid=(B,),
        in_specs=[
            pl.BlockSpec((None, S, 3 * D), lambda b: (b, 0, 0)),
            pl.BlockSpec((D, D), lambda b: (0, 0)),
            pl.BlockSpec((1, D), lambda b: (0, 0)),
            pl.BlockSpec((None, S, D), lambda b: (b, 0, 0)),
        ],
        out_specs=pl.BlockSpec((None, S, D), lambda b: (b, 0, 0)),
        out_shape=jax.ShapeDtypeStruct((B, S, D), residual2d.dtype),
        compiler_params=pltpu.CompilerParams(dimension_semantics=("parallel",)),
    )(qkv, proj_w, proj_b.reshape(1, D), res)
    # TODO(synk): full (S, S) scores live in VMEM per head; a flash-style KV
    # tiling is needed for production SAM2 sequence lengths (S = 64*64).
    return out.reshape(B * S, D)


# ----------------------------------------------------------------------------
# Full module forward
# ----------------------------------------------------------------------------
def sam2_pe_simple_lst_forward(x_nchw, params, *, num_heads):
    B, C, H, W = x_nchw.shape
    D = params["embed_w"].shape[1]
    S = H * W
    hd = D // num_heads
    scale = 1.0 / math.sqrt(hd)   # F.scaled_dot_product_attention default scale

    # NCHW -> NHWC -> (tokens, C)    (LSTEmbed permute + Linear)
    x = jnp.transpose(x_nchw, (0, 2, 3, 1)).reshape(B * S, C)

    # positional embedding (bicubic resize only if spatial size differs;
    # identity-size bicubic resample is exact, so skipping it is equivalent)
    pos = params["pos_embed"]  # (1, S0, S0, D)
    if (pos.shape[1], pos.shape[2]) != (H, W):
        # TODO(synk): jax.image.resize bicubic uses a=-0.5 vs torch's a=-0.75 kernel.
        pos = jax.image.resize(pos, (1, H, W, D), method="bicubic")
    pos_sd = pos.reshape(S, D).astype(x.dtype)

    # embed linear with pos-embed fused as a per-tile residual (no broadcast)
    t = embed_with_pos(x, params["embed_w"], params["embed_b"], pos_sd, B, S)

    for blk in params["blocks"]:
        # --- attention branch:  LN1+QKV fused (bf16 out); attn+proj+residual fused ---
        qkv = ln_linear(t, blk["ln1_g"], blk["ln1_b"],
                        blk["qkv_w"], blk["qkv_b"],
                        out_dtype=jnp.bfloat16)                      # (B*S, 3D) bf16
        t = attn_proj(qkv, blk["proj_w"], blk["proj_b"], t,
                      B, S, num_heads, hd, scale)                    # (B*S, D)  f32

        # --- MLP branch:  LN2+fc1+GELU fused (bf16 out); fc2+residual fused ---
        h = ln_linear(t, blk["ln2_g"], blk["ln2_b"],
                      blk["fc1_w"], blk["fc1_b"], activation="gelu",
                      out_dtype=jnp.bfloat16)                        # (B*S, 4D) bf16
        t = linear_res(h, blk["fc2_w"], blk["fc2_b"], t)             # (B*S, D)  f32

    # (B, H, W, D) -> NCHW (final permute in PyTorch forward)
    return jnp.transpose(t.reshape(B, H, W, D), (0, 3, 1, 2))


# ----------------------------------------------------------------------------
# Deterministic parameter init (shapes per module __init__)
# ----------------------------------------------------------------------------
def init_params(key, *, feature_dim, embed_dim, depth, input_feature_size):
    def dense(k, fan_in, fan_out):
        kw, kb = jax.random.split(k)
        # weights stored bf16 (MXU inputs); biases / LN params stay f32
        w = (jax.random.normal(kw, (fan_in, fan_out), jnp.float32) * 0.02
             ).astype(jnp.bfloat16)
        b = jax.random.normal(kb, (fan_out,), jnp.float32) * 0.02
        return w, b

    keys = jax.random.split(key, 2 + depth)
    params = {}
    params["embed_w"], params["embed_b"] = dense(keys[0], feature_dim, embed_dim)
    params["pos_embed"] = (
        jax.random.normal(keys[1], (1, input_feature_size, input_feature_size, embed_dim),
                          jnp.float32) * 0.02)
    blocks = []
    for i in range(depth):
        bk = jax.random.split(keys[2 + i], 4)
        blk = {
            "ln1_g": jnp.ones((embed_dim,), jnp.float32),
            "ln1_b": jnp.zeros((embed_dim,), jnp.float32),
            "ln2_g": jnp.ones((embed_dim,), jnp.float32),
            "ln2_b": jnp.zeros((embed_dim,), jnp.float32),
        }
        blk["qkv_w"], blk["qkv_b"] = dense(bk[0], embed_dim, 3 * embed_dim)
        blk["proj_w"], blk["proj_b"] = dense(bk[1], embed_dim, embed_dim)
        blk["fc1_w"], blk["fc1_b"] = dense(bk[2], embed_dim, 4 * embed_dim)
        blk["fc2_w"], blk["fc2_b"] = dense(bk[3], 4 * embed_dim, embed_dim)
        blocks.append(blk)
    params["blocks"] = blocks
    return params


# ----------------------------------------------------------------------------
if __name__ == "__main__":
    # small config consistent with the module:
    #   input_feature_size=8, feature_dim=32, decoder_embed_dim=128,
    #   transformer_depth=2, num_transformer_heads=4, window_size=0
    B, C, H, W = 2, 32, 8, 8
    EMBED_DIM, DEPTH, NUM_HEADS, POS_SIZE = 128, 2, 4, 8

    key = jax.random.PRNGKey(0)
    kx, kp = jax.random.split(key)
    x = jax.random.normal(kx, (B, C, H, W), jnp.float32)          # NCHW like PyTorch
    params = init_params(kp, feature_dim=C, embed_dim=EMBED_DIM,
                         depth=DEPTH, input_feature_size=POS_SIZE)

    fwd = jax.jit(partial(sam2_pe_simple_lst_forward, num_heads=NUM_HEADS))
    out = fwd(x, params)
    jax.block_until_ready(out)

    assert out.shape == (B, EMBED_DIM, H, W), out.shape
    assert out.dtype == jnp.float32
    assert bool(jnp.all(jnp.isfinite(out)))
    print("KERNEL_OK")
</pallas_src>

<mosaic_0001>
module attributes {stable_mosaic.version = 11 : i64} {
  func.func @_linear_res_kernel(%arg0: i32, %arg1: i32, %arg2: memref<1x64x32xf32, #tpu.memory_space<vmem>>, %arg3: memref<32x128xbf16, #tpu.memory_space<vmem>>, %arg4: memref<1x128xf32, #tpu.memory_space<vmem>>, %arg5: memref<64x128xf32, #tpu.memory_space<vmem>>, %arg6: memref<1x64x128xf32, #tpu.memory_space<vmem>>) attributes {dimension_semantics = [#tpu.dimension_semantics<parallel>, #tpu.dimension_semantics<parallel>], iteration_bounds = array<i64: 2, 1>, scalar_prefetch = 0 : i64, scratch_operands = 0 : i64, tpu.core_type = #tpu.core_type<tc>, window_params = [{transform_indices = @transform_0, window_bounds = array<i64: 1, 64, 32>}, {pipeline_mode = #tpu.pipeline_mode<synchronous>, transform_indices = @transform_1, window_bounds = array<i64: 32, 128>}, {pipeline_mode = #tpu.pipeline_mode<synchronous>, transform_indices = @transform_2, window_bounds = array<i64: 1, 128>}, {transform_indices = @transform_3, window_bounds = array<i64: 64, 128>}, {transform_indices = @transform_4, window_bounds = array<i64: 1, 64, 128>}]} {
    %c0 = arith.constant 0 : index
    %c0_0 = arith.constant 0 : index
    %c0_1 = arith.constant 0 : index
    %0 = vector.load %arg2[%c0, %c0_0, %c0_1] : memref<1x64x32xf32, #tpu.memory_space<vmem>>, vector<1x64x32xf32>
    %1 = vector.shape_cast %0 : vector<1x64x32xf32> to vector<64x32xf32>
    %2 = arith.truncf %1 : vector<64x32xf32> to vector<64x32xbf16>
    %c0_2 = arith.constant 0 : index
    %c0_3 = arith.constant 0 : index
    %3 = vector.load %arg3[%c0_2, %c0_3] : memref<32x128xbf16, #tpu.memory_space<vmem>>, vector<32x128xbf16>
    %cst = arith.constant dense<0.000000e+00> : vector<64x128xf32>
    %4 = tpu.matmul %2, %3, %cst {dimension_numbers = #tpu.dot_dimension_numbers<[1], [0], [0], [1], [0, 0, 1, 1], [], []>} : vector<64x32xbf16>, vector<32x128xbf16>, vector<64x128xf32> -> vector<64x128xf32>
    %c0_4 = arith.constant 0 : index
    %c0_5 = arith.constant 0 : index
    %5 = vector.load %arg4[%c0_4, %c0_5] : memref<1x128xf32, #tpu.memory_space<vmem>>, vector<1x128xf32>
    %6 = vector.broadcast %5 : vector<1x128xf32> to vector<64x128xf32>
    %7 = arith.addf %4, %6 : vector<64x128xf32>
    %c0_6 = arith.constant 0 : index
    %c0_7 = arith.constant 0 : index
    %8 = vector.load %arg5[%c0_6, %c0_7] : memref<64x128xf32, #tpu.memory_space<vmem>>, vector<64x128xf32>
    %9 = arith.addf %7, %8 : vector<64x128xf32>
    %c0_8 = arith.constant 0 : index
    %c0_9 = arith.constant 0 : index
    %c0_10 = arith.constant 0 : index
    %10 = vector.load %arg6[%c0_8, %c0_9, %c0_10] : memref<1x64x128xf32, #tpu.memory_space<vmem>>, vector<1x64x128xf32>
    %11 = vector.shape_cast %10 : vector<1x64x128xf32> to vector<64x128xf32>
    %12 = vector.shape_cast %9 : vector<64x128xf32> to vector<1x64x128xf32>
    tpu.vector_store %arg6[%c0_8, %c0_9, %c0_10], %12 {strides = array<i32>} : memref<1x64x128xf32, #tpu.memory_space<vmem>>, vector<1x64x128xf32>,
    return
  }
  func.func @transform_0(%arg0: i32, %arg1: i32) -> (i32, i32, i32) {
    %c0_i32 = arith.constant 0 : i32
    %c0_i32_0 = arith.constant 0 : i32
    return %arg0, %arg1, %c0_i32 : i32, i32, i32
  }
  func.func @transform_1(%arg0: i32, %arg1: i32) -> (i32, i32) {
    %c0_i32 = arith.constant 0 : i32
    %c0_i32_0 = arith.constant 0 : i32
    %c0_i32_1 = arith.constant 0 : i32
    return %c0_i32, %c0_i32_0 : i32, i32
  }
  func.func @transform_2(%arg0: i32, %arg1: i32) -> (i32, i32) {
    %c0_i32 = arith.constant 0 : i32
    %c0_i32_0 = arith.constant 0 : i32
    %c0_i32_1 = arith.constant 0 : i32
    return %c0_i32, %c0_i32_0 : i32, i32
  }
  func.func @transform_3(%arg0: i32, %arg1: i32) -> (i32, i32) {
    %c0_i32 = arith.constant 0 : i32
    %c0_i32_0 = arith.constant 0 : i32
    return %arg1, %c0_i32 : i32, i32
  }
  func.func @transform_4(%arg0: i32, %arg1: i32) -> (i32, i32, i32) {
    %c0_i32 = arith.constant 0 : i32
    %c0_i32_0 = arith.constant 0 : i32
    return %arg0, %arg1, %c0_i32 : i32, i32, i32
  }
}

module attributes {stable_mosaic.version = 11 : i64} {
  func.func @_ln_linear_kernel(%arg0: i32, %arg1: i32, %arg2: memref<128x128xf32, #tpu.memory_space<vmem>>, %arg3: memref<1x128xf32, #tpu.memory_space<vmem>>, %arg4: memref<1x128xf32, #tpu.memory_space<vmem>>, %arg5: memref<128x384xbf16, #tpu.memory_space<vmem>>, %arg6: memref<1x384xf32, #tpu.memory_space<vmem>>, %arg7: memref<128x384xbf16, #tpu.memory_space<vmem>>) attributes {dimension_semantics = [#tpu.dimension_semantics<parallel>, #tpu.dimension_semantics<parallel>], iteration_bounds = array<i64: 1, 1>, scalar_prefetch = 0 : i64, scratch_operands = 0 : i64, tpu.core_type = #tpu.core_type<tc>, window_params = [{transform_indices = @transform_0, window_bounds = array<i64: 128, 128>}, {pipeline_mode = #tpu.pipeline_mode<synchronous>, transform_indices = @transform_1, window_bounds = array<i64: 1, 128>}, {pipeline_mode = #tpu.pipeline_mode<synchronous>, transform_indices = @transform_2, window_bounds = array<i64: 1, 128>}, {transform_indices = @transform_3, window_bounds = array<i64: 128, 384>}, {transform_indices = @transform_4, window_bounds = array<i64: 1, 384>}, {transform_indices = @transform_5, window_bounds = array<i64: 128, 384>}]} {
    %c0 = arith.constant 0 : index
    %c0_0 = arith.constant 0 : index
    %0 = vector.load %arg2[%c0, %c0_0] : memref<128x128xf32, #tpu.memory_space<vmem>>, vector<128x128xf32>
    %cst = arith.constant dense<0.000000e+00> : vector<128xf32>
    %1 = vector.multi_reduction <add>, %0, %cst [1] : vector<128x128xf32> to vector<128xf32>
    %2 = vector.shape_cast %1 : vector<128xf32> to vector<128x1xf32>
    %cst_1 = arith.constant 1.280000e+02 : f32
    %3 = vector.broadcast %cst_1 : f32 to vector<128x1xf32>
    %4 = arith.divf %2, %3 : vector<128x1xf32>
    %5 = vector.broadcast %4 : vector<128x1xf32> to vector<128x128xf32>
    %6 = arith.subf %0, %5 : vector<128x128xf32>
    %7 = arith.mulf %6, %6 : vector<128x128xf32>
    %cst_2 = arith.constant dense<0.000000e+00> : vector<128xf32>
    %8 = vector.multi_reduction <add>, %7, %cst_2 [1] : vector<128x128xf32> to vector<128xf32>
    %9 = vector.shape_cast %8 : vector<128xf32> to vector<128x1xf32>
    %cst_3 = arith.constant 1.280000e+02 : f32
    %10 = vector.broadcast %cst_3 : f32 to vector<128x1xf32>
    %11 = arith.divf %9, %10 : vector<128x1xf32>
    %12 = vector.broadcast %4 : vector<128x1xf32> to vector<128x128xf32>
    %13 = arith.subf %0, %12 : vector<128x128xf32>
    %cst_4 = arith.constant 9.99999997E-7 : f32
    %14 = vector.broadcast %cst_4 : f32 to vector<128x1xf32>
    %15 = arith.addf %11, %14 : vector<128x1xf32>
    %16 = math.rsqrt %15 : vector<128x1xf32>
    %17 = vector.broadcast %16 : vector<128x1xf32> to vector<128x128xf32>
    %18 = arith.mulf %13, %17 : vector<128x128xf32>
    %c0_5 = arith.constant 0 : index
    %c0_6 = arith.constant 0 : index
    %19 = vector.load %arg3[%c0_5, %c0_6] : memref<1x128xf32, #tpu.memory_space<vmem>>, vector<1x128xf32>
    %20 = vector.broadcast %19 : vector<1x128xf32> to vector<128x128xf32>
    %21 = arith.mulf %18, %20 : vector<128x128xf32>
    %c0_7 = arith.constant 0 : index
    %c0_8 = arith.constant 0 : index
    %22 = vector.load %arg4[%c0_7, %c0_8] : memref<1x128xf32, #tpu.memory_space<vmem>>, vector<1x128xf32>
    %23 = vector.broadcast %22 : vector<1x128xf32> to vector<128x128xf32>
    %24 = arith.addf %21, %23 : vector<128x128xf32>
    %25 = arith.truncf %24 : vector<128x128xf32> to vector<128x128xbf16>
    %c0_9 = arith.constant 0 : index
    %c0_10 = arith.constant 0 : index
    %26 = vector.load %arg5[%c0_9, %c0_10] : memref<128x384xbf16, #tpu.memory_space<vmem>>, vector<128x384xbf16>
    %cst_11 = arith.constant dense<0.000000e+00> : vector<128x384xf32>
    %27 = tpu.matmul %25, %26, %cst_11 {dimension_numbers = #tpu.dot_dimension_numbers<[1], [0], [0], [1], [0, 0, 1, 1], [], []>} : vector<128x128xbf16>, vector<128x384xbf16>, vector<128x384xf32> -> vector<128x384xf32>
    %c0_12 = arith.constant 0 : index
    %c0_13 = arith.constant 0 : index
    %28 = vector.load %arg6[%c0_12, %c0_13] : memref<1x384xf32, #tpu.memory_space<vmem>>, vector<1x384xf32>
    %29 = vector.broadcast %28 : vector<1x384xf32> to vector<128x384xf32>
    %30 = arith.addf %27, %29 : vector<128x384xf32>
    %31 = arith.truncf %30 : vector<128x384xf32> to vector<128x384xbf16>
    %c0_14 = arith.constant 0 : index
    %c0_15 = arith.constant 0 : index
    %32 = vector.load %arg7[%c0_14, %c0_15] : memref<128x384xbf16, #tpu.memory_space<vmem>>, vector<128x384xbf16>
    tpu.vector_store %arg7[%c0_14, %c0_15], %31 {strides = array<i32>} : memref<128x384xbf16, #tpu.memory_space<vmem>>, vector<128x384xbf16>,
    return
  }
  func.func @transform_0(%arg0: i32, %arg1: i32) -> (i32, i32) {
    %c0_i32 = arith.constant 0 : i32
    %c0_i32_0 = arith.constant 0 : i32
    return %arg0, %c0_i32 : i32, i32
  }
  func.func @transform_1(%arg0: i32, %arg1: i32) -> (i32, i32) {
    %c0_i32 = arith.constant 0 : i32
    %c0_i32_0 = arith.constant 0 : i32
    %c0_i32_1 = arith.constant 0 : i32
    return %c0_i32, %c0_i32_0 : i32, i32
  }
  func.func @transform_2(%arg0: i32, %arg1: i32) -> (i32, i32) {
    %c0_i32 = arith.constant 0 : i32
    %c0_i32_0 = arith.constant 0 : i32
    %c0_i32_1 = arith.constant 0 : i32
    return %c0_i32, %c0_i32_0 : i32, i32
  }
  func.func @transform_3(%arg0: i32, %arg1: i32) -> (i32, i32) {
    %c0_i32 = arith.constant 0 : i32
    %c0_i32_0 = arith.constant 0 : i32
    return %c0_i32, %arg1 : i32, i32
  }
  func.func @transform_4(%arg0: i32, %arg1: i32) -> (i32, i32) {
    %c0_i32 = arith.constant 0 : i32
    %c0_i32_0 = arith.constant 0 : i32
    return %c0_i32, %arg1 : i32, i32
  }
  func.func @transform_5(%arg0: i32, %arg1: i32) -> (i32, i32) {
    %c0_i32 = arith.constant 0 : i32
    return %arg0, %arg1 : i32, i32
  }
}

module attributes {stable_mosaic.version = 11 : i64} {
  func.func @_attn_proj_kernel(%arg0: i32, %arg1: memref<1x64x384xbf16, #tpu.memory_space<vmem>>, %arg2: memref<128x128xbf16, #tpu.memory_space<vmem>>, %arg3: memref<1x128xf32, #tpu.memory_space<vmem>>, %arg4: memref<1x64x128xf32, #tpu.memory_space<vmem>>, %arg5: memref<1x64x128xf32, #tpu.memory_space<vmem>>) attributes {dimension_semantics = [#tpu.dimension_semantics<parallel>], iteration_bounds = array<i64: 2>, scalar_prefetch = 0 : i64, scratch_operands = 0 : i64, tpu.core_type = #tpu.core_type<tc>, window_params = [{transform_indices = @transform_0, window_bounds = array<i64: 1, 64, 384>}, {pipeline_mode = #tpu.pipeline_mode<synchronous>, transform_indices = @transform_1, window_bounds = array<i64: 128, 128>}, {pipeline_mode = #tpu.pipeline_mode<synchronous>, transform_indices = @transform_2, window_bounds = array<i64: 1, 128>}, {transform_indices = @transform_3, window_bounds = array<i64: 1, 64, 128>}, {transform_indices = @transform_4, window_bounds = array<i64: 1, 64, 128>}]} {
    %c0 = arith.constant 0 : index
    %c0_0 = arith.constant 0 : index
    %c0_1 = arith.constant 0 : index
    %0 = vector.load %arg1[%c0, %c0_0, %c0_1] : memref<1x64x384xbf16, #tpu.memory_space<vmem>>, vector<1x64x384xbf16>
    %1 = vector.shape_cast %0 : vector<1x64x384xbf16> to vector<64x384xbf16>
    %c0_2 = arith.constant 0 : index
    %c0_3 = arith.constant 0 : index
    %2 = vector.load %arg3[%c0_2, %c0_3] : memref<1x128xf32, #tpu.memory_space<vmem>>, vector<1x128xf32>
    %c0_4 = arith.constant 0 : index
    %c0_5 = arith.constant 0 : index
    %c0_6 = arith.constant 0 : index
    %3 = vector.load %arg4[%c0_4, %c0_5, %c0_6] : memref<1x64x128xf32, #tpu.memory_space<vmem>>, vector<1x64x128xf32>
    %4 = vector.shape_cast %3 : vector<1x64x128xf32> to vector<64x128xf32>
    %5 = vector.broadcast %2 : vector<1x128xf32> to vector<64x128xf32>
    %6 = arith.addf %5, %4 : vector<64x128xf32>
    %7 = vector.extract_strided_slice %1 {offsets = [0, 0], sizes = [64, 32], strides = [1, 1]} : vector<64x384xbf16> to vector<64x32xbf16>
    %8 = vector.extract_strided_slice %1 {offsets = [0, 128], sizes = [64, 32], strides = [1, 1]} : vector<64x384xbf16> to vector<64x32xbf16>
    %9 = vector.extract_strided_slice %1 {offsets = [0, 256], sizes = [64, 32], strides = [1, 1]} : vector<64x384xbf16> to vector<64x32xbf16>
    %cst = arith.constant dense<0.000000e+00> : vector<64x64xf32>
    %10 = tpu.matmul %7, %8, %cst {dimension_numbers = #tpu.dot_dimension_numbers<[1], [1], [0], [0], [0, 0, 1, 0], [], []>} : vector<64x32xbf16>, vector<64x32xbf16>, vector<64x64xf32> -> vector<64x64xf32>
    %cst_7 = arith.constant 0.176776692 : f32
    %11 = vector.broadcast %cst_7 : f32 to vector<64x64xf32>
    %12 = arith.mulf %10, %11 : vector<64x64xf32>
    %cst_8 = arith.constant dense<0xFF800000> : vector<64xf32>
    %13 = vector.multi_reduction <maximumf>, %12, %cst_8 [1] : vector<64x64xf32> to vector<64xf32>
    %14 = vector.shape_cast %13 : vector<64xf32> to vector<64x1xf32>
    %15 = vector.broadcast %14 : vector<64x1xf32> to vector<64x64xf32>
    %16 = arith.subf %12, %15 : vector<64x64xf32>
    %17 = math.exp %16 : vector<64x64xf32>
    %cst_9 = arith.constant dense<0.000000e+00> : vector<64xf32>
    %18 = vector.multi_reduction <add>, %17, %cst_9 [1] : vector<64x64xf32> to vector<64xf32>
    %19 = vector.shape_cast %18 : vector<64xf32> to vector<64x1xf32>
    %20 = arith.truncf %17 : vector<64x64xf32> to vector<64x64xbf16>
    %cst_10 = arith.constant dense<0.000000e+00> : vector<64x32xf32>
    %21 = tpu.matmul %20, %9, %cst_10 {dimension_numbers = #tpu.dot_dimension_numbers<[1], [0], [0], [1], [0, 0, 1, 1], [], []>} : vector<64x64xbf16>, vector<64x32xbf16>, vector<64x32xf32> -> vector<64x32xf32>
    %22 = tpu.reciprocal %19 {approx = true} : vector<64x1xf32> -> vector<64x1xf32>
    %23 = vector.broadcast %22 : vector<64x1xf32> to vector<64x32xf32>
    %24 = arith.mulf %21, %23 : vector<64x32xf32>
    %c0_11 = arith.constant 0 : index
    %c0_12 = arith.constant 0 : index
    %25 = vector.load %arg2[%c0_11, %c0_12] : memref<128x128xbf16, #tpu.memory_space<vmem>>, vector<32x128xbf16>
    %26 = arith.truncf %24 : vector<64x32xf32> to vector<64x32xbf16>
    %cst_13 = arith.constant dense<0.000000e+00> : vector<64x128xf32>
    %27 = tpu.matmul %26, %25, %cst_13 {dimension_numbers = #tpu.dot_dimension_numbers<[1], [0], [0], [1], [0, 0, 1, 1], [], []>} : vector<64x32xbf16>, vector<32x128xbf16>, vector<64x128xf32> -> vector<64x128xf32>
    %28 = arith.addf %6, %27 : vector<64x128xf32>
    %29 = vector.extract_strided_slice %1 {offsets = [0, 32], sizes = [64, 32], strides = [1, 1]} : vector<64x384xbf16> to vector<64x32xbf16>
    %30 = vector.extract_strided_slice %1 {offsets = [0, 160], sizes = [64, 32], strides = [1, 1]} : vector<64x384xbf16> to vector<64x32xbf16>
    %31 = vector.extract_strided_slice %1 {offsets = [0, 288], sizes = [64, 32], strides = [1, 1]} : vector<64x384xbf16> to vector<64x32xbf16>
    %cst_14 = arith.constant dense<0.000000e+00> : vector<64x64xf32>
    %32 = tpu.matmul %29, %30, %cst_14 {dimension_numbers = #tpu.dot_dimension_numbers<[1], [1], [0], [0], [0, 0, 1, 0], [], []>} : vector<64x32xbf16>, vector<64x32xbf16>, vector<64x64xf32> -> vector<64x64xf32>
    %cst_15 = arith.constant 0.176776692 : f32
    %33 = vector.broadcast %cst_15 : f32 to vector<64x64xf32>
    %34 = arith.mulf %32, %33 : vector<64x64xf32>
    %cst_16 = arith.constant dense<0xFF800000> : vector<64xf32>
    %35 = vector.multi_reduction <maximumf>, %34, %cst_16 [1] : vector<64x64xf32> to vector<64xf32>
    %36 = vector.shape_cast %35 : vector<64xf32> to vector<64x1xf32>
    %37 = vector.broadcast %36 : vector<64x1xf32> to vector<64x64xf32>
    %38 = arith.subf %34, %37 : vector<64x64xf32>
    %39 = math.exp %38 : vector<64x64xf32>
    %cst_17 = arith.constant dense<0.000000e+00> : vector<64xf32>
    %40 = vector.multi_reduction <add>, %39, %cst_17 [1] : vector<64x64xf32> to vector<64xf32>
    %41 = vector.shape_cast %40 : vector<64xf32> to vector<64x1xf32>
    %42 = arith.truncf %39 : vector<64x64xf32> to vector<64x64xbf16>
    %cst_18 = arith.constant dense<0.000000e+00> : vector<64x32xf32>
    %43 = tpu.matmul %42, %31, %cst_18 {dimension_numbers = #tpu.dot_dimension_numbers<[1], [0], [0], [1], [0, 0, 1, 1], [], []>} : vector<64x64xbf16>, vector<64x32xbf16>, vector<64x32xf32> -> vector<64x32xf32>
    %44 = tpu.reciprocal %41 {approx = true} : vector<64x1xf32> -> vector<64x1xf32>
    %45 = vector.broadcast %44 : vector<64x1xf32> to vector<64x32xf32>
    %46 = arith.mulf %43, %45 : vector<64x32xf32>
    %c32 = arith.constant 32 : index
    %c0_19 = arith.constant 0 : index
    %47 = vector.load %arg2[%c32, %c0_19] : memref<128x128xbf16, #tpu.memory_space<vmem>>, vector<32x128xbf16>
    %48 = arith.truncf %46 : vector<64x32xf32> to vector<64x32xbf16>
    %cst_20 = arith.constant dense<0.000000e+00> : vector<64x128xf32>
    %49 = tpu.matmul %48, %47, %cst_20 {dimension_numbers = #tpu.dot_dimension_numbers<[1], [0], [0], [1], [0, 0, 1, 1], [], []>} : vector<64x32xbf16>, vector<32x128xbf16>, vector<64x128xf32> -> vector<64x128xf32>
    %50 = arith.addf %28, %49 : vector<64x128xf32>
    %51 = vector.extract_strided_slice %1 {offsets = [0, 64], sizes = [64, 32], strides = [1, 1]} : vector<64x384xbf16> to vector<64x32xbf16>
    %52 = vector.extract_strided_slice %1 {offsets = [0, 192], sizes = [64, 32], strides = [1, 1]} : vector<64x384xbf16> to vector<64x32xbf16>
    %53 = vector.extract_strided_slice %1 {offsets = [0, 320], sizes = [64, 32], strides = [1, 1]} : vector<64x384xbf16> to vector<64x32xbf16>
    %cst_21 = arith.constant dense<0.000000e+00> : vector<64x64xf32>
    %54 = tpu.matmul %51, %52, %cst_21 {dimension_numbers = #tpu.dot_dimension_numbers<[1], [1], [0], [0], [0, 0, 1, 0], [], []>} : vector<64x32xbf16>, vector<64x32xbf16>, vector<64x64xf32> -> vector<64x64xf32>
    %cst_22 = arith.constant 0.176776692 : f32
    %55 = vector.broadcast %cst_22 : f32 to vector<64x64xf32>
    %56 = arith.mulf %54, %55 : vector<64x64xf32>
    %cst_23 = arith.constant dense<0xFF800000> : vector<64xf32>
    %57 = vector.multi_reduction <maximumf>, %56, %cst_23 [1] : vector<64x64xf32> to vector<64xf32>
    %58 = vector.shape_cast %57 : vector<64xf32> to vector<64x1xf32>
    %59 = vector.broadcast %58 : vector<64x1xf32> to vector<64x64xf32>
    %60 = arith.subf %56, %59 : vector<64x64xf32>
    %61 = math.exp %60 : vector<64x64xf32>
    %cst_24 = arith.constant dense<0.000000e+00> : vector<64xf32>
    %62 = vector.multi_reduction <add>, %61, %cst_24 [1] : vector<64x64xf32> to vector<64xf32>
    %63 = vector.shape_cast %62 : vector<64xf32> to vector<64x1xf32>
    %64 = arith.truncf %61 : vector<64x64xf32> to vector<64x64xbf16>
    %cst_25 = arith.constant dense<0.000000e+00> : vector<64x32xf32>
    %65 = tpu.matmul %64, %53, %cst_25 {dimension_numbers = #tpu.dot_dimension_numbers<[1], [0], [0], [1], [0, 0, 1, 1], [], []>} : vector<64x64xbf16>, vector<64x32xbf16>, vector<64x32xf32> -> vector<64x32xf32>
    %66 = tpu.reciprocal %63 {approx = true} : vector<64x1xf32> -> vector<64x1xf32>
    %67 = vector.broadcast %66 : vector<64x1xf32> to vector<64x32xf32>
    %68 = arith.mulf %65, %67 : vector<64x32xf32>
    %c64 = arith.constant 64 : index
    %c0_26 = arith.constant 0 : index
    %69 = vector.load %arg2[%c64, %c0_26] : memref<128x128xbf16, #tpu.memory_space<vmem>>, vector<32x128xbf16>
    %70 = arith.truncf %68 : vector<64x32xf32> to vector<64x32xbf16>
    %cst_27 = arith.constant dense<0.000000e+00> : vector<64x128xf32>
    %71 = tpu.matmul %70, %69, %cst_27 {dimension_numbers = #tpu.dot_dimension_numbers<[1], [0], [0], [1], [0, 0, 1, 1], [], []>} : vector<64x32xbf16>, vector<32x128xbf16>, vector<64x128xf32> -> vector<64x128xf32>
    %72 = arith.addf %50, %71 : vector<64x128xf32>
    %73 = vector.extract_strided_slice %1 {offsets = [0, 96], sizes = [64, 32], strides = [1, 1]} : vector<64x384xbf16> to vector<64x32xbf16>
    %74 = vector.extract_strided_slice %1 {offsets = [0, 224], sizes = [64, 32], strides = [1, 1]} : vector<64x384xbf16> to vector<64x32xbf16>
    %75 = vector.extract_strided_slice %1 {offsets = [0, 352], sizes = [64, 32], strides = [1, 1]} : vector<64x384xbf16> to vector<64x32xbf16>
    %cst_28 = arith.constant dense<0.000000e+00> : vector<64x64xf32>
    %76 = tpu.matmul %73, %74, %cst_28 {dimension_numbers = #tpu.dot_dimension_numbers<[1], [1], [0], [0], [0, 0, 1, 0], [], []>} : vector<64x32xbf16>, vector<64x32xbf16>, vector<64x64xf32> -> vector<64x64xf32>
    %cst_29 = arith.constant 0.176776692 : f32
    %77 = vector.broadcast %cst_29 : f32 to vector<64x64xf32>
    %78 = arith.mulf %76, %77 : vector<64x64xf32>
    %cst_30 = arith.constant dense<0xFF800000> : vector<64xf32>
    %79 = vector.multi_reduction <maximumf>, %78, %cst_30 [1] : vector<64x64xf32> to vector<64xf32>
    %80 = vector.shape_cast %79 : vector<64xf32> to vector<64x1xf32>
    %81 = vector.broadcast %80 : vector<64x1xf32> to vector<64x64xf32>
    %82 = arith.subf %78, %81 : vector<64x64xf32>
    %83 = math.exp %82 : vector<64x64xf32>
    %cst_31 = arith.constant dense<0.000000e+00> : vector<64xf32>
    %84 = vector.multi_reduction <add>, %83, %cst_31 [1] : vector<64x64xf32> to vector<64xf32>
    %85 = vector.shape_cast %84 : vector<64xf32> to vector<64x1xf32>
    %86 = arith.truncf %83 : vector<64x64xf32> to vector<64x64xbf16>
    %cst_32 = arith.constant dense<0.000000e+00> : vector<64x32xf32>
    %87 = tpu.matmul %86, %75, %cst_32 {dimension_numbers = #tpu.dot_dimension_numbers<[1], [0], [0], [1], [0, 0, 1, 1], [], []>} : vector<64x64xbf16>, vector<64x32xbf16>, vector<64x32xf32> -> vector<64x32xf32>
    %88 = tpu.reciprocal %85 {approx = true} : vector<64x1xf32> -> vector<64x1xf32>
    %89 = vector.broadcast %88 : vector<64x1xf32> to vector<64x32xf32>
    %90 = arith.mulf %87, %89 : vector<64x32xf32>
    %c96 = arith.constant 96 : index
    %c0_33 = arith.constant 0 : index
    %91 = vector.load %arg2[%c96, %c0_33] : memref<128x128xbf16, #tpu.memory_space<vmem>>, vector<32x128xbf16>
    %92 = arith.truncf %90 : vector<64x32xf32> to vector<64x32xbf16>
    %cst_34 = arith.constant dense<0.000000e+00> : vector<64x128xf32>
    %93 = tpu.matmul %92, %91, %cst_34 {dimension_numbers = #tpu.dot_dimension_numbers<[1], [0], [0], [1], [0, 0, 1, 1], [], []>} : vector<64x32xbf16>, vector<32x128xbf16>, vector<64x128xf32> -> vector<64x128xf32>
    %94 = arith.addf %72, %93 : vector<64x128xf32>
    %c0_35 = arith.constant 0 : index
    %c0_36 = arith.constant 0 : index
    %c0_37 = arith.constant 0 : index
    %95 = vector.load %arg5[%c0_35, %c0_36, %c0_37] : memref<1x64x128xf32, #tpu.memory_space<vmem>>, vector<1x64x128xf32>
    %96 = vector.shape_cast %95 : vector<1x64x128xf32> to vector<64x128xf32>
    %97 = vector.shape_cast %94 : vector<64x128xf32> to vector<1x64x128xf32>
    tpu.vector_store %arg5[%c0_35, %c0_36, %c0_37], %97 {strides = array<i32>} : memref<1x64x128xf32, #tpu.memory_space<vmem>>, vector<1x64x128xf32>,
    return
  }
  func.func @transform_0(%arg0: i32) -> (i32, i32, i32) {
    %c0_i32 = arith.constant 0 : i32
    %c0_i32_0 = arith.constant 0 : i32
    %c0_i32_1 = arith.constant 0 : i32
    return %arg0, %c0_i32, %c0_i32_0 : i32, i32, i32
  }
  func.func @transform_1(%arg0: i32) -> (i32, i32) {
    %c0_i32 = arith.constant 0 : i32
    %c0_i32_0 = arith.constant 0 : i32
    %c0_i32_1 = arith.constant 0 : i32
    return %c0_i32, %c0_i32_0 : i32, i32
  }
  func.func @transform_2(%arg0: i32) -> (i32, i32) {
    %c0_i32 = arith.constant 0 : i32
    %c0_i32_0 = arith.constant 0 : i32
    %c0_i32_1 = arith.constant 0 : i32
    return %c0_i32, %c0_i32_0 : i32, i32
  }
  func.func @transform_3(%arg0: i32) -> (i32, i32, i32) {
    %c0_i32 = arith.constant 0 : i32
    %c0_i32_0 = arith.constant 0 : i32
    %c0_i32_1 = arith.constant 0 : i32
    return %arg0, %c0_i32, %c0_i32_0 : i32, i32, i32
  }
  func.func @transform_4(%arg0: i32) -> (i32, i32, i32) {
    %c0_i32 = arith.constant 0 : i32
    %c0_i32_0 = arith.constant 0 : i32
    %c0_i32_1 = arith.constant 0 : i32
    return %arg0, %c0_i32, %c0_i32_0 : i32, i32, i32
  }
}

module attributes {stable_mosaic.version = 11 : i64} {
  func.func @_ln_linear_kernel(%arg0: i32, %arg1: i32, %arg2: memref<128x128xf32, #tpu.memory_space<vmem>>, %arg3: memref<1x128xf32, #tpu.memory_space<vmem>>, %arg4: memref<1x128xf32, #tpu.memory_space<vmem>>, %arg5: memref<128x512xbf16, #tpu.memory_space<vmem>>, %arg6: memref<1x512xf32, #tpu.memory_space<vmem>>, %arg7: memref<128x512xbf16, #tpu.memory_space<vmem>>) attributes {dimension_semantics = [#tpu.dimension_semantics<parallel>, #tpu.dimension_semantics<parallel>], iteration_bounds = array<i64: 1, 1>, scalar_prefetch = 0 : i64, scratch_operands = 0 : i64, tpu.core_type = #tpu.core_type<tc>, window_params = [{transform_indices = @transform_0, window_bounds = array<i64: 128, 128>}, {pipeline_mode = #tpu.pipeline_mode<synchronous>, transform_indices = @transform_1, window_bounds = array<i64: 1, 128>}, {pipeline_mode = #tpu.pipeline_mode<synchronous>, transform_indices = @transform_2, window_bounds = array<i64: 1, 128>}, {transform_indices = @transform_3, window_bounds = array<i64: 128, 512>}, {transform_indices = @transform_4, window_bounds = array<i64: 1, 512>}, {transform_indices = @transform_5, window_bounds = array<i64: 128, 512>}]} {
    %c0 = arith.constant 0 : index
    %c0_0 = arith.constant 0 : index
    %0 = vector.load %arg2[%c0, %c0_0] : memref<128x128xf32, #tpu.memory_space<vmem>>, vector<128x128xf32>
    %cst = arith.constant dense<0.000000e+00> : vector<128xf32>
    %1 = vector.multi_reduction <add>, %0, %cst [1] : vector<128x128xf32> to vector<128xf32>
    %2 = vector.shape_cast %1 : vector<128xf32> to vector<128x1xf32>
    %cst_1 = arith.constant 1.280000e+02 : f32
    %3 = vector.broadcast %cst_1 : f32 to vector<128x1xf32>
    %4 = arith.divf %2, %3 : vector<128x1xf32>
    %5 = vector.broadcast %4 : vector<128x1xf32> to vector<128x128xf32>
    %6 = arith.subf %0, %5 : vector<128x128xf32>
    %7 = arith.mulf %6, %6 : vector<128x128xf32>
    %cst_2 = arith.constant dense<0.000000e+00> : vector<128xf32>
    %8 = vector.multi_reduction <add>, %7, %cst_2 [1] : vector<128x128xf32> to vector<128xf32>
    %9 = vector.shape_cast %8 : vector<128xf32> to vector<128x1xf32>
    %cst_3 = arith.constant 1.280000e+02 : f32
    %10 = vector.broadcast %cst_3 : f32 to vector<128x1xf32>
    %11 = arith.divf %9, %10 : vector<128x1xf32>
    %12 = vector.broadcast %4 : vector<128x1xf32> to vector<128x128xf32>
    %13 = arith.subf %0, %12 : vector<128x128xf32>
    %cst_4 = arith.constant 9.99999997E-7 : f32
    %14 = vector.broadcast %cst_4 : f32 to vector<128x1xf32>
    %15 = arith.addf %11, %14 : vector<128x1xf32>
    %16 = math.rsqrt %15 : vector<128x1xf32>
    %17 = vector.broadcast %16 : vector<128x1xf32> to vector<128x128xf32>
    %18 = arith.mulf %13, %17 : vector<128x128xf32>
    %c0_5 = arith.constant 0 : index
    %c0_6 = arith.constant 0 : index
    %19 = vector.load %arg3[%c0_5, %c0_6] : memref<1x128xf32, #tpu.memory_space<vmem>>, vector<1x128xf32>
    %20 = vector.broadcast %19 : vector<1x128xf32> to vector<128x128xf32>
    %21 = arith.mulf %18, %20 : vector<128x128xf32>
    %c0_7 = arith.constant 0 : index
    %c0_8 = arith.constant 0 : index
    %22 = vector.load %arg4[%c0_7, %c0_8] : memref<1x128xf32, #tpu.memory_space<vmem>>, vector<1x128xf32>
    %23 = vector.broadcast %22 : vector<1x128xf32> to vector<128x128xf32>
    %24 = arith.addf %21, %23 : vector<128x128xf32>
    %25 = arith.truncf %24 : vector<128x128xf32> to vector<128x128xbf16>
    %c0_9 = arith.constant 0 : index
    %c0_10 = arith.constant 0 : index
    %26 = vector.load %arg5[%c0_9, %c0_10] : memref<128x512xbf16, #tpu.memory_space<vmem>>, vector<128x512xbf16>
    %cst_11 = arith.constant dense<0.000000e+00> : vector<128x512xf32>
    %27 = tpu.matmul %25, %26, %cst_11 {dimension_numbers = #tpu.dot_dimension_numbers<[1], [0], [0], [1], [0, 0, 1, 1], [], []>} : vector<128x128xbf16>, vector<128x512xbf16>, vector<128x512xf32> -> vector<128x512xf32>
    %c0_12 = arith.constant 0 : index
    %c0_13 = arith.constant 0 : index
    %28 = vector.load %arg6[%c0_12, %c0_13] : memref<1x512xf32, #tpu.memory_space<vmem>>, vector<1x512xf32>
    %29 = vector.broadcast %28 : vector<1x512xf32> to vector<128x512xf32>
    %30 = arith.addf %27, %29 : vector<128x512xf32>
    %cst_14 = arith.constant 5.000000e-01 : f32
    %31 = vector.broadcast %cst_14 : f32 to vector<128x512xf32>
    %32 = arith.mulf %31, %30 : vector<128x512xf32>
    %cst_15 = arith.constant 0.707106769 : f32
    %33 = vector.broadcast %cst_15 : f32 to vector<128x512xf32>
    %34 = arith.mulf %30, %33 : vector<128x512xf32>
    %35 = math.erf %34 : vector<128x512xf32>
    %cst_16 = arith.constant 1.000000e+00 : f32
    %36 = vector.broadcast %cst_16 : f32 to vector<128x512xf32>
    %37 = arith.addf %36, %35 : vector<128x512xf32>
    %38 = arith.mulf %32, %37 : vector<128x512xf32>
    %39 = arith.truncf %38 : vector<128x512xf32> to vector<128x512xbf16>
    %c0_17 = arith.constant 0 : index
    %c0_18 = arith.constant 0 : index
    %40 = vector.load %arg7[%c0_17, %c0_18] : memref<128x512xbf16, #tpu.memory_space<vmem>>, vector<128x512xbf16>
    tpu.vector_store %arg7[%c0_17, %c0_18], %39 {strides = array<i32>} : memref<128x512xbf16, #tpu.memory_space<vmem>>, vector<128x512xbf16>,
    return
  }
  func.func @transform_0(%arg0: i32, %arg1: i32) -> (i32, i32) {
    %c0_i32 = arith.constant 0 : i32
    %c0_i32_0 = arith.constant 0 : i32
    return %arg0, %c0_i32 : i32, i32
  }
  func.func @transform_1(%arg0: i32, %arg1: i32) -> (i32, i32) {
    %c0_i32 = arith.constant 0 : i32
    %c0_i32_0 = arith.constant 0 : i32
    %c0_i32_1 = arith.constant 0 : i32
    return %c0_i32, %c0_i32_0 : i32, i32
  }
  func.func @transform_2(%arg0: i32, %arg1: i32) -> (i32, i32) {
    %c0_i32 = arith.constant 0 : i32
    %c0_i32_0 = arith.constant 0 : i32
    %c0_i32_1 = arith.constant 0 : i32
    return %c0_i32, %c0_i32_0 : i32, i32
  }
  func.func @transform_3(%arg0: i32, %arg1: i32) -> (i32, i32) {
    %c0_i32 = arith.constant 0 : i32
    %c0_i32_0 = arith.constant 0 : i32
    return %c0_i32, %arg1 : i32, i32
  }
  func.func @transform_4(%arg0: i32, %arg1: i32) -> (i32, i32) {
    %c0_i32 = arith.constant 0 : i32
    %c0_i32_0 = arith.constant 0 : i32
    return %c0_i32, %arg1 : i32, i32
  }
  func.func @transform_5(%arg0: i32, %arg1: i32) -> (i32, i32) {
    %c0_i32 = arith.constant 0 : i32
    return %arg0, %arg1 : i32, i32
  }
}

module attributes {stable_mosaic.version = 11 : i64} {
  func.func @_linear_res_kernel(%arg0: i32, %arg1: i32, %arg2: memref<128x512xbf16, #tpu.memory_space<vmem>>, %arg3: memref<512x128xbf16, #tpu.memory_space<vmem>>, %arg4: memref<1x128xf32, #tpu.memory_space<vmem>>, %arg5: memref<128x128xf32, #tpu.memory_space<vmem>>, %arg6: memref<128x128xf32, #tpu.memory_space<vmem>>) attributes {dimension_semantics = [#tpu.dimension_semantics<parallel>, #tpu.dimension_semantics<parallel>], iteration_bounds = array<i64: 1, 1>, scalar_prefetch = 0 : i64, scratch_operands = 0 : i64, tpu.core_type = #tpu.core_type<tc>, window_params = [{transform_indices = @transform_0, window_bounds = array<i64: 128, 512>}, {transform_indices = @transform_1, window_bounds = array<i64: 512, 128>}, {transform_indices = @transform_2, window_bounds = array<i64: 1, 128>}, {transform_indices = @transform_3, window_bounds = array<i64: 128, 128>}, {transform_indices = @transform_4, window_bounds = array<i64: 128, 128>}]} {
    %c0 = arith.constant 0 : index
    %c0_0 = arith.constant 0 : index
    %0 = vector.load %arg2[%c0, %c0_0] : memref<128x512xbf16, #tpu.memory_space<vmem>>, vector<128x512xbf16>
    %c0_1 = arith.constant 0 : index
    %c0_2 = arith.constant 0 : index
    %1 = vector.load %arg3[%c0_1, %c0_2] : memref<512x128xbf16, #tpu.memory_space<vmem>>, vector<512x128xbf16>
    %cst = arith.constant dense<0.000000e+00> : vector<128x128xf32>
    %2 = tpu.matmul %0, %1, %cst {dimension_numbers = #tpu.dot_dimension_numbers<[1], [0], [0], [1], [0, 0, 1, 1], [], []>} : vector<128x512xbf16>, vector<512x128xbf16>, vector<128x128xf32> -> vector<128x128xf32>
    %c0_3 = arith.constant 0 : index
    %c0_4 = arith.constant 0 : index
    %3 = vector.load %arg4[%c0_3, %c0_4] : memref<1x128xf32, #tpu.memory_space<vmem>>, vector<1x128xf32>
    %4 = vector.broadcast %3 : vector<1x128xf32> to vector<128x128xf32>
    %5 = arith.addf %2, %4 : vector<128x128xf32>
    %c0_5 = arith.constant 0 : index
    %c0_6 = arith.constant 0 : index
    %6 = vector.load %arg5[%c0_5, %c0_6] : memref<128x128xf32, #tpu.memory_space<vmem>>, vector<128x128xf32>
    %7 = arith.addf %5, %6 : vector<128x128xf32>
    %c0_7 = arith.constant 0 : index
    %c0_8 = arith.constant 0 : index
    %8 = vector.load %arg6[%c0_7, %c0_8] : memref<128x128xf32, #tpu.memory_space<vmem>>, vector<128x128xf32>
    tpu.vector_store %arg6[%c0_7, %c0_8], %7 {strides = array<i32>} : memref<128x128xf32, #tpu.memory_space<vmem>>, vector<128x128xf32>,
    return
  }
  func.func @transform_0(%arg0: i32, %arg1: i32) -> (i32, i32) {
    %c0_i32 = arith.constant 0 : i32
    %c0_i32_0 = arith.constant 0 : i32
    return %arg0, %c0_i32 : i32, i32
  }
  func.func @transform_1(%arg0: i32, %arg1: i32) -> (i32, i32) {
    %c0_i32 = arith.constant 0 : i32
    %c0_i32_0 = arith.constant 0 : i32
    return %c0_i32, %arg1 : i32, i32
  }
  func.func @transform_2(%arg0: i32, %arg1: i32) -> (i32, i32) {
    %c0_i32 = arith.constant 0 : i32
    %c0_i32_0 = arith.constant 0 : i32
    return %c0_i32, %arg1 : i32, i32
  }
  func.func @transform_3(%arg0: i32, %arg1: i32) -> (i32, i32) {
    %c0_i32 = arith.constant 0 : i32
    return %arg0, %arg1 : i32, i32
  }
  func.func @transform_4(%arg0: i32, %arg1: i32) -> (i32, i32) {
    %c0_i32 = arith.constant 0 : i32
    return %arg0, %arg1 : i32, i32
  }
}

module attributes {stable_mosaic.version = 11 : i64} {
  func.func @_linear_res_kernel(%arg0: i32, %arg1: i32, %arg2: memref<128x512xbf16, #tpu.memory_space<vmem>>, %arg3: memref<512x128xbf16, #tpu.memory_space<vmem>>, %arg4: memref<1x128xf32, #tpu.memory_space<vmem>>, %arg5: memref<128x128xf32, #tpu.memory_space<vmem>>, %arg6: memref<128x128xf32, #tpu.memory_space<vmem>>) attributes {dimension_semantics = [#tpu.dimension_semantics<parallel>, #tpu.dimension_semantics<parallel>], iteration_bounds = array<i64: 1, 1>, scalar_prefetch = 0 : i64, scratch_operands = 0 : i64, tpu.core_type = #tpu.core_type<tc>, window_params = [{transform_indices = @transform_0, window_bounds = array<i64: 128, 512>}, {transform_indices = @transform_1, window_bounds = array<i64: 512, 128>}, {transform_indices = @transform_2, window_bounds = array<i64: 1, 128>}, {transform_indices = @transform_3, window_bounds = array<i64: 128, 128>}, {transform_indices = @transform_4, window_bounds = array<i64: 128, 128>}]} {
    %c0 = arith.constant 0 : index
    %c0_0 = arith.constant 0 : index
    %0 = vector.load %arg2[%c0, %c0_0] : memref<128x512xbf16, #tpu.memory_space<vmem>>, vector<128x512xbf16>
    %c0_1 = arith.constant 0 : index
    %c0_2 = arith.constant 0 : index
    %1 = vector.load %arg3[%c0_1, %c0_2] : memref<512x128xbf16, #tpu.memory_space<vmem>>, vector<512x128xbf16>
    %cst = arith.constant dense<0.000000e+00> : vector<128x128xf32>
    %2 = tpu.matmul %0, %1, %cst {dimension_numbers = #tpu.dot_dimension_numbers<[1], [0], [0], [1], [0, 0, 1, 1], [], []>} : vector<128x512xbf16>, vector<512x128xbf16>, vector<128x128xf32> -> vector<128x128xf32>
    %c0_3 = arith.constant 0 : index
    %c0_4 = arith.constant 0 : index
    %3 = vector.load %arg4[%c0_3, %c0_4] : memref<1x128xf32, #tpu.memory_space<vmem>>, vector<1x128xf32>
    %4 = vector.broadcast %3 : vector<1x128xf32> to vector<128x128xf32>
    %5 = arith.addf %2, %4 : vector<128x128xf32>
    %c0_5 = arith.constant 0 : index
    %c0_6 = arith.constant 0 : index
    %6 = vector.load %arg5[%c0_5, %c0_6] : memref<128x128xf32, #tpu.memory_space<vmem>>, vector<128x128xf32>
    %7 = arith.addf %5, %6 : vector<128x128xf32>
    %c0_7 = arith.constant 0 : index
    %c0_8 = arith.constant 0 : index
    %8 = vector.load %arg6[%c0_7, %c0_8] : memref<128x128xf32, #tpu.memory_space<vmem>>, vector<128x128xf32>
    tpu.vector_store %arg6[%c0_7, %c0_8], %7 {strides = array<i32>} : memref<128x128xf32, #tpu.memory_space<vmem>>, vector<128x128xf32>,
    return
  }
  func.func @transform_0(%arg0: i32, %arg1: i32) -> (i32, i32) {
    %c0_i32 = arith.constant 0 : i32
    %c0_i32_0 = arith.constant 0 : i32
    return %arg0, %c0_i32 : i32, i32
  }
  func.func @transform_1(%arg0: i32, %arg1: i32) -> (i32, i32) {
    %c0_i32 = arith.constant 0 : i32
    %c0_i32_0 = arith.constant 0 : i32
    return %c0_i32, %arg1 : i32, i32
  }
  func.func @transform_2(%arg0: i32, %arg1: i32) -> (i32, i32) {
    %c0_i32 = arith.constant 0 : i32
    %c0_i32_0 = arith.constant 0 : i32
    return %c0_i32, %arg1 : i32, i32
  }
  func.func @transform_3(%arg0: i32, %arg1: i32) -> (i32, i32) {
    %c0_i32 = arith.constant 0 : i32
    return %arg0, %arg1 : i32, i32
  }
  func.func @transform_4(%arg0: i32, %arg1: i32) -> (i32, i32) {
    %c0_i32 = arith.constant 0 : i32
    return %arg0, %arg1 : i32, i32
  }
}

</mosaic_0001>

<llo_original>
// kernel: sam2_pe_simple_lst_forward.9
$region0: #{sam2_pe_simple_lst_forward.9}
  #allocation0 [shape = 'u32[]', space=smem, size = 0x4, offset = 0x4, fixed_abs, tag = 'smem constant byte address 0x4 - core index']
  #allocation1 [shape = 'u32[144,128]{1,0:T(1,128)}', space=vmem, size = 0x12000, scoped, tag = 'internal scratch']
  %s0 = inlined_call_operand.hbm [shape: f32[2,64,32], index: 0, kind: input, shape index: {}]
  %s1 = inlined_call_operand.vmem [shape: bf16[32,128], index: 1, kind: input, shape index: {}]
  %s2 = inlined_call_operand.vmem [shape: f32[1,128], index: 2, kind: input, shape index: {}]
  %s3 = inlined_call_operand.hbm [shape: f32[64,128], index: 3, kind: input, shape index: {}]
  %s4 = inlined_call_operand.vmem [shape: f32[2,64,128], index: 4, kind: output, shape index: {}]
  %s5 = sld [smem:[#allocation0]]
  $region57: #{sam2_pe_simple_lst_forward.9} parent=0
    _
  %s7 = ssub.s32 1, %s5
  %s8 = scalar_select 0, %s7, %s5
  $region1: #{sam2_pe_simple_lst_forward.9} parent=0
    #allocation2 [shape = 'u8[65536]{0}', space=vmem, size = 0x10000, scoped, tag = 'input window, operand 0']
    #allocation3 [shape = 's32[2]{0}', space=sflag, size = 0x8, scoped, tag = 'scoped memory for sam2_pe_simple_lst_forward.9']
    #allocation4 [shape = 'u8[32768]{0}', space=vmem, size = 0x8000, scoped, tag = 'input window, operand 3, single buffered']
    #allocation5 [shape = 's32[1]{0}', space=sflag, size = 0x4, scoped, tag = 'scoped memory for sam2_pe_simple_lst_forward.9']
    %9 = vsyncpa [#allocation3], 0
    %s10 = scalar_lea.sflag [#allocation3], 1
    %11 = vsyncpa %s10, 0
    %12 = vsyncpa [#allocation5], 0
    loop: start=0, step=1, limit=4
    $region2: #{sam2_pe_simple_lst_forward.9} parent=1 // loop_pre_header
      _
    $region3: #{sam2_pe_simple_lst_forward.9} parent=1 // loop_header
      %s14 = sphi 0, %s18
      %p15 = scmp.ge.s32.totalorder %s14, 4
      %s21 = sphi 0, %s33
      %s22 = sphi 0, %s29
      %s23 = sphi 0, %s21
      %s24 = sphi 0, %s22
      %s25 = sphi 0, %s23
      %s26 = sphi 0, %s24
      %s38 = sphi 0, %s40
      %s41 = sphi 0, %s38
      %s42 = sphi 0, %s41
      %s58 = sphi 0, %s42
      %s62 = sphi 0, %s62
      %s64 = sphi 0, %s62
      %s65 = sphi 0, %s64
      %s79 = sphi 0, %s65
      %s83 = sphi 0, %s83
      %s85 = sphi 0, %s83
      %s86 = sphi 0, %s85
      %s100 = sphi 0, %s86
      %s106 = sphi 0, %s108
      %s109 = sphi 0, %s106
      %s110 = sphi 0, %s109
      %s126 = sphi 0, %s110
      %s134 = sphi 0, %s136
      %s137 = sphi 0, %s134
      %s138 = sphi 0, %s137
      %s154 = sphi 0, %s138
    $region4: #{sam2_pe_simple_lst_forward.9} parent=1 // loop_header_branch
      %17 = sbr.rel (%p15) target = $region8
    $region5: #{sam2_pe_simple_lst_forward.9} parent=1 // loop_body
      %s19 = ssub.s32 %s14, 1
      %s20 = ssub.s32 %s14, 2
      %s27 = sadd.s32 1, %s22
      %p28 = scmp.ge.s32.totalorder %s27, 1
      %s29 = scalar_select %p28, 0, %s27
      %s30 = sadd.s32 1, %s21
      %s31 = scalar_select %p28, %s30, %s21
      %p32 = scmp.ge.s32.totalorder %s31, 2
      %s33 = scalar_select %p32, 0, %s31
      %s34 = ssub.s32 %s21, %s33
      %s35 = ssub.s32 %s22, %s29
      %s36 = sor.u32 %s34, %s35
      %p37 = scmp.eq.s32.totalorder %s36, 0
      %s39 = sadd.s32 %s38, 1
      %s40 = scalar_select %p37, %s38, %s39
      %p43 = pneg %p37
      %p44 = scmp.eq.s32.totalorder %s14, 1
      %p45 = por %p43, %p44
      %p46 = scmp.ne.s32.totalorder %s38, %s41
      %p47 = scmp.eq.s32.totalorder %s14, 0
      %p48 = por %p46, %p47
      %p49 = scmp.ne.s32.totalorder %s38, %s41
      %p50 = scmp.eq.s32.totalorder %s19, 1
      %p51 = por %p49, %p50
      %p52 = scmp.ne.s32.totalorder %s41, %s42
      %p53 = scmp.eq.s32.totalorder %s19, 0
      %p54 = por %p52, %p53
      %p55 = scmp.ne.s32.totalorder %s41, %s42
      %p56 = scmp.eq.s32.totalorder %s20, 1
      %p57 = por %p55, %p56
      %p59 = scmp.ne.s32.totalorder %s42, %s58
      %p60 = scmp.eq.s32.totalorder %s20, 0
      %p61 = por %p59, %p60
      %s63 = sadd.s32 %s62, 1
      %p66 = scmp.eq.s32.totalorder %s14, 1
      %p67 = scmp.ne.s32.totalorder %s62, %s64
      %p68 = scmp.eq.s32.totalorder %s14, 0
      %p69 = por %p67, %p68
      %p70 = scmp.ne.s32.totalorder %s62, %s64
      %p71 = scmp.eq.s32.totalorder %s19, 1
      %p72 = por %p70, %p71
      %p73 = scmp.ne.s32.totalorder %s64, %s65
      %p74 = scmp.eq.s32.totalorder %s19, 0
      %p75 = por %p73, %p74
      %p76 = scmp.ne.s32.totalorder %s64, %s65
      %p77 = scmp.eq.s32.totalorder %s20, 1
      %p78 = por %p76, %p77
      %p80 = scmp.ne.s32.totalorder %s65, %s79
      %p81 = scmp.eq.s32.totalorder %s20, 0
      %p82 = por %p80, %p81
      %s84 = sadd.s32 %s83, 1
      %p87 = scmp.eq.s32.totalorder %s14, 1
      %p88 = scmp.ne.s32.totalorder %s83, %s85
      %p89 = scmp.eq.s32.totalorder %s14, 0
      %p90 = por %p88, %p89
      %p91 = scmp.ne.s32.totalorder %s83, %s85
      %p92 = scmp.eq.s32.totalorder %s19, 1
      %p93 = por %p91, %p92
      %p94 = scmp.ne.s32.totalorder %s85, %s86
      %p95 = scmp.eq.s32.totalorder %s19, 0
      %p96 = por %p94, %p95
      %p97 = scmp.ne.s32.totalorder %s85, %s86
      %p98 = scmp.eq.s32.totalorder %s20, 1
      %p99 = por %p97, %p98
      %p101 = scmp.ne.s32.totalorder %s86, %s100
      %p102 = scmp.eq.s32.totalorder %s20, 0
      %p103 = por %p101, %p102
      %s104 = ssub.s32 %s22, %s29
      %p105 = scmp.eq.s32.totalorder %s104, 0
      %s107 = sadd.s32 %s106, 1
      %s108 = scalar_select %p105, %s106, %s107
      %p111 = pneg %p105
      %p112 = scmp.eq.s32.totalorder %s14, 1
      %p113 = por %p111, %p112
      %p114 = scmp.ne.s32.totalorder %s106, %s109
      %p115 = scmp.eq.s32.totalorder %s14, 0
      %p116 = por %p114, %p115
      %p117 = scmp.ne.s32.totalorder %s106, %s109
      %p118 = scmp.eq.s32.totalorder %s19, 1
      %p119 = por %p117, %p118
      %p120 = scmp.ne.s32.totalorder %s109, %s110
      %p121 = scmp.eq.s32.totalorder %s19, 0
      %p122 = por %p120, %p121
      %p123 = scmp.ne.s32.totalorder %s109, %s110
      %p124 = scmp.eq.s32.totalorder %s20, 1
      %p125 = por %p123, %p124
      %p127 = scmp.ne.s32.totalorder %s110, %s126
      %p128 = scmp.eq.s32.totalorder %s20, 0
      %p129 = por %p127, %p128
      %s130 = ssub.s32 %s21, %s33
      %s131 = ssub.s32 %s22, %s29
      %s132 = sor.u32 %s130, %s131
      %p133 = scmp.eq.s32.totalorder %s132, 0
      %s135 = sadd.s32 %s134, 1
      %s136 = scalar_select %p133, %s134, %s135
      %p139 = pneg %p133
      %p140 = scmp.eq.s32.totalorder %s14, 1
      %p141 = por %p139, %p140
      %p142 = scmp.ne.s32.totalorder %s134, %s137
      %p143 = scmp.eq.s32.totalorder %s14, 0
      %p144 = por %p142, %p143
      %p145 = scmp.ne.s32.totalorder %s134, %s137
      %p146 = scmp.eq.s32.totalorder %s19, 1
      %p147 = por %p145, %p146
      %p148 = scmp.ne.s32.totalorder %s137, %s138
      %p149 = scmp.eq.s32.totalorder %s19, 0
      %p150 = por %p148, %p149
      %p151 = scmp.ne.s32.totalorder %s137, %s138
      %p152 = scmp.eq.s32.totalorder %s20, 1
      %p153 = por %p151, %p152
      %p155 = scmp.ne.s32.totalorder %s138, %s154
      %p156 = scmp.eq.s32.totalorder %s20, 0
      %p157 = por %p155, %p156
      %p158 = scmp.le.s32.totalorder 1, %s14
      %p159 = scmp.lt.s32.totalorder %s14, 3
      %p160 = pnand %p158, %p159
      %p161 = pneg %p160
      // Predicated region
      $region9: #{sam2_pe_simple_lst_forward.9} parent=5 // pred_check
        _
      $region10: #{sam2_pe_simple_lst_forward.9} parent=5 // pred_check_branch
        %163 = sbr.rel (%p160) target = $region12
      $region11: #{sam2_pe_simple_lst_forward.9} parent=5 // pred_region
        %s164 = ssub.s32 %s14, 1
        // Predicated region
        $region13: #{sam2_pe_simple_lst_forward.9} parent=11 // pred_check
          %p165 = pneg %p75
        $region14: #{sam2_pe_simple_lst_forward.9} parent=11 // pred_check_branch
          %167 = sbr.rel (%p165) target = $region16
        $region15: #{sam2_pe_simple_lst_forward.9} parent=11 // pred_region
          _
        $region16: #{sam2_pe_simple_lst_forward.9} parent=11 // pred_fallthru
          _
        // Predicated region
        $region17: #{sam2_pe_simple_lst_forward.9} parent=11 // pred_check
          %p168 = pneg %p96
        $region18: #{sam2_pe_simple_lst_forward.9} parent=11 // pred_check_branch
          %170 = sbr.rel (%p168) target = $region20
        $region19: #{sam2_pe_simple_lst_forward.9} parent=11 // pred_region
          _
        $region20: #{sam2_pe_simple_lst_forward.9} parent=11 // pred_fallthru
          _
        // Predicated region
        $region21: #{sam2_pe_simple_lst_forward.9} parent=11 // pred_check
          %p171 = pneg %p122
        $region22: #{sam2_pe_simple_lst_forward.9} parent=11 // pred_check_branch
          %173 = sbr.rel (%p171) target = $region24
        $region23: #{sam2_pe_simple_lst_forward.9} parent=11 // pred_region
          %s174 = smul.u32 8, %s24
          %s176 = ssub.s32 1024, 1024
          %177 = vsyncadd [#allocation5], %s176
          %s178 = smul.addr %s174, 128
          %s179 = scalar_lea.hbm %s3, %s178
          %s180 = sshll.u32 [#allocation4], 4
          %s181 = int_to_ptr.vmem [resolvable:$true] %s180
          %186 = dma.hbm_to_vmem [thread:$0]  %s179, 1024, %s181, [#allocation5], 128, 128, 8
        $region24: #{sam2_pe_simple_lst_forward.9} parent=11 // pred_fallthru
          _
      $region12: #{sam2_pe_simple_lst_forward.9} parent=5 // pred_fallthru
        _
      %p187 = scmp.lt.s32.totalorder %s14, 2
      // Predicated region
      $region25: #{sam2_pe_simple_lst_forward.9} parent=5 // pred_check
        %p188 = pneg %p187
      $region26: #{sam2_pe_simple_lst_forward.9} parent=5 // pred_check_branch
        %190 = sbr.rel (%p188) target = $region28
      $region27: #{sam2_pe_simple_lst_forward.9} parent=5 // pred_region
        // Predicated region
        $region29: #{sam2_pe_simple_lst_forward.9} parent=27 // pred_check
          %p191 = pneg %p48
        $region30: #{sam2_pe_simple_lst_forward.9} parent=27 // pred_check_branch
          %193 = sbr.rel (%p191) target = $region32
        $region31: #{sam2_pe_simple_lst_forward.9} parent=27 // pred_region
          %s194 = sand.u32 %s38, 1
          %s195 = scalar_lea.sflag [#allocation3], %s194
          %s196 = sand.u32 %s38, 1
          %s197 = smul.addr %s196, 64
          %s198 = scalar_lea.vmem [#allocation2], %s197
          %s199 = smul.u32 8, %s22
          %s201 = ssub.s32 1024, 1024
          %202 = vsyncadd %s195, %s201
          %s203 = smul.addr %s21, 8
          %s204 = sadd.s32 %s199, %s203
          %s205 = smul.addr %s204, 128
          %s206 = scalar_lea.hbm %s0, %s205
          %s207 = sshll.u32 %s198, 4
          %s208 = int_to_ptr.vmem [resolvable:$true] %s207
          %213 = dma.hbm_to_vmem [thread:$0]  %s206, 1024, %s208, %s195, 128, 128, 8
        $region32: #{sam2_pe_simple_lst_forward.9} parent=27 // pred_fallthru
          _
      $region28: #{sam2_pe_simple_lst_forward.9} parent=5 // pred_fallthru
        _
      %p214 = scmp.le.s32.totalorder 1, %s14
      %p215 = scmp.lt.s32.totalorder %s14, 3
      %p216 = pnand %p214, %p215
      %p217 = pneg %p216
      // Predicated region
      $region33: #{sam2_pe_simple_lst_forward.9} parent=5 // pred_check
        _
      $region34: #{sam2_pe_simple_lst_forward.9} parent=5 // pred_check_branch
        %219 = sbr.rel (%p216) target = $region36
      $region35: #{sam2_pe_simple_lst_forward.9} parent=5 // pred_region
        %s220 = ssub.s32 %s14, 1
        %s221 = sand.u32 %s41, 1
        %s222 = scalar_lea.sflag [#allocation3], %s221
        %s223 = sand.u32 %s41, 1
        %s224 = smul.addr %s223, 64
        %s225 = scalar_lea.vmem [#allocation2], %s224
        // Predicated region
        $region37: #{sam2_pe_simple_lst_forward.9} parent=35 // pred_check
          %p226 = pneg %p54
        $region38: #{sam2_pe_simple_lst_forward.9} parent=35 // pred_check_branch
          %228 = sbr.rel (%p226) target = $region40
        $region39: #{sam2_pe_simple_lst_forward.9} parent=35 // pred_region
          %229 = dma.done %s222, 1024
        $region40: #{sam2_pe_simple_lst_forward.9} parent=35 // pred_fallthru
          _
        // Predicated region
        $region41: #{sam2_pe_simple_lst_forward.9} parent=35 // pred_check
          %p230 = pneg %p122
        $region42: #{sam2_pe_simple_lst_forward.9} parent=35 // pred_check_branch
          %232 = sbr.rel (%p230) target = $region44
        $region43: #{sam2_pe_simple_lst_forward.9} parent=35 // pred_region
          %233 = dma.done [#allocation5], 1024
        $region44: #{sam2_pe_simple_lst_forward.9} parent=35 // pred_fallthru
          _
        %s234 = sand.u32 %s41, 1
        %s235 = scalar_lea.sflag [#allocation3], %s234
        %s236 = sand.u32 %s41, 1
        %s237 = smul.addr %s236, 64
        %s238 = scalar_lea.vmem [#allocation2], %s237
        %p239 = pneg %p54
        %p240 = pneg %p51
        %p241 = pneg %p75
        %p242 = pneg %p72
        %p243 = pneg %p96
        %p244 = pneg %p93
        %p245 = pneg %p122
        %p246 = pneg %p119
        %p247 = pneg %p150
        %p248 = pneg %p147
        %s249 = smul.u32 8, %s24
        %p250 = scmp.lt.s32.totalorder %s23, 1
        %s251 = scalar_select %p250, %s23, 1
        %p252 = scmp.lt.s32.totalorder %s249, 7
        %s253 = scalar_select %p252, %s249, 7
        %s254 = smul.addr %s251, 8
        %s255 = sadd.s32 %s253, %s254
        %s256 = smul.addr %s255, 8
        %s257 = scalar_lea.vmem %s4, %s256
        %s258 = smul.u32 8, %s24
        %s259 = smul.u32 8, %s24
        %s260 = smul.u32 8, %s24
        %p261 = scmp.lt.s32.totalorder %s23, 1
        %s262 = scalar_select %p261, %s23, 1
        %p263 = scmp.lt.s32.totalorder %s260, 7
        %s264 = scalar_select %p263, %s260, 7
        %s265 = smul.addr %s262, 8
        %s266 = sadd.s32 %s264, %s265
        %s267 = smul.addr %s266, 8
        %s268 = scalar_lea.vmem %s4, %s267
        %s269 = smul.u32 8, %s24
        %v271 = vld [vmem:[%s225] sm:$0xff]
        %v272 = vld [vmem:[%s225 + $0x8] sm:$0xff]
        %v273 = vld [vmem:[%s225 + $0x10] sm:$0xff]
        %v274 = vld [vmem:[%s225 + $0x18] sm:$0xff]
        %v275 = vld [vmem:[%s225 + $0x20] sm:$0xff]
        %v276 = vld [vmem:[%s225 + $0x28] sm:$0xff]
        %v277 = vld [vmem:[%s225 + $0x30] sm:$0xff]
        %v278 = vld [vmem:[%s225 + $0x38] sm:$0xff]
        %v279 = vpack.c.bf16 %v272, %v271
        %v280 = vpack.c.bf16 %v274, %v273
        %v281 = vpack.c.bf16 %v276, %v275
        %v282 = vpack.c.bf16 %v278, %v277
        %v283 = vld [vmem:[%s1] sm:$0xf]
        %v284 = vld [vmem:[%s1 + $0x4] sm:$0xf]
        %v285 = vld [vmem:[%s1 + $0x8] sm:$0xf]
        %v286 = vld [vmem:[%s1 + $0xc] sm:$0xf]
        %v287 = vld [vmem:[%s2] sm:$0x1]
        %v289 = vlaneseq
        %v290 = vshrl.u32 %v289, 7
        %v291 = vsub.s32 0, %v290
        %v292 = vrot.slane %v287, %v291
        %v298 = vunpack.c.l.b16 %v283
        %v299 = vunpack.c.l.b16 %v284
        %v300 = vunpack.c.l.b16 %v285
        %v301 = vunpack.c.l.b16 %v286
        %v302 = vpack.c.b16 %v299, %v298
        %v303 = vpack.c.b16 %v301, %v300
        %vm306 = vcmask 261120
        %v308 = vsel %vm306, %v279, 0
        %v311 = vsel %vm306, %v280, 0
        %v314 = vsel %vm306, %v281, 0
        %v317 = vsel %vm306, %v282, 0
        %319 = vmatprep.subr.bf16.mxu0 0
        %320 = vmatpush1.bf16.msra.mxu0 0
        %321 = vmatprep.subr.bf16.mxu0 0
        %322 = vmatpush1.bf16.msra.mxu0 0
        %323 = vmatprep.subr.bf16.mxu0 0
        %324 = vmatpush1.bf16.msra.mxu0 0
        %325 = vmatprep.subr.bf16.mxu0 0
        %326 = vmatpush1.bf16.msra.mxu0 0
        %327 = vmatprep.subr.bf16.mxu0 0
        %328 = vmatpush1.bf16.msra.mxu0 0
        %329 = vmatprep.subr.bf16.mxu0 0
        %330 = vmatpush1.bf16.msra.mxu0 0
        %331 = vmatprep.subr.bf16.mxu0 0
        %332 = vmatpush1.bf16.msra.mxu0 %v303
        %333 = vmatprep.subr.bf16.mxu0 0
        %334 = vmatpush1.bf16.msra.mxu0 %v302
        %335 = vmatprep.subr.bf16.mxu0 0
        %336 = vmatpush2.bf16.msra.mxu0 0
        %337 = vmatprep.subr.bf16.mxu0 0
        %338 = vmatpush2.bf16.msra.mxu0 0
        %339 = vmatprep.subr.bf16.mxu0 0
        %340 = vmatpush2.bf16.msra.mxu0 0
        %341 = vmatprep.subr.bf16.mxu0 0
        %342 = vmatpush2.bf16.msra.mxu0 0
        %343 = vmatprep.subr.bf16.mxu0 0
        %344 = vmatpush2.bf16.msra.mxu0 0
        %345 = vmatprep.subr.bf16.mxu0 0
        %346 = vmatpush2.bf16.msra.mxu0 0
        %347 = vmatprep.subr.bf16.mxu0 0
        %348 = vmatpush2.bf16.msra.mxu0 0
        %349 = vmatprep.subr.bf16.mxu0 0
        %350 = vmatpush2.bf16.msra.mxu0 0
        %351 = vmatprep.mubr.bf16.mxu0 0
        %352 = vmatmul.mubr.bf16.gmra.mxu0 %v308
        %v353 = vpop.f32.mrf.mxu0
        %v354 = vadd.f32 %v292, %v353
        %v355 = vpop.f32.mrf.mxu0
        %v356 = vpop.f32.mrf.mxu0
        %v357 = vadd.f32 %v292, %v356
        %v358 = vpop.f32.mrf.mxu0
        %359 = vmatprep.mubr.bf16.mxu0 0
        %360 = vmatmul.mubr.bf16.gmra.mxu0 %v311
        %v361 = vpop.f32.mrf.mxu0
        %v362 = vadd.f32 %v292, %v361
        %v363 = vpop.f32.mrf.mxu0
        %v364 = vpop.f32.mrf.mxu0
        %v365 = vadd.f32 %v292, %v364
        %v366 = vpop.f32.mrf.mxu0
        %367 = vmatprep.mubr.bf16.mxu0 0
        %368 = vmatmul.mubr.bf16.gmra.mxu0 %v314
        %v369 = vpop.f32.mrf.mxu0
        %v370 = vadd.f32 %v292, %v369
        %v371 = vpop.f32.mrf.mxu0
        %v372 = vpop.f32.mrf.mxu0
        %v373 = vadd.f32 %v292, %v372
        %v374 = vpop.f32.mrf.mxu0
        %375 = vmatprep.mubr.bf16.mxu0 0
        %376 = vmatmul.mubr.bf16.gmra.mxu0 %v317
        %v377 = vpop.f32.mrf.mxu0
        %v378 = vadd.f32 %v292, %v377
        %v379 = vpop.f32.mrf.mxu0
        %v380 = vpop.f32.mrf.mxu0
        %v381 = vadd.f32 %v292, %v380
        %v382 = vpop.f32.mrf.mxu0
        %383 = vdwg.mxu0
        %v384 = vld [vmem:[#allocation4] sm:$0xff]
        %v385 = vld [vmem:[#allocation4 + $0x8] sm:$0xff]
        %v386 = vld [vmem:[#allocation4 + $0x10] sm:$0xff]
        %v387 = vld [vmem:[#allocation4 + $0x18] sm:$0xff]
        %v388 = vld [vmem:[#allocation4 + $0x20] sm:$0xff]
        %v389 = vld [vmem:[#allocation4 + $0x28] sm:$0xff]
        %v390 = vld [vmem:[#allocation4 + $0x30] sm:$0xff]
        %v391 = vld [vmem:[#allocation4 + $0x38] sm:$0xff]
        %v392 = vadd.f32 %v354, %v384
        %v393 = vadd.f32 %v357, %v385
        %v394 = vadd.f32 %v362, %v386
        %v395 = vadd.f32 %v365, %v387
        %v396 = vadd.f32 %v370, %v388
        %v397 = vadd.f32 %v373, %v389
        %v398 = vadd.f32 %v378, %v390
        %v399 = vadd.f32 %v381, %v391
        %400 = vst [vmem:[%s268] sm:$0xff] %v392
        %401 = vst [vmem:[%s268 + $0x8] sm:$0xff] %v393
        %402 = vst [vmem:[%s268 + $0x10] sm:$0xff] %v394
        %403 = vst [vmem:[%s268 + $0x18] sm:$0xff] %v395
        %404 = vst [vmem:[%s268 + $0x20] sm:$0xff] %v396
        %405 = vst [vmem:[%s268 + $0x28] sm:$0xff] %v397
        %406 = vst [vmem:[%s268 + $0x30] sm:$0xff] %v398
        %407 = vst [vmem:[%s268 + $0x38] sm:$0xff] %v399
        %s408 = smul.u32 8, %s24
        %p409 = scmp.lt.s32.totalorder %s23, 1
        %s410 = scalar_select %p409, %s23, 1
        %p411 = scmp.lt.s32.totalorder %s408, 7
        %s412 = scalar_select %p411, %s408, 7
        %s413 = smul.addr %s410, 8
        %s414 = sadd.s32 %s412, %s413
        %s415 = smul.addr %s414, 8
        %s416 = scalar_lea.vmem %s4, %s415
        // Predicated region
        $region45: #{sam2_pe_simple_lst_forward.9} parent=35 // pred_check
          %p417 = pneg %p147
        $region46: #{sam2_pe_simple_lst_forward.9} parent=35 // pred_check_branch
          %419 = sbr.rel (%p417) target = $region48
        $region47: #{sam2_pe_simple_lst_forward.9} parent=35 // pred_region
          %s420 = smul.u32 8, %s24
        $region48: #{sam2_pe_simple_lst_forward.9} parent=35 // pred_fallthru
          _
      $region36: #{sam2_pe_simple_lst_forward.9} parent=5 // pred_fallthru
        _
      %p421 = scmp.le.s32.totalorder 2, %s14
      // Predicated region
      $region49: #{sam2_pe_simple_lst_forward.9} parent=5 // pred_check
        %p422 = pneg %p421
      $region50: #{sam2_pe_simple_lst_forward.9} parent=5 // pred_check_branch
        %424 = sbr.rel (%p422) target = $region52
      $region51: #{sam2_pe_simple_lst_forward.9} parent=5 // pred_region
        %s425 = ssub.s32 %s14, 2
        // Predicated region
        $region53: #{sam2_pe_simple_lst_forward.9} parent=51 // pred_check
          %p426 = pneg %p153
        $region54: #{sam2_pe_simple_lst_forward.9} parent=51 // pred_check_branch
          %428 = sbr.rel (%p426) target = $region56
        $region55: #{sam2_pe_simple_lst_forward.9} parent=51 // pred_region
          %s429 = smul.u32 8, %s26
          %p430 = scmp.lt.s32.totalorder %s25, 1
          %s431 = scalar_select %p430, %s25, 1
          %p432 = scmp.lt.s32.totalorder %s429, 7
          %s433 = scalar_select %p432, %s429, 7
          %s434 = smul.addr %s431, 8
          %s435 = sadd.s32 %s433, %s434
          %s436 = smul.addr %s435, 8
          %s437 = scalar_lea.vmem %s4, %s436
        $region56: #{sam2_pe_simple_lst_forward.9} parent=51 // pred_fallthru
          _
      $region52: #{sam2_pe_simple_lst_forward.9} parent=5 // pred_fallthru
        _
    $region6: #{sam2_pe_simple_lst_forward.9} parent=1 // loop_footer
      %s18 = sadd.s32 1, %s14
    $region7: #{sam2_pe_simple_lst_forward.9} parent=1 // loop_footer_branch
      %13 = sbr.rel target = $region3
    $region8: #{sam2_pe_simple_lst_forward.9} parent=1 // loop_exit
      _
    %438 = vsyncpa [#allocation3], 1
    %s439 = scalar_lea.sflag [#allocation3], 1
    %440 = vsyncpa %s439, 1
    %441 = vsyncpa [#allocation5], 1

// kernel: sam2_pe_simple_lst_forward.10
$region0: #{sam2_pe_simple_lst_forward.10}
  #allocation0 [shape = 'u32[]', space=smem, size = 0x4, offset = 0x4, fixed_abs, tag = 'smem constant byte address 0x4 - core index']
  #allocation1 [shape = 'u32[144,128]{1,0:T(1,128)}', space=vmem, size = 0x12000, scoped, tag = 'internal scratch']
  %s0 = inlined_call_operand.vmem [shape: f32[128,128], index: 0, kind: input, shape index: {}]
  %s1 = inlined_call_operand.vmem [shape: f32[1,128], index: 1, kind: input, shape index: {}]
  %s2 = inlined_call_operand.vmem [shape: f32[1,128], index: 2, kind: input, shape index: {}]
  %s3 = inlined_call_operand.vmem [shape: bf16[128,384], index: 3, kind: input, shape index: {}]
  %s4 = inlined_call_operand.vmem [shape: f32[1,384], index: 4, kind: input, shape index: {}]
  %s5 = inlined_call_operand.vmem [shape: bf16[128,384], index: 5, kind: output, shape index: {}]
  %s6 = sld [smem:[#allocation0]]
  $region30: #{sam2_pe_simple_lst_forward.10} parent=0
    _
  %s8 = ssub.s32 1, %s6
  %s9 = scalar_select 0, %s8, %s6
  // Predicated region
  $region2: #{sam2_pe_simple_lst_forward.10} parent=0 // pred_check
    _
  $region3: #{sam2_pe_simple_lst_forward.10} parent=0 // pred_check_branch
    %11 = sbr.rel (0) target = $region5
  $region4: #{sam2_pe_simple_lst_forward.10} parent=0 // pred_region
    _
  $region5: #{sam2_pe_simple_lst_forward.10} parent=0 // pred_fallthru
    _
  // Predicated region
  $region6: #{sam2_pe_simple_lst_forward.10} parent=0 // pred_check
    _
  $region7: #{sam2_pe_simple_lst_forward.10} parent=0 // pred_check_branch
    %13 = sbr.rel (0) target = $region9
  $region8: #{sam2_pe_simple_lst_forward.10} parent=0 // pred_region
    _
  $region9: #{sam2_pe_simple_lst_forward.10} parent=0 // pred_fallthru
    _
  // Predicated region
  $region10: #{sam2_pe_simple_lst_forward.10} parent=0 // pred_check
    _
  $region11: #{sam2_pe_simple_lst_forward.10} parent=0 // pred_check_branch
    %15 = sbr.rel (0) target = $region13
  $region12: #{sam2_pe_simple_lst_forward.10} parent=0 // pred_region
    _
  $region13: #{sam2_pe_simple_lst_forward.10} parent=0 // pred_fallthru
    _
  // Predicated region
  $region14: #{sam2_pe_simple_lst_forward.10} parent=0 // pred_check
    _
  $region15: #{sam2_pe_simple_lst_forward.10} parent=0 // pred_check_branch
    %17 = sbr.rel (0) target = $region17
  $region16: #{sam2_pe_simple_lst_forward.10} parent=0 // pred_region
    _
  $region17: #{sam2_pe_simple_lst_forward.10} parent=0 // pred_fallthru
    _
  // Predicated region
  $region18: #{sam2_pe_simple_lst_forward.10} parent=0 // pred_check
    _
  $region19: #{sam2_pe_simple_lst_forward.10} parent=0 // pred_check_branch
    %19 = sbr.rel (0) target = $region21
  $region20: #{sam2_pe_simple_lst_forward.10} parent=0 // pred_region
    _
  $region21: #{sam2_pe_simple_lst_forward.10} parent=0 // pred_fallthru
    _
  %v21 = vld [vmem:[%s0] sm:$0xff]
  %v22 = vld [vmem:[%s0 + $0x8] sm:$0xff]
  %v23 = vld [vmem:[%s0 + $0x10] sm:$0xff]
  %v24 = vld [vmem:[%s0 + $0x18] sm:$0xff]
  %v25 = vld [vmem:[%s0 + $0x20] sm:$0xff]
  %v26 = vld [vmem:[%s0 + $0x28] sm:$0xff]
  %v27 = vld [vmem:[%s0 + $0x30] sm:$0xff]
  %v28 = vld [vmem:[%s0 + $0x38] sm:$0xff]
  %v29 = vld [vmem:[%s0 + $0x40] sm:$0xff]
  %v30 = vld [vmem:[%s0 + $0x48] sm:$0xff]
  %v31 = vld [vmem:[%s0 + $0x50] sm:$0xff]
  %v32 = vld [vmem:[%s0 + $0x58] sm:$0xff]
  %v33 = vld [vmem:[%s0 + $0x60] sm:$0xff]
  %v34 = vld [vmem:[%s0 + $0x68] sm:$0xff]
  %v35 = vld [vmem:[%s0 + $0x70] sm:$0xff]
  %v36 = vld [vmem:[%s0 + $0x78] sm:$0xff]
  %37 = vadd.xlane.f32.xlu0 %v21
  %v38 = vpop.xlane.xlu0 %37
  %39 = vadd.xlane.f32.xlu0 %v22
  %v40 = vpop.xlane.xlu0 %39
  %41 = vadd.xlane.f32.xlu0 %v23
  %v42 = vpop.xlane.xlu0 %41
  %43 = vadd.xlane.f32.xlu0 %v24
  %v44 = vpop.xlane.xlu0 %43
  %45 = vadd.xlane.f32.xlu0 %v25
  %v46 = vpop.xlane.xlu0 %45
  %47 = vadd.xlane.f32.xlu0 %v26
  %v48 = vpop.xlane.xlu0 %47
  %49 = vadd.xlane.f32.xlu0 %v27
  %v50 = vpop.xlane.xlu0 %49
  %51 = vadd.xlane.f32.xlu0 %v28
  %v52 = vpop.xlane.xlu0 %51
  %53 = vadd.xlane.f32.xlu0 %v29
  %v54 = vpop.xlane.xlu0 %53
  %55 = vadd.xlane.f32.xlu0 %v30
  %v56 = vpop.xlane.xlu0 %55
  %57 = vadd.xlane.f32.xlu0 %v31
  %v58 = vpop.xlane.xlu0 %57
  %59 = vadd.xlane.f32.xlu0 %v32
  %v60 = vpop.xlane.xlu0 %59
  %61 = vadd.xlane.f32.xlu0 %v33
  %v62 = vpop.xlane.xlu0 %61
  %63 = vadd.xlane.f32.xlu0 %v34
  %v64 = vpop.xlane.xlu0 %63
  %65 = vadd.xlane.f32.xlu0 %v35
  %v66 = vpop.xlane.xlu0 %65
  %67 = vadd.xlane.f32.xlu0 %v36
  %v68 = vpop.xlane.xlu0 %67
  %v69 = vrcp.pop 128.0
  %v70 = vmul.f32 %v38, %v69
  %v71 = vmul.f32 %v40, %v69
  %v72 = vmul.f32 %v42, %v69
  %v73 = vmul.f32 %v44, %v69
  %v74 = vmul.f32 %v46, %v69
  %v75 = vmul.f32 %v48, %v69
  %v76 = vmul.f32 %v50, %v69
  %v77 = vmul.f32 %v52, %v69
  %v78 = vmul.f32 %v54, %v69
  %v79 = vmul.f32 %v56, %v69
  %v80 = vmul.f32 %v58, %v69
  %v81 = vmul.f32 %v60, %v69
  %v82 = vmul.f32 %v62, %v69
  %v83 = vmul.f32 %v64, %v69
  %v84 = vmul.f32 %v66, %v69
  %v85 = vmul.f32 %v68, %v69
  %v86 = vsub.f32 %v21, %v70
  %v87 = vsub.f32 %v22, %v71
  %v88 = vsub.f32 %v23, %v72
  %v89 = vsub.f32 %v24, %v73
  %v90 = vsub.f32 %v25, %v74
  %v91 = vsub.f32 %v26, %v75
  %v92 = vsub.f32 %v27, %v76
  %v93 = vsub.f32 %v28, %v77
  %v94 = vsub.f32 %v29, %v78
  %v95 = vsub.f32 %v30, %v79
  %v96 = vsub.f32 %v31, %v80
  %v97 = vsub.f32 %v32, %v81
  %v98 = vsub.f32 %v33, %v82
  %v99 = vsub.f32 %v34, %v83
  %v100 = vsub.f32 %v35, %v84
  %v101 = vsub.f32 %v36, %v85
  %v102 = vmul.f32 %v86, %v86
  %v103 = vmul.f32 %v87, %v87
  %v104 = vmul.f32 %v88, %v88
  %v105 = vmul.f32 %v89, %v89
  %v106 = vmul.f32 %v90, %v90
  %v107 = vmul.f32 %v91, %v91
  %v108 = vmul.f32 %v92, %v92
  %v109 = vmul.f32 %v93, %v93
  %v110 = vmul.f32 %v94, %v94
  %v111 = vmul.f32 %v95, %v95
  %v112 = vmul.f32 %v96, %v96
  %v113 = vmul.f32 %v97, %v97
  %v114 = vmul.f32 %v98, %v98
  %v115 = vmul.f32 %v99, %v99
  %v116 = vmul.f32 %v100, %v100
  %v117 = vmul.f32 %v101, %v101
  %118 = vadd.xlane.f32.xlu0 %v102
  %v119 = vpop.xlane.xlu0 %118
  %120 = vadd.xlane.f32.xlu0 %v103
  %v121 = vpop.xlane.xlu0 %120
  %122 = vadd.xlane.f32.xlu0 %v104
  %v123 = vpop.xlane.xlu0 %122
  %124 = vadd.xlane.f32.xlu0 %v105
  %v125 = vpop.xlane.xlu0 %124
  %126 = vadd.xlane.f32.xlu0 %v106
  %v127 = vpop.xlane.xlu0 %126
  %128 = vadd.xlane.f32.xlu0 %v107
  %v129 = vpop.xlane.xlu0 %128
  %130 = vadd.xlane.f32.xlu0 %v108
  %v131 = vpop.xlane.xlu0 %130
  %132 = vadd.xlane.f32.xlu0 %v109
  %v133 = vpop.xlane.xlu0 %132
  %134 = vadd.xlane.f32.xlu0 %v110
  %v135 = vpop.xlane.xlu0 %134
  %136 = vadd.xlane.f32.xlu0 %v111
  %v137 = vpop.xlane.xlu0 %136
  %138 = vadd.xlane.f32.xlu0 %v112
  %v139 = vpop.xlane.xlu0 %138
  %140 = vadd.xlane.f32.xlu0 %v113
  %v141 = vpop.xlane.xlu0 %140
  %142 = vadd.xlane.f32.xlu0 %v114
  %v143 = vpop.xlane.xlu0 %142
  %144 = vadd.xlane.f32.xlu0 %v115
  %v145 = vpop.xlane.xlu0 %144
  %146 = vadd.xlane.f32.xlu0 %v116
  %v147 = vpop.xlane.xlu0 %146
  %148 = vadd.xlane.f32.xlu0 %v117
  %v149 = vpop.xlane.xlu0 %148
  %v150 = vmul.f32 %v119, %v69
  %v151 = vmul.f32 %v121, %v69
  %v152 = vmul.f32 %v123, %v69
  %v153 = vmul.f32 %v125, %v69
  %v154 = vmul.f32 %v127, %v69
  %v155 = vmul.f32 %v129, %v69
  %v156 = vmul.f32 %v131, %v69
  %v157 = vmul.f32 %v133, %v69
  %v158 = vmul.f32 %v135, %v69
  %v159 = vmul.f32 %v137, %v69
  %v160 = vmul.f32 %v139, %v69
  %v161 = vmul.f32 %v141, %v69
  %v162 = vmul.f32 %v143, %v69
  %v163 = vmul.f32 %v145, %v69
  %v164 = vmul.f32 %v147, %v69
  %v165 = vmul.f32 %v149, %v69
  %v166 = vadd.f32 %v150, 1e-06
  %v167 = vadd.f32 %v151, 1e-06
  %v168 = vadd.f32 %v152, 1e-06
  %v169 = vadd.f32 %v153, 1e-06
  %v170 = vadd.f32 %v154, 1e-06
  %v171 = vadd.f32 %v155, 1e-06
  %v172 = vadd.f32 %v156, 1e-06
  %v173 = vadd.f32 %v157, 1e-06
  %v174 = vadd.f32 %v158, 1e-06
  %v175 = vadd.f32 %v159, 1e-06
  %v176 = vadd.f32 %v160, 1e-06
  %v177 = vadd.f32 %v161, 1e-06
  %v178 = vadd.f32 %v162, 1e-06
  %v179 = vadd.f32 %v163, 1e-06
  %v180 = vadd.f32 %v164, 1e-06
  %v181 = vadd.f32 %v165, 1e-06
  %v182 = vrsqrt.pop %v166
  %v183 = vrsqrt.pop %v167
  %v184 = vrsqrt.pop %v168
  %v185 = vrsqrt.pop %v169
  %v186 = vrsqrt.pop %v170
  %v187 = vrsqrt.pop %v171
  %v188 = vrsqrt.pop %v172
  %v189 = vrsqrt.pop %v173
  %v190 = vrsqrt.pop %v174
  %v191 = vrsqrt.pop %v175
  %v192 = vrsqrt.pop %v176
  %v193 = vrsqrt.pop %v177
  %v194 = vrsqrt.pop %v178
  %v195 = vrsqrt.pop %v179
  %v196 = vrsqrt.pop %v180
  %v197 = vrsqrt.pop %v181
  %v198 = vmul.f32 %v86, %v182
  %v199 = vmul.f32 %v87, %v183
  %v200 = vmul.f32 %v88, %v184
  %v201 = vmul.f32 %v89, %v185
  %v202 = vmul.f32 %v90, %v186
  %v203 = vmul.f32 %v91, %v187
  %v204 = vmul.f32 %v92, %v188
  %v205 = vmul.f32 %v93, %v189
  %v206 = vmul.f32 %v94, %v190
  %v207 = vmul.f32 %v95, %v191
  %v208 = vmul.f32 %v96, %v192
  %v209 = vmul.f32 %v97, %v193
  %v210 = vmul.f32 %v98, %v194
  %v211 = vmul.f32 %v99, %v195
  %v212 = vmul.f32 %v100, %v196
  %v213 = vmul.f32 %v101, %v197
  %v214 = vld [vmem:[%s1] sm:$0x1]
  %v216 = vlaneseq
  %v217 = vshrl.u32 %v216, 7
  %v218 = vsub.s32 0, %v217
  %v219 = vrot.slane %v214, %v218
  %v221 = vmul.f32 %v198, %v219
  %v222 = vmul.f32 %v199, %v219
  %v223 = vmul.f32 %v200, %v219
  %v224 = vmul.f32 %v201, %v219
  %v225 = vmul.f32 %v202, %v219
  %v226 = vmul.f32 %v203, %v219
  %v227 = vmul.f32 %v204, %v219
  %v228 = vmul.f32 %v205, %v219
  %v229 = vmul.f32 %v206, %v219
  %v230 = vmul.f32 %v207, %v219
  %v231 = vmul.f32 %v208, %v219
  %v232 = vmul.f32 %v209, %v219
  %v233 = vmul.f32 %v210, %v219
  %v234 = vmul.f32 %v211, %v219
  %v235 = vmul.f32 %v212, %v219
  %v236 = vmul.f32 %v213, %v219
  %v237 = vld [vmem:[%s2] sm:$0x1]
  %v239 = vlaneseq
  %v240 = vshrl.u32 %v239, 7
  %v241 = vsub.s32 0, %v240
  %v242 = vrot.slane %v237, %v241
  %v244 = vadd.f32 %v221, %v242
  %v245 = vadd.f32 %v222, %v242
  %v246 = vadd.f32 %v223, %v242
  %v247 = vadd.f32 %v224, %v242
  %v248 = vadd.f32 %v225, %v242
  %v249 = vadd.f32 %v226, %v242
  %v250 = vadd.f32 %v227, %v242
  %v251 = vadd.f32 %v228, %v242
  %v252 = vadd.f32 %v229, %v242
  %v253 = vadd.f32 %v230, %v242
  %v254 = vadd.f32 %v231, %v242
  %v255 = vadd.f32 %v232, %v242
  %v256 = vadd.f32 %v233, %v242
  %v257 = vadd.f32 %v234, %v242
  %v258 = vadd.f32 %v235, %v242
  %v259 = vadd.f32 %v236, %v242
  %v260 = vpack.c.bf16 %v245, %v244
  %v261 = vpack.c.bf16 %v247, %v246
  %v262 = vpack.c.bf16 %v249, %v248
  %v263 = vpack.c.bf16 %v251, %v250
  %v264 = vpack.c.bf16 %v253, %v252
  %v265 = vpack.c.bf16 %v255, %v254
  %v266 = vpack.c.bf16 %v257, %v256
  %v267 = vpack.c.bf16 %v259, %v258
  %v268 = vld [vmem:[%s3] sm:$0xff]
  %v269 = vld [vmem:[%s3 + $0x8] sm:$0xf]
  %v270 = vld [vmem:[%s3 + $0xc] sm:$0xff]
  %v271 = vld [vmem:[%s3 + $0x14] sm:$0xf]
  %v272 = vld [vmem:[%s3 + $0x18] sm:$0xff]
  %v273 = vld [vmem:[%s3 + $0x20] sm:$0xf]
  %v274 = vld [vmem:[%s3 + $0x24] sm:$0xff]
  %v275 = vld [vmem:[%s3 + $0x2c] sm:$0xf]
  %v276 = vld [vmem:[%s3 + $0x30] sm:$0xff]
  %v277 = vld [vmem:[%s3 + $0x38] sm:$0xf]
  %v278 = vld [vmem:[%s3 + $0x3c] sm:$0xff]
  %v279 = vld [vmem:[%s3 + $0x44] sm:$0xf]
  %v280 = vld [vmem:[%s3 + $0x48] sm:$0xff]
  %v281 = vld [vmem:[%s3 + $0x50] sm:$0xf]
  %v282 = vld [vmem:[%s3 + $0x54] sm:$0xff]
  %v283 = vld [vmem:[%s3 + $0x5c] sm:$0xf]
  %v284 = vld [vmem:[%s3 + $0x60] sm:$0xff]
  %v285 = vld [vmem:[%s3 + $0x68] sm:$0xf]
  %v286 = vld [vmem:[%s3 + $0x6c] sm:$0xff]
  %v287 = vld [vmem:[%s3 + $0x74] sm:$0xf]
  %v288 = vld [vmem:[%s3 + $0x78] sm:$0xff]
  %v289 = vld [vmem:[%s3 + $0x80] sm:$0xf]
  %v290 = vld [vmem:[%s3 + $0x84] sm:$0xff]
  %v291 = vld [vmem:[%s3 + $0x8c] sm:$0xf]
  %v292 = vld [vmem:[%s3 + $0x90] sm:$0xff]
  %v293 = vld [vmem:[%s3 + $0x98] sm:$0xf]
  %v294 = vld [vmem:[%s3 + $0x9c] sm:$0xff]
  %v295 = vld [vmem:[%s3 + $0xa4] sm:$0xf]
  %v296 = vld [vmem:[%s3 + $0xa8] sm:$0xff]
  %v297 = vld [vmem:[%s3 + $0xb0] sm:$0xf]
  %v298 = vld [vmem:[%s3 + $0xb4] sm:$0xff]
  %v299 = vld [vmem:[%s3 + $0xbc] sm:$0xf]
  %v300 = vld [vmem:[%s4] sm:$0x7]
  %v302 = vlaneseq
  %v303 = vshrl.u32 %v302, 7
  %v304 = vsub.s32 0, %v303
  %v305 = vrot.slane %v300, %v304
  %v306 = vlaneseq
  %v307 = vshrl.u32 %v306, 7
  %v308 = vsub.s32 1, %v307
  %v309 = vrot.slane %v300, %v308
  %v310 = vlaneseq
  %v311 = vshrl.u32 %v310, 7
  %v312 = vsub.s32 2, %v311
  %v313 = vrot.slane %v300, %v312
  %v349 = vunpack.c.l.b16 %v268
  %v350 = vunpack.c.h.b16 %v268
  %v351 = vunpack.c.l.b16 %v269
  %v352 = vunpack.c.l.b16 %v270
  %v353 = vunpack.c.h.b16 %v270
  %v354 = vunpack.c.l.b16 %v271
  %v355 = vunpack.c.l.b16 %v272
  %v356 = vunpack.c.h.b16 %v272
  %v357 = vunpack.c.l.b16 %v273
  %v358 = vunpack.c.l.b16 %v274
  %v359 = vunpack.c.h.b16 %v274
  %v360 = vunpack.c.l.b16 %v275
  %v361 = vunpack.c.l.b16 %v276
  %v362 = vunpack.c.h.b16 %v276
  %v363 = vunpack.c.l.b16 %v277
  %v364 = vunpack.c.l.b16 %v278
  %v365 = vunpack.c.h.b16 %v278
  %v366 = vunpack.c.l.b16 %v279
  %v367 = vunpack.c.l.b16 %v280
  %v368 = vunpack.c.h.b16 %v280
  %v369 = vunpack.c.l.b16 %v281
  %v370 = vunpack.c.l.b16 %v282
  %v371 = vunpack.c.h.b16 %v282
  %v372 = vunpack.c.l.b16 %v283
  %v373 = vunpack.c.l.b16 %v284
  %v374 = vunpack.c.h.b16 %v284
  %v375 = vunpack.c.l.b16 %v285
  %v376 = vunpack.c.l.b16 %v286
  %v377 = vunpack.c.h.b16 %v286
  %v378 = vunpack.c.l.b16 %v287
  %v379 = vunpack.c.l.b16 %v288
  %v380 = vunpack.c.h.b16 %v288
  %v381 = vunpack.c.l.b16 %v289
  %v382 = vunpack.c.l.b16 %v290
  %v383 = vunpack.c.h.b16 %v290
  %v384 = vunpack.c.l.b16 %v291
  %v385 = vunpack.c.l.b16 %v292
  %v386 = vunpack.c.h.b16 %v292
  %v387 = vunpack.c.l.b16 %v293
  %v388 = vunpack.c.l.b16 %v294
  %v389 = vunpack.c.h.b16 %v294
  %v390 = vunpack.c.l.b16 %v295
  %v391 = vunpack.c.l.b16 %v296
  %v392 = vunpack.c.h.b16 %v296
  %v393 = vunpack.c.l.b16 %v297
  %v394 = vunpack.c.l.b16 %v298
  %v395 = vunpack.c.h.b16 %v298
  %v396 = vunpack.c.l.b16 %v299
  %v397 = vpack.c.b16 %v352, %v349
  %v398 = vpack.c.b16 %v353, %v350
  %v399 = vpack.c.b16 %v354, %v351
  %v400 = vpack.c.b16 %v358, %v355
  %v401 = vpack.c.b16 %v359, %v356
  %v402 = vpack.c.b16 %v360, %v357
  %v403 = vpack.c.b16 %v364, %v361
  %v404 = vpack.c.b16 %v365, %v362
  %v405 = vpack.c.b16 %v366, %v363
  %v406 = vpack.c.b16 %v370, %v367
  %v407 = vpack.c.b16 %v371, %v368
  %v408 = vpack.c.b16 %v372, %v369
  %v409 = vpack.c.b16 %v376, %v373
  %v410 = vpack.c.b16 %v377, %v374
  %v411 = vpack.c.b16 %v378, %v375
  %v412 = vpack.c.b16 %v382, %v379
  %v413 = vpack.c.b16 %v383, %v380
  %v414 = vpack.c.b16 %v384, %v381
  %v415 = vpack.c.b16 %v388, %v385
  %v416 = vpack.c.b16 %v389, %v386
  %v417 = vpack.c.b16 %v390, %v387
  %v418 = vpack.c.b16 %v394, %v391
  %v419 = vpack.c.b16 %v395, %v392
  %v420 = vpack.c.b16 %v396, %v393
  %445 = vmatprep.subr.bf16.mxu0 %v419
  %446 = vmatpush1.bf16.msra.mxu0 %v418
  %447 = vmatprep.subr.bf16.mxu0 %v416
  %448 = vmatpush1.bf16.msra.mxu0 %v415
  %449 = vmatprep.subr.bf16.mxu0 %v413
  %450 = vmatpush1.bf16.msra.mxu0 %v412
  %451 = vmatprep.subr.bf16.mxu0 %v410
  %452 = vmatpush1.bf16.msra.mxu0 %v409
  %453 = vmatprep.subr.bf16.mxu0 %v407
  %454 = vmatpush1.bf16.msra.mxu0 %v406
  %455 = vmatprep.subr.bf16.mxu0 %v404
  %456 = vmatpush1.bf16.msra.mxu0 %v403
  %457 = vmatprep.subr.bf16.mxu0 %v401
  %458 = vmatpush1.bf16.msra.mxu0 %v400
  %459 = vmatprep.subr.bf16.mxu0 %v398
  %460 = vmatpush1.bf16.msra.mxu0 %v397
  %461 = vmatprep.subr.bf16.mxu0 0
  %462 = vmatpush2.bf16.msra.mxu0 0
  %463 = vmatprep.subr.bf16.mxu0 0
  %464 = vmatpush2.bf16.msra.mxu0 0
  %465 = vmatprep.subr.bf16.mxu0 0
  %466 = vmatpush2.bf16.msra.mxu0 0
  %467 = vmatprep.subr.bf16.mxu0 0
  %468 = vmatpush2.bf16.msra.mxu0 0
  %469 = vmatprep.subr.bf16.mxu0 0
  %470 = vmatpush2.bf16.msra.mxu0 0
  %471 = vmatprep.subr.bf16.mxu0 0
  %472 = vmatpush2.bf16.msra.mxu0 0
  %473 = vmatprep.subr.bf16.mxu0 0
  %474 = vmatpush2.bf16.msra.mxu0 0
  %475 = vmatprep.subr.bf16.mxu0 0
  %476 = vmatpush2.bf16.msra.mxu0 0
  %477 = vmatprep.mubr.bf16.mxu0 0
  %478 = vmatmul.mubr.bf16.gmra.mxu0 %v260
  %v479 = vpop.f32.mrf.mxu0
  %v480 = vadd.f32 %v305, %v479
  %v481 = vpop.f32.mrf.mxu0
  %v482 = vadd.f32 %v309, %v481
  %v483 = vpop.f32.mrf.mxu0
  %v484 = vadd.f32 %v305, %v483
  %v485 = vpop.f32.mrf.mxu0
  %v486 = vadd.f32 %v309, %v485
  %487 = vmatprep.mubr.bf16.mxu0 0
  %488 = vmatmul.mubr.bf16.gmra.mxu0 %v261
  %v489 = vpop.f32.mrf.mxu0
  %v490 = vadd.f32 %v305, %v489
  %v491 = vpop.f32.mrf.mxu0
  %v492 = vadd.f32 %v309, %v491
  %v493 = vpop.f32.mrf.mxu0
  %v494 = vadd.f32 %v305, %v493
  %v495 = vpop.f32.mrf.mxu0
  %v496 = vadd.f32 %v309, %v495
  %497 = vmatprep.mubr.bf16.mxu0 0
  %498 = vmatmul.mubr.bf16.gmra.mxu0 %v262
  %v499 = vpop.f32.mrf.mxu0
  %v500 = vadd.f32 %v305, %v499
  %v501 = vpop.f32.mrf.mxu0
  %v502 = vadd.f32 %v309, %v501
  %v503 = vpop.f32.mrf.mxu0
  %v504 = vadd.f32 %v305, %v503
  %v505 = vpop.f32.mrf.mxu0
  %v506 = vadd.f32 %v309, %v505
  %507 = vmatprep.mubr.bf16.mxu0 0
  %508 = vmatmul.mubr.bf16.gmra.mxu0 %v263
  %v509 = vpop.f32.mrf.mxu0
  %v510 = vadd.f32 %v305, %v509
  %v511 = vpop.f32.mrf.mxu0
  %v512 = vadd.f32 %v309, %v511
  %v513 = vpop.f32.mrf.mxu0
  %v514 = vadd.f32 %v305, %v513
  %v515 = vpop.f32.mrf.mxu0
  %v516 = vadd.f32 %v309, %v515
  %517 = vmatprep.mubr.bf16.mxu0 0
  %518 = vmatmul.mubr.bf16.gmra.mxu0 %v264
  %v519 = vpop.f32.mrf.mxu0
  %v520 = vadd.f32 %v305, %v519
  %v521 = vpop.f32.mrf.mxu0
  %v522 = vadd.f32 %v309, %v521
  %v523 = vpop.f32.mrf.mxu0
  %v524 = vadd.f32 %v305, %v523
  %v525 = vpop.f32.mrf.mxu0
  %v526 = vadd.f32 %v309, %v525
  %527 = vmatprep.mubr.bf16.mxu0 0
  %528 = vmatmul.mubr.bf16.gmra.mxu0 %v265
  %v529 = vpop.f32.mrf.mxu0
  %v530 = vadd.f32 %v305, %v529
  %v531 = vpop.f32.mrf.mxu0
  %v532 = vadd.f32 %v309, %v531
  %v533 = vpop.f32.mrf.mxu0
  %v534 = vadd.f32 %v305, %v533
  %v535 = vpop.f32.mrf.mxu0
  %v536 = vadd.f32 %v309, %v535
  %537 = vmatprep.mubr.bf16.mxu0 0
  %538 = vmatmul.mubr.bf16.gmra.mxu0 %v266
  %v539 = vpop.f32.mrf.mxu0
  %v540 = vadd.f32 %v305, %v539
  %v541 = vpop.f32.mrf.mxu0
  %v542 = vadd.f32 %v309, %v541
  %v543 = vpop.f32.mrf.mxu0
  %v544 = vadd.f32 %v305, %v543
  %v545 = vpop.f32.mrf.mxu0
  %v546 = vadd.f32 %v309, %v545
  %547 = vmatprep.mubr.bf16.mxu0 0
  %548 = vmatmul.mubr.bf16.gmra.mxu0 %v267
  %v549 = vpop.f32.mrf.mxu0
  %v550 = vadd.f32 %v305, %v549
  %v551 = vpop.f32.mrf.mxu0
  %v552 = vadd.f32 %v309, %v551
  %v553 = vpop.f32.mrf.mxu0
  %v554 = vadd.f32 %v305, %v553
  %v555 = vpop.f32.mrf.mxu0
  %v556 = vadd.f32 %v309, %v555
  %557 = vdwg.mxu0
  %558 = vmatprep.subr.bf16.mxu0 0
  %559 = vmatpush1.bf16.msra.mxu0 %v420
  %560 = vmatprep.subr.bf16.mxu0 0
  %561 = vmatpush1.bf16.msra.mxu0 %v417
  %562 = vmatprep.subr.bf16.mxu0 0
  %563 = vmatpush1.bf16.msra.mxu0 %v414
  %564 = vmatprep.subr.bf16.mxu0 0
  %565 = vmatpush1.bf16.msra.mxu0 %v411
  %566 = vmatprep.subr.bf16.mxu0 0
  %567 = vmatpush1.bf16.msra.mxu0 %v408
  %568 = vmatprep.subr.bf16.mxu0 0
  %569 = vmatpush1.bf16.msra.mxu0 %v405
  %570 = vmatprep.subr.bf16.mxu0 0
  %571 = vmatpush1.bf16.msra.mxu0 %v402
  %572 = vmatprep.subr.bf16.mxu0 0
  %573 = vmatpush1.bf16.msra.mxu0 %v399
  %574 = vmatprep.subr.bf16.mxu0 0
  %575 = vmatpush2.bf16.msra.mxu0 0
  %576 = vmatprep.subr.bf16.mxu0 0
  %577 = vmatpush2.bf16.msra.mxu0 0
  %578 = vmatprep.subr.bf16.mxu0 0
  %579 = vmatpush2.bf16.msra.mxu0 0
  %580 = vmatprep.subr.bf16.mxu0 0
  %581 = vmatpush2.bf16.msra.mxu0 0
  %582 = vmatprep.subr.bf16.mxu0 0
  %583 = vmatpush2.bf16.msra.mxu0 0
  %584 = vmatprep.subr.bf16.mxu0 0
  %585 = vmatpush2.bf16.msra.mxu0 0
  %586 = vmatprep.subr.bf16.mxu0 0
  %587 = vmatpush2.bf16.msra.mxu0 0
  %588 = vmatprep.subr.bf16.mxu0 0
  %589 = vmatpush2.bf16.msra.mxu0 0
  %590 = vmatprep.mubr.bf16.mxu0 0
  %591 = vmatmul.mubr.bf16.gmra.mxu0 %v260
  %v592 = vpop.f32.mrf.mxu0
  %v593 = vadd.f32 %v313, %v592
  %v594 = vpop.f32.mrf.mxu0
  %v595 = vpop.f32.mrf.mxu0
  %v596 = vadd.f32 %v313, %v595
  %v597 = vpop.f32.mrf.mxu0
  %598 = vmatprep.mubr.bf16.mxu0 0
  %599 = vmatmul.mubr.bf16.gmra.mxu0 %v261
  %v600 = vpop.f32.mrf.mxu0
  %v601 = vadd.f32 %v313, %v600
  %v602 = vpop.f32.mrf.mxu0
  %v603 = vpop.f32.mrf.mxu0
  %v604 = vadd.f32 %v313, %v603
  %v605 = vpop.f32.mrf.mxu0
  %606 = vmatprep.mubr.bf16.mxu0 0
  %607 = vmatmul.mubr.bf16.gmra.mxu0 %v262
  %v608 = vpop.f32.mrf.mxu0
  %v609 = vadd.f32 %v313, %v608
  %v610 = vpop.f32.mrf.mxu0
  %v611 = vpop.f32.mrf.mxu0
  %v612 = vadd.f32 %v313, %v611
  %v613 = vpop.f32.mrf.mxu0
  %614 = vmatprep.mubr.bf16.mxu0 0
  %615 = vmatmul.mubr.bf16.gmra.mxu0 %v263
  %v616 = vpop.f32.mrf.mxu0
  %v617 = vadd.f32 %v313, %v616
  %v618 = vpop.f32.mrf.mxu0
  %v619 = vpop.f32.mrf.mxu0
  %v620 = vadd.f32 %v313, %v619
  %v621 = vpop.f32.mrf.mxu0
  %622 = vmatprep.mubr.bf16.mxu0 0
  %623 = vmatmul.mubr.bf16.gmra.mxu0 %v264
  %v624 = vpop.f32.mrf.mxu0
  %v625 = vadd.f32 %v313, %v624
  %v626 = vpop.f32.mrf.mxu0
  %v627 = vpop.f32.mrf.mxu0
  %v628 = vadd.f32 %v313, %v627
  %v629 = vpop.f32.mrf.mxu0
  %630 = vmatprep.mubr.bf16.mxu0 0
  %631 = vmatmul.mubr.bf16.gmra.mxu0 %v265
  %v632 = vpop.f32.mrf.mxu0
  %v633 = vadd.f32 %v313, %v632
  %v634 = vpop.f32.mrf.mxu0
  %v635 = vpop.f32.mrf.mxu0
  %v636 = vadd.f32 %v313, %v635
  %v637 = vpop.f32.mrf.mxu0
  %638 = vmatprep.mubr.bf16.mxu0 0
  %639 = vmatmul.mubr.bf16.gmra.mxu0 %v266
  %v640 = vpop.f32.mrf.mxu0
  %v641 = vadd.f32 %v313, %v640
  %v642 = vpop.f32.mrf.mxu0
  %v643 = vpop.f32.mrf.mxu0
  %v644 = vadd.f32 %v313, %v643
  %v645 = vpop.f32.mrf.mxu0
  %646 = vmatprep.mubr.bf16.mxu0 0
  %647 = vmatmul.mubr.bf16.gmra.mxu0 %v267
  %v648 = vpop.f32.mrf.mxu0
  %v649 = vadd.f32 %v313, %v648
  %v650 = vpop.f32.mrf.mxu0
  %v651 = vpop.f32.mrf.mxu0
  %v652 = vadd.f32 %v313, %v651
  %v653 = vpop.f32.mrf.mxu0
  %654 = vdwg.mxu0
  %v655 = vpack.c.bf16 %v484, %v480
  %v656 = vpack.c.bf16 %v486, %v482
  %v657 = vpack.c.bf16 %v596, %v593
  %v658 = vpack.c.bf16 %v494, %v490
  %v659 = vpack.c.bf16 %v496, %v492
  %v660 = vpack.c.bf16 %v604, %v601
  %v661 = vpack.c.bf16 %v504, %v500
  %v662 = vpack.c.bf16 %v506, %v502
  %v663 = vpack.c.bf16 %v612, %v609
  %v664 = vpack.c.bf16 %v514, %v510
  %v665 = vpack.c.bf16 %v516, %v512
  %v666 = vpack.c.bf16 %v620, %v617
  %v667 = vpack.c.bf16 %v524, %v520
  %v668 = vpack.c.bf16 %v526, %v522
  %v669 = vpack.c.bf16 %v628, %v625
  %v670 = vpack.c.bf16 %v534, %v530
  %v671 = vpack.c.bf16 %v536, %v532
  %v672 = vpack.c.bf16 %v636, %v633
  %v673 = vpack.c.bf16 %v544, %v540
  %v674 = vpack.c.bf16 %v546, %v542
  %v675 = vpack.c.bf16 %v644, %v641
  %v676 = vpack.c.bf16 %v554, %v550
  %v677 = vpack.c.bf16 %v556, %v552
  %v678 = vpack.c.bf16 %v652, %v649
  %v703 = vunpack.c.l.b16 %v655
  %v704 = vunpack.c.l.b16 %v656
  %v705 = vunpack.c.l.b16 %v657
  %v706 = vunpack.c.h.b16 %v655
  %v707 = vunpack.c.h.b16 %v656
  %v708 = vunpack.c.h.b16 %v657
  %v709 = vunpack.c.l.b16 %v658
  %v710 = vunpack.c.l.b16 %v659
  %v711 = vunpack.c.l.b16 %v660
  %v712 = vunpack.c.h.b16 %v658
  %v713 = vunpack.c.h.b16 %v659
  %v714 = vunpack.c.h.b16 %v660
  %v715 = vunpack.c.l.b16 %v661
  %v716 = vunpack.c.l.b16 %v662
  %v717 = vunpack.c.l.b16 %v663
  %v718 = vunpack.c.h.b16 %v661
  %v719 = vunpack.c.h.b16 %v662
  %v720 = vunpack.c.h.b16 %v663
  %v721 = vunpack.c.l.b16 %v664
  %v722 = vunpack.c.l.b16 %v665
  %v723 = vunpack.c.l.b16 %v666
  %v724 = vunpack.c.h.b16 %v664
  %v725 = vunpack.c.h.b16 %v665
  %v726 = vunpack.c.h.b16 %v666
  %v727 = vunpack.c.l.b16 %v667
  %v728 = vunpack.c.l.b16 %v668
  %v729 = vunpack.c.l.b16 %v669
  %v730 = vunpack.c.h.b16 %v667
  %v731 = vunpack.c.h.b16 %v668
  %v732 = vunpack.c.h.b16 %v669
  %v733 = vunpack.c.l.b16 %v670
  %v734 = vunpack.c.l.b16 %v671
  %v735 = vunpack.c.l.b16 %v672
  %v736 = vunpack.c.h.b16 %v670
  %v737 = vunpack.c.h.b16 %v671
  %v738 = vunpack.c.h.b16 %v672
  %v739 = vunpack.c.l.b16 %v673
  %v740 = vunpack.c.l.b16 %v674
  %v741 = vunpack.c.l.b16 %v675
  %v742 = vunpack.c.h.b16 %v673
  %v743 = vunpack.c.h.b16 %v674
  %v744 = vunpack.c.h.b16 %v675
  %v745 = vunpack.c.l.b16 %v676
  %v746 = vunpack.c.l.b16 %v677
  %v747 = vunpack.c.l.b16 %v678
  %v748 = vunpack.c.h.b16 %v676
  %v749 = vunpack.c.h.b16 %v677
  %v750 = vunpack.c.h.b16 %v678
  %v751 = vpack.c.b16 %v704, %v703
  %v752 = vpack.c.b16 %v705, %v705
  %v753 = vpack.c.b16 %v707, %v706
  %v754 = vpack.c.b16 %v708, %v708
  %v755 = vpack.c.b16 %v710, %v709
  %v756 = vpack.c.b16 %v711, %v711
  %v757 = vpack.c.b16 %v713, %v712
  %v758 = vpack.c.b16 %v714, %v714
  %v759 = vpack.c.b16 %v716, %v715
  %v760 = vpack.c.b16 %v717, %v717
  %v761 = vpack.c.b16 %v719, %v718
  %v762 = vpack.c.b16 %v720, %v720
  %v763 = vpack.c.b16 %v722, %v721
  %v764 = vpack.c.b16 %v723, %v723
  %v765 = vpack.c.b16 %v725, %v724
  %v766 = vpack.c.b16 %v726, %v726
  %v767 = vpack.c.b16 %v728, %v727
  %v768 = vpack.c.b16 %v729, %v729
  %v769 = vpack.c.b16 %v731, %v730
  %v770 = vpack.c.b16 %v732, %v732
  %v771 = vpack.c.b16 %v734, %v733
  %v772 = vpack.c.b16 %v735, %v735
  %v773 = vpack.c.b16 %v737, %v736
  %v774 = vpack.c.b16 %v738, %v738
  %v775 = vpack.c.b16 %v740, %v739
  %v776 = vpack.c.b16 %v741, %v741
  %v777 = vpack.c.b16 %v743, %v742
  %v778 = vpack.c.b16 %v744, %v744
  %v779 = vpack.c.b16 %v746, %v745
  %v780 = vpack.c.b16 %v747, %v747
  %v781 = vpack.c.b16 %v749, %v748
  %v782 = vpack.c.b16 %v750, %v750
  %815 = vst [vmem:[%s5] sm:$0xff] %v751
  %816 = vst [vmem:[%s5 + $0x8] sm:$0xf] %v752
  %817 = vst [vmem:[%s5 + $0xc] sm:$0xff] %v753
  %818 = vst [vmem:[%s5 + $0x14] sm:$0xf] %v754
  %819 = vst [vmem:[%s5 + $0x18] sm:$0xff] %v755
  %820 = vst [vmem:[%s5 + $0x20] sm:$0xf] %v756
  %821 = vst [vmem:[%s5 + $0x24] sm:$0xff] %v757
  %822 = vst [vmem:[%s5 + $0x2c] sm:$0xf] %v758
  %823 = vst [vmem:[%s5 + $0x30] sm:$0xff] %v759
  %824 = vst [vmem:[%s5 + $0x38] sm:$0xf] %v760
  %825 = vst [vmem:[%s5 + $0x3c] sm:$0xff] %v761
  %826 = vst [vmem:[%s5 + $0x44] sm:$0xf] %v762
  %827 = vst [vmem:[%s5 + $0x48] sm:$0xff] %v763
  %828 = vst [vmem:[%s5 + $0x50] sm:$0xf] %v764
  %829 = vst [vmem:[%s5 + $0x54] sm:$0xff] %v765
  %830 = vst [vmem:[%s5 + $0x5c] sm:$0xf] %v766
  %831 = vst [vmem:[%s5 + $0x60] sm:$0xff] %v767
  %832 = vst [vmem:[%s5 + $0x68] sm:$0xf] %v768
  %833 = vst [vmem:[%s5 + $0x6c] sm:$0xff] %v769
  %834 = vst [vmem:[%s5 + $0x74] sm:$0xf] %v770
  %835 = vst [vmem:[%s5 + $0x78] sm:$0xff] %v771
  %836 = vst [vmem:[%s5 + $0x80] sm:$0xf] %v772
  %837 = vst [vmem:[%s5 + $0x84] sm:$0xff] %v773
  %838 = vst [vmem:[%s5 + $0x8c] sm:$0xf] %v774
  %839 = vst [vmem:[%s5 + $0x90] sm:$0xff] %v775
  %840 = vst [vmem:[%s5 + $0x98] sm:$0xf] %v776
  %841 = vst [vmem:[%s5 + $0x9c] sm:$0xff] %v777
  %842 = vst [vmem:[%s5 + $0xa4] sm:$0xf] %v778
  %843 = vst [vmem:[%s5 + $0xa8] sm:$0xff] %v779
  %844 = vst [vmem:[%s5 + $0xb0] sm:$0xf] %v780
  %845 = vst [vmem:[%s5 + $0xb4] sm:$0xff] %v781
  %846 = vst [vmem:[%s5 + $0xbc] sm:$0xf] %v782
  // Predicated region
  $region22: #{sam2_pe_simple_lst_forward.10} parent=0 // pred_check
    _
  $region23: #{sam2_pe_simple_lst_forward.10} parent=0 // pred_check_branch
    %848 = sbr.rel (0) target = $region25
  $region24: #{sam2_pe_simple_lst_forward.10} parent=0 // pred_region
    _
  $region25: #{sam2_pe_simple_lst_forward.10} parent=0 // pred_fallthru
    _
  // Predicated region
  $region26: #{sam2_pe_simple_lst_forward.10} parent=0 // pred_check
    _
  $region27: #{sam2_pe_simple_lst_forward.10} parent=0 // pred_check_branch
    %850 = sbr.rel (0) target = $region29
  $region28: #{sam2_pe_simple_lst_forward.10} parent=0 // pred_region
    _
  $region29: #{sam2_pe_simple_lst_forward.10} parent=0 // pred_fallthru
    _

// kernel: sam2_pe_simple_lst_forward.11
$region0: #{sam2_pe_simple_lst_forward.11}
  #allocation0 [shape = 'u32[]', space=smem, size = 0x4, offset = 0x4, fixed_abs, tag = 'smem constant byte address 0x4 - core index']
  #allocation1 [shape = 'u32[144,128]{1,0:T(1,128)}', space=vmem, size = 0x12000, scoped, tag = 'internal scratch']
  %s0 = inlined_call_operand.vmem [shape: bf16[2,64,384], index: 0, kind: input, shape index: {}]
  %s1 = inlined_call_operand.vmem [shape: bf16[128,128], index: 1, kind: input, shape index: {}]
  %s2 = inlined_call_operand.vmem [shape: f32[1,128], index: 2, kind: input, shape index: {}]
  %s3 = inlined_call_operand.vmem [shape: f32[2,64,128], index: 3, kind: input, shape index: {}]
  %s4 = inlined_call_operand.vmem [shape: f32[2,64,128], index: 4, kind: output, shape index: {}]
  %s5 = sld [smem:[#allocation0]]
  $region49: #{sam2_pe_simple_lst_forward.11} parent=0
    _
  %s7 = ssub.s32 1, %s5
  %s8 = scalar_select 0, %s7, %s5
  loop: start=0, step=1, limit=4
  $region2: #{sam2_pe_simple_lst_forward.11} parent=0 // loop_pre_header
    _
  $region3: #{sam2_pe_simple_lst_forward.11} parent=0 // loop_header
    %s10 = sphi 0, %s14
    %p11 = scmp.ge.s32.totalorder %s10, 4
    %s20 = sphi 0, %s22
    %s23 = sphi 0, %s20
    %s24 = sphi 0, %s23
    %s40 = sphi 0, %s24
    %s44 = sphi 0, %s44
    %s46 = sphi 0, %s44
    %s47 = sphi 0, %s46
    %s61 = sphi 0, %s47
    %s65 = sphi 0, %s65
    %s67 = sphi 0, %s65
    %s68 = sphi 0, %s67
    %s82 = sphi 0, %s68
    %s88 = sphi 0, %s90
    %s91 = sphi 0, %s88
    %s92 = sphi 0, %s91
    %s108 = sphi 0, %s92
    %s114 = sphi 0, %s116
    %s117 = sphi 0, %s114
    %s118 = sphi 0, %s117
    %s134 = sphi 0, %s118
  $region4: #{sam2_pe_simple_lst_forward.11} parent=0 // loop_header_branch
    %13 = sbr.rel (%p11) target = $region8
  $region5: #{sam2_pe_simple_lst_forward.11} parent=0 // loop_body
    %s15 = ssub.s32 %s10, 1
    %s16 = ssub.s32 %s10, 2
    %s17 = sadd.s32 %s10, 1
    %s18 = ssub.s32 %s10, %s17
    %p19 = scmp.eq.s32.totalorder %s18, 0
    %s21 = sadd.s32 %s20, 1
    %s22 = scalar_select %p19, %s20, %s21
    %p25 = pneg %p19
    %p26 = scmp.eq.s32.totalorder %s10, 1
    %p27 = por %p25, %p26
    %p28 = scmp.ne.s32.totalorder %s20, %s23
    %p29 = scmp.eq.s32.totalorder %s10, 0
    %p30 = por %p28, %p29
    %p31 = scmp.ne.s32.totalorder %s20, %s23
    %p32 = scmp.eq.s32.totalorder %s15, 1
    %p33 = por %p31, %p32
    %p34 = scmp.ne.s32.totalorder %s23, %s24
    %p35 = scmp.eq.s32.totalorder %s15, 0
    %p36 = por %p34, %p35
    %p37 = scmp.ne.s32.totalorder %s23, %s24
    %p38 = scmp.eq.s32.totalorder %s16, 1
    %p39 = por %p37, %p38
    %p41 = scmp.ne.s32.totalorder %s24, %s40
    %p42 = scmp.eq.s32.totalorder %s16, 0
    %p43 = por %p41, %p42
    %s45 = sadd.s32 %s44, 1
    %p48 = scmp.eq.s32.totalorder %s10, 1
    %p49 = scmp.ne.s32.totalorder %s44, %s46
    %p50 = scmp.eq.s32.totalorder %s10, 0
    %p51 = por %p49, %p50
    %p52 = scmp.ne.s32.totalorder %s44, %s46
    %p53 = scmp.eq.s32.totalorder %s15, 1
    %p54 = por %p52, %p53
    %p55 = scmp.ne.s32.totalorder %s46, %s47
    %p56 = scmp.eq.s32.totalorder %s15, 0
    %p57 = por %p55, %p56
    %p58 = scmp.ne.s32.totalorder %s46, %s47
    %p59 = scmp.eq.s32.totalorder %s16, 1
    %p60 = por %p58, %p59
    %p62 = scmp.ne.s32.totalorder %s47, %s61
    %p63 = scmp.eq.s32.totalorder %s16, 0
    %p64 = por %p62, %p63
    %s66 = sadd.s32 %s65, 1
    %p69 = scmp.eq.s32.totalorder %s10, 1
    %p70 = scmp.ne.s32.totalorder %s65, %s67
    %p71 = scmp.eq.s32.totalorder %s10, 0
    %p72 = por %p70, %p71
    %p73 = scmp.ne.s32.totalorder %s65, %s67
    %p74 = scmp.eq.s32.totalorder %s15, 1
    %p75 = por %p73, %p74
    %p76 = scmp.ne.s32.totalorder %s67, %s68
    %p77 = scmp.eq.s32.totalorder %s15, 0
    %p78 = por %p76, %p77
    %p79 = scmp.ne.s32.totalorder %s67, %s68
    %p80 = scmp.eq.s32.totalorder %s16, 1
    %p81 = por %p79, %p80
    %p83 = scmp.ne.s32.totalorder %s68, %s82
    %p84 = scmp.eq.s32.totalorder %s16, 0
    %p85 = por %p83, %p84
    %s86 = ssub.s32 %s10, %s17
    %p87 = scmp.eq.s32.totalorder %s86, 0
    %s89 = sadd.s32 %s88, 1
    %s90 = scalar_select %p87, %s88, %s89
    %p93 = pneg %p87
    %p94 = scmp.eq.s32.totalorder %s10, 1
    %p95 = por %p93, %p94
    %p96 = scmp.ne.s32.totalorder %s88, %s91
    %p97 = scmp.eq.s32.totalorder %s10, 0
    %p98 = por %p96, %p97
    %p99 = scmp.ne.s32.totalorder %s88, %s91
    %p100 = scmp.eq.s32.totalorder %s15, 1
    %p101 = por %p99, %p100
    %p102 = scmp.ne.s32.totalorder %s91, %s92
    %p103 = scmp.eq.s32.totalorder %s15, 0
    %p104 = por %p102, %p103
    %p105 = scmp.ne.s32.totalorder %s91, %s92
    %p106 = scmp.eq.s32.totalorder %s16, 1
    %p107 = por %p105, %p106
    %p109 = scmp.ne.s32.totalorder %s92, %s108
    %p110 = scmp.eq.s32.totalorder %s16, 0
    %p111 = por %p109, %p110
    %s112 = ssub.s32 %s10, %s17
    %p113 = scmp.eq.s32.totalorder %s112, 0
    %s115 = sadd.s32 %s114, 1
    %s116 = scalar_select %p113, %s114, %s115
    %p119 = pneg %p113
    %p120 = scmp.eq.s32.totalorder %s10, 1
    %p121 = por %p119, %p120
    %p122 = scmp.ne.s32.totalorder %s114, %s117
    %p123 = scmp.eq.s32.totalorder %s10, 0
    %p124 = por %p122, %p123
    %p125 = scmp.ne.s32.totalorder %s114, %s117
    %p126 = scmp.eq.s32.totalorder %s15, 1
    %p127 = por %p125, %p126
    %p128 = scmp.ne.s32.totalorder %s117, %s118
    %p129 = scmp.eq.s32.totalorder %s15, 0
    %p130 = por %p128, %p129
    %p131 = scmp.ne.s32.totalorder %s117, %s118
    %p132 = scmp.eq.s32.totalorder %s16, 1
    %p133 = por %p131, %p132
    %p135 = scmp.ne.s32.totalorder %s118, %s134
    %p136 = scmp.eq.s32.totalorder %s16, 0
    %p137 = por %p135, %p136
    %p138 = scmp.le.s32.totalorder 1, %s10
    %p139 = scmp.lt.s32.totalorder %s10, 3
    %p140 = pnand %p138, %p139
    %p141 = pneg %p140
    // Predicated region
    $region9: #{sam2_pe_simple_lst_forward.11} parent=5 // pred_check
      _
    $region10: #{sam2_pe_simple_lst_forward.11} parent=5 // pred_check_branch
      %143 = sbr.rel (%p140) target = $region12
    $region11: #{sam2_pe_simple_lst_forward.11} parent=5 // pred_region
      %s144 = ssub.s32 %s10, 1
      // Predicated region
      $region13: #{sam2_pe_simple_lst_forward.11} parent=11 // pred_check
        %p145 = pneg %p57
      $region14: #{sam2_pe_simple_lst_forward.11} parent=11 // pred_check_branch
        %147 = sbr.rel (%p145) target = $region16
      $region15: #{sam2_pe_simple_lst_forward.11} parent=11 // pred_region
        _
      $region16: #{sam2_pe_simple_lst_forward.11} parent=11 // pred_fallthru
        _
      // Predicated region
      $region17: #{sam2_pe_simple_lst_forward.11} parent=11 // pred_check
        %p148 = pneg %p78
      $region18: #{sam2_pe_simple_lst_forward.11} parent=11 // pred_check_branch
        %150 = sbr.rel (%p148) target = $region20
      $region19: #{sam2_pe_simple_lst_forward.11} parent=11 // pred_region
        _
      $region20: #{sam2_pe_simple_lst_forward.11} parent=11 // pred_fallthru
        _
    $region12: #{sam2_pe_simple_lst_forward.11} parent=5 // pred_fallthru
      _
    %p151 = scmp.lt.s32.totalorder %s10, 2
    // Predicated region
    $region21: #{sam2_pe_simple_lst_forward.11} parent=5 // pred_check
      %p152 = pneg %p151
    $region22: #{sam2_pe_simple_lst_forward.11} parent=5 // pred_check_branch
      %154 = sbr.rel (%p152) target = $region24
    $region23: #{sam2_pe_simple_lst_forward.11} parent=5 // pred_region
      // Predicated region
      $region25: #{sam2_pe_simple_lst_forward.11} parent=23 // pred_check
        %p155 = pneg %p30
      $region26: #{sam2_pe_simple_lst_forward.11} parent=23 // pred_check_branch
        %157 = sbr.rel (%p155) target = $region28
      $region27: #{sam2_pe_simple_lst_forward.11} parent=23 // pred_region
        %p158 = scmp.lt.s32.totalorder %s10, 1
        %s159 = scalar_select %p158, %s10, 1
        %s160 = smul.addr %s159, 24
        %s161 = smul.addr %s160, 4
        %s162 = scalar_lea.vmem %s0, %s161
      $region28: #{sam2_pe_simple_lst_forward.11} parent=23 // pred_fallthru
        _
      // Predicated region
      $region29: #{sam2_pe_simple_lst_forward.11} parent=23 // pred_check
        %p163 = pneg %p98
      $region30: #{sam2_pe_simple_lst_forward.11} parent=23 // pred_check_branch
        %165 = sbr.rel (%p163) target = $region32
      $region31: #{sam2_pe_simple_lst_forward.11} parent=23 // pred_region
        %p166 = scmp.lt.s32.totalorder %s10, 1
        %s167 = scalar_select %p166, %s10, 1
        %s168 = smul.addr %s167, 8
        %s169 = smul.addr %s168, 8
        %s170 = scalar_lea.vmem %s3, %s169
      $region32: #{sam2_pe_simple_lst_forward.11} parent=23 // pred_fallthru
        _
    $region24: #{sam2_pe_simple_lst_forward.11} parent=5 // pred_fallthru
      _
    %p171 = scmp.le.s32.totalorder 1, %s10
    %p172 = scmp.lt.s32.totalorder %s10, 3
    %p173 = pnand %p171, %p172
    %p174 = pneg %p173
    // Predicated region
    $region33: #{sam2_pe_simple_lst_forward.11} parent=5 // pred_check
      _
    $region34: #{sam2_pe_simple_lst_forward.11} parent=5 // pred_check_branch
      %176 = sbr.rel (%p173) target = $region36
    $region35: #{sam2_pe_simple_lst_forward.11} parent=5 // pred_region
      %s177 = ssub.s32 %s10, 1
      %p178 = scmp.lt.s32.totalorder %s15, 1
      %s179 = scalar_select %p178, %s15, 1
      %s180 = smul.addr %s179, 24
      %s181 = smul.addr %s180, 4
      %s182 = scalar_lea.vmem %s0, %s181
      %p183 = pneg %p36
      %p184 = pneg %p33
      %p185 = pneg %p57
      %p186 = pneg %p54
      %p187 = pneg %p78
      %p188 = pneg %p75
      %p189 = scmp.lt.s32.totalorder %s15, 1
      %s190 = scalar_select %p189, %s15, 1
      %s191 = smul.addr %s190, 8
      %s192 = smul.addr %s191, 8
      %s193 = scalar_lea.vmem %s3, %s192
      %p194 = pneg %p104
      %p195 = pneg %p101
      %p196 = pneg %p130
      %p197 = pneg %p127
      %p198 = scmp.lt.s32.totalorder %s15, 1
      %s199 = scalar_select %p198, %s15, 1
      %s200 = smul.addr %s199, 8
      %s201 = smul.addr %s200, 8
      %s202 = scalar_lea.vmem %s4, %s201
      %p203 = scmp.lt.s32.totalorder %s15, 1
      %s204 = scalar_select %p203, %s15, 1
      %s205 = smul.addr %s204, 24
      %s206 = smul.addr %s205, 4
      %s207 = scalar_lea.vmem %s0, %s206
      %p208 = scmp.lt.s32.totalorder %s15, 1
      %s209 = scalar_select %p208, %s15, 1
      %s210 = smul.addr %s209, 8
      %s211 = smul.addr %s210, 8
      %s212 = scalar_lea.vmem %s3, %s211
      %p213 = scmp.lt.s32.totalorder %s15, 1
      %s214 = scalar_select %p213, %s15, 1
      %s215 = smul.addr %s214, 8
      %s216 = smul.addr %s215, 8
      %s217 = scalar_lea.vmem %s4, %s216
      %v219 = vld [vmem:[%s207] sm:$0xff]
      %v220 = vld [vmem:[%s207 + $0x8] sm:$0xf]
      %v221 = vld [vmem:[%s207 + $0xc] sm:$0xff]
      %v222 = vld [vmem:[%s207 + $0x14] sm:$0xf]
      %v223 = vld [vmem:[%s207 + $0x18] sm:$0xff]
      %v224 = vld [vmem:[%s207 + $0x20] sm:$0xf]
      %v225 = vld [vmem:[%s207 + $0x24] sm:$0xff]
      %v226 = vld [vmem:[%s207 + $0x2c] sm:$0xf]
      %v227 = vld [vmem:[%s207 + $0x30] sm:$0xff]
      %v228 = vld [vmem:[%s207 + $0x38] sm:$0xf]
      %v229 = vld [vmem:[%s207 + $0x3c] sm:$0xff]
      %v230 = vld [vmem:[%s207 + $0x44] sm:$0xf]
      %v231 = vld [vmem:[%s207 + $0x48] sm:$0xff]
      %v232 = vld [vmem:[%s207 + $0x50] sm:$0xf]
      %v233 = vld [vmem:[%s207 + $0x54] sm:$0xff]
      %v234 = vld [vmem:[%s207 + $0x5c] sm:$0xf]
      %v235 = vld [vmem:[%s2] sm:$0x1]
      %v236 = vld [vmem:[%s212] sm:$0xff]
      %v237 = vld [vmem:[%s212 + $0x8] sm:$0xff]
      %v238 = vld [vmem:[%s212 + $0x10] sm:$0xff]
      %v239 = vld [vmem:[%s212 + $0x18] sm:$0xff]
      %v240 = vld [vmem:[%s212 + $0x20] sm:$0xff]
      %v241 = vld [vmem:[%s212 + $0x28] sm:$0xff]
      %v242 = vld [vmem:[%s212 + $0x30] sm:$0xff]
      %v243 = vld [vmem:[%s212 + $0x38] sm:$0xff]
      %v245 = vlaneseq
      %v246 = vshrl.u32 %v245, 7
      %v247 = vsub.s32 0, %v246
      %v248 = vrot.slane %v235, %v247
      %v250 = vadd.f32 %v248, %v236
      %v251 = vadd.f32 %v248, %v237
      %v252 = vadd.f32 %v248, %v238
      %v253 = vadd.f32 %v248, %v239
      %v254 = vadd.f32 %v248, %v240
      %v255 = vadd.f32 %v248, %v241
      %v256 = vadd.f32 %v248, %v242
      %v257 = vadd.f32 %v248, %v243
      %v266 = vunpack.c.l.b16 %v219
      %v267 = vunpack.c.l.b16 %v221
      %v268 = vunpack.c.l.b16 %v223
      %v269 = vunpack.c.l.b16 %v225
      %v270 = vunpack.c.l.b16 %v227
      %v271 = vunpack.c.l.b16 %v229
      %v272 = vunpack.c.l.b16 %v231
      %v273 = vunpack.c.l.b16 %v233
      %v274 = vpack.c.b16 %v267, %v266
      %v275 = vpack.c.b16 %v269, %v268
      %v276 = vpack.c.b16 %v271, %v270
      %v277 = vpack.c.b16 %v273, %v272
      %v278 = vunpack.c.h.b16 %v219
      %v279 = vunpack.c.h.b16 %v221
      %v280 = vunpack.c.h.b16 %v223
      %v281 = vunpack.c.h.b16 %v225
      %v282 = vunpack.c.h.b16 %v227
      %v283 = vunpack.c.h.b16 %v229
      %v284 = vunpack.c.h.b16 %v231
      %v285 = vunpack.c.h.b16 %v233
      %v286 = vpack.c.b16 %v279, %v278
      %v287 = vpack.c.b16 %v281, %v280
      %v288 = vpack.c.b16 %v283, %v282
      %v289 = vpack.c.b16 %v285, %v284
      %vm290 = vcmask 261120
      %v292 = vsel %vm290, %v274, 0
      %v295 = vsel %vm290, %v275, 0
      %v298 = vsel %vm290, %v276, 0
      %v301 = vsel %vm290, %v277, 0
      %v304 = vsel %vm290, %v286, 0
      %v307 = vsel %vm290, %v287, 0
      %v310 = vsel %vm290, %v288, 0
      %v313 = vsel %vm290, %v289, 0
      %315 = vmatprep.subr.bf16.mxu0 0
      %316 = vmatpush1.bf16.xpose.msra.mxu0 0
      %317 = vmatprep.subr.bf16.mxu0 0
      %318 = vmatpush1.bf16.xpose.msra.mxu0 0
      %319 = vmatprep.subr.bf16.mxu0 0
      %320 = vmatpush1.bf16.xpose.msra.mxu0 0
      %321 = vmatprep.subr.bf16.mxu0 0
      %322 = vmatpush1.bf16.xpose.msra.mxu0 0
      %323 = vmatprep.subr.bf16.mxu0 0
      %324 = vmatpush1.bf16.xpose.msra.mxu0 %v313
      %325 = vmatprep.subr.bf16.mxu0 0
      %326 = vmatpush1.bf16.xpose.msra.mxu0 %v310
      %327 = vmatprep.subr.bf16.mxu0 0
      %328 = vmatpush1.bf16.xpose.msra.mxu0 %v307
      %329 = vmatprep.subr.bf16.mxu0 0
      %330 = vmatpush1.bf16.xpose.msra.mxu0 %v304
      %331 = vmatprep.subr.bf16.mxu0 0
      %332 = vmatpush2.bf16.xpose.msra.mxu0 0
      %333 = vmatprep.subr.bf16.mxu0 0
      %334 = vmatpush2.bf16.xpose.msra.mxu0 0
      %335 = vmatprep.subr.bf16.mxu0 0
      %336 = vmatpush2.bf16.xpose.msra.mxu0 0
      %337 = vmatprep.subr.bf16.mxu0 0
      %338 = vmatpush2.bf16.xpose.msra.mxu0 0
      %339 = vmatprep.subr.bf16.mxu0 0
      %340 = vmatpush2.bf16.xpose.msra.mxu0 0
      %341 = vmatprep.subr.bf16.mxu0 0
      %342 = vmatpush2.bf16.xpose.msra.mxu0 0
      %343 = vmatprep.subr.bf16.mxu0 0
      %344 = vmatpush2.bf16.xpose.msra.mxu0 0
      %345 = vmatprep.subr.bf16.mxu0 0
      %346 = vmatpush2.bf16.xpose.msra.mxu0 0
      %347 = vmatprep.mubr.bf16.mxu0 0
      %348 = vmatmul.mubr.bf16.gmra.mxu0 %v292
      %v349 = vpop.f32.mrf.mxu0
      %v350 = vadd.f32 0.0, %v349
      %v351 = vpop.f32.mrf.mxu0
      %v352 = vpop.f32.mrf.mxu0
      %v353 = vadd.f32 0.0, %v352
      %v354 = vpop.f32.mrf.mxu0
      %355 = vmatprep.mubr.bf16.mxu0 0
      %356 = vmatmul.mubr.bf16.gmra.mxu0 %v295
      %v357 = vpop.f32.mrf.mxu0
      %v358 = vadd.f32 0.0, %v357
      %v359 = vpop.f32.mrf.mxu0
      %v360 = vpop.f32.mrf.mxu0
      %v361 = vadd.f32 0.0, %v360
      %v362 = vpop.f32.mrf.mxu0
      %363 = vmatprep.mubr.bf16.mxu0 0
      %364 = vmatmul.mubr.bf16.gmra.mxu0 %v298
      %v365 = vpop.f32.mrf.mxu0
      %v366 = vadd.f32 0.0, %v365
      %v367 = vpop.f32.mrf.mxu0
      %v368 = vpop.f32.mrf.mxu0
      %v369 = vadd.f32 0.0, %v368
      %v370 = vpop.f32.mrf.mxu0
      %371 = vmatprep.mubr.bf16.mxu0 0
      %372 = vmatmul.mubr.bf16.gmra.mxu0 %v301
      %v373 = vpop.f32.mrf.mxu0
      %v374 = vadd.f32 0.0, %v373
      %v375 = vpop.f32.mrf.mxu0
      %v376 = vpop.f32.mrf.mxu0
      %v377 = vadd.f32 0.0, %v376
      %v378 = vpop.f32.mrf.mxu0
      %379 = vdwg.mxu0
      %v380 = vmul.f32 %v350, 0.17677669
      %v381 = vmul.f32 %v353, 0.17677669
      %v382 = vmul.f32 %v358, 0.17677669
      %v383 = vmul.f32 %v361, 0.17677669
      %v384 = vmul.f32 %v366, 0.17677669
      %v385 = vmul.f32 %v369, 0.17677669
      %v386 = vmul.f32 %v374, 0.17677669
      %v387 = vmul.f32 %v377, 0.17677669
      %vm388 = vcmask 523264
      %v389 = vsel %vm388, %v380, -inf
      %390 = vmax.xlane.f32.xlu0 %v389
      %v391 = vpop.xlane.xlu0 %390
      %v392 = vsel %vm388, %v381, -inf
      %393 = vmax.xlane.f32.xlu0 %v392
      %v394 = vpop.xlane.xlu0 %393
      %v395 = vsel %vm388, %v382, -inf
      %396 = vmax.xlane.f32.xlu0 %v395
      %v397 = vpop.xlane.xlu0 %396
      %v398 = vsel %vm388, %v383, -inf
      %399 = vmax.xlane.f32.xlu0 %v398
      %v400 = vpop.xlane.xlu0 %399
      %v401 = vsel %vm388, %v384, -inf
      %402 = vmax.xlane.f32.xlu0 %v401
      %v403 = vpop.xlane.xlu0 %402
      %v404 = vsel %vm388, %v385, -inf
      %405 = vmax.xlane.f32.xlu0 %v404
      %v406 = vpop.xlane.xlu0 %405
      %v407 = vsel %vm388, %v386, -inf
      %408 = vmax.xlane.f32.xlu0 %v407
      %v409 = vpop.xlane.xlu0 %408
      %v410 = vsel %vm388, %v387, -inf
      %411 = vmax.xlane.f32.xlu0 %v410
      %v412 = vpop.xlane.xlu0 %411
      %v413 = vsub.f32 %v380, %v391
      %v414 = vsub.f32 %v381, %v394
      %v415 = vsub.f32 %v382, %v397
      %v416 = vsub.f32 %v383, %v400
      %v417 = vsub.f32 %v384, %v403
      %v418 = vsub.f32 %v385, %v406
      %v419 = vsub.f32 %v386, %v409
      %v420 = vsub.f32 %v387, %v412
      %v421 = vmul.f32 %v413, 1.442695
      %v422 = vpow.pop %v421
      %v423 = vmul.f32 %v414, 1.442695
      %v424 = vpow.pop %v423
      %v425 = vmul.f32 %v415, 1.442695
      %v426 = vpow.pop %v425
      %v427 = vmul.f32 %v416, 1.442695
      %v428 = vpow.pop %v427
      %v429 = vmul.f32 %v417, 1.442695
      %v430 = vpow.pop %v429
      %v431 = vmul.f32 %v418, 1.442695
      %v432 = vpow.pop %v431
      %v433 = vmul.f32 %v419, 1.442695
      %v434 = vpow.pop %v433
      %v435 = vmul.f32 %v420, 1.442695
      %v436 = vpow.pop %v435
      %v437 = vsel %vm388, %v422, 0.0
      %438 = vadd.xlane.f32.xlu0 %v437
      %v439 = vpop.xlane.xlu0 %438
      %v440 = vsel %vm388, %v424, 0.0
      %441 = vadd.xlane.f32.xlu0 %v440
      %v442 = vpop.xlane.xlu0 %441
      %v443 = vsel %vm388, %v426, 0.0
      %444 = vadd.xlane.f32.xlu0 %v443
      %v445 = vpop.xlane.xlu0 %444
      %v446 = vsel %vm388, %v428, 0.0
      %447 = vadd.xlane.f32.xlu0 %v446
      %v448 = vpop.xlane.xlu0 %447
      %v449 = vsel %vm388, %v430, 0.0
      %450 = vadd.xlane.f32.xlu0 %v449
      %v451 = vpop.xlane.xlu0 %450
      %v452 = vsel %vm388, %v432, 0.0
      %453 = vadd.xlane.f32.xlu0 %v452
      %v454 = vpop.xlane.xlu0 %453
      %v455 = vsel %vm388, %v434, 0.0
      %456 = vadd.xlane.f32.xlu0 %v455
      %v457 = vpop.xlane.xlu0 %456
      %v458 = vsel %vm388, %v436, 0.0
      %459 = vadd.xlane.f32.xlu0 %v458
      %v460 = vpop.xlane.xlu0 %459
      %v461 = vpack.c.bf16 %v424, %v422
      %v462 = vpack.c.bf16 %v428, %v426
      %v463 = vpack.c.bf16 %v432, %v430
      %v464 = vpack.c.bf16 %v436, %v434
      %v473 = vunpack.c.l.b16 %v220
      %v474 = vunpack.c.l.b16 %v222
      %v475 = vunpack.c.l.b16 %v224
      %v476 = vunpack.c.l.b16 %v226
      %v477 = vunpack.c.l.b16 %v228
      %v478 = vunpack.c.l.b16 %v230
      %v479 = vunpack.c.l.b16 %v232
      %v480 = vunpack.c.l.b16 %v234
      %v481 = vpack.c.b16 %v474, %v473
      %v482 = vpack.c.b16 %v476, %v475
      %v483 = vpack.c.b16 %v478, %v477
      %v484 = vpack.c.b16 %v480, %v479
      %v490 = vsel %vm388, %v461, 0
      %v493 = vsel %vm388, %v462, 0
      %v496 = vsel %vm388, %v463, 0
      %v499 = vsel %vm388, %v464, 0
      %501 = vmatprep.subr.bf16.mxu0 0
      %502 = vmatpush1.bf16.msra.mxu0 0
      %503 = vmatprep.subr.bf16.mxu0 0
      %504 = vmatpush1.bf16.msra.mxu0 0
      %505 = vmatprep.subr.bf16.mxu0 0
      %506 = vmatpush1.bf16.msra.mxu0 0
      %507 = vmatprep.subr.bf16.mxu0 0
      %508 = vmatpush1.bf16.msra.mxu0 0
      %509 = vmatprep.subr.bf16.mxu0 0
      %510 = vmatpush1.bf16.msra.mxu0 %v484
      %511 = vmatprep.subr.bf16.mxu0 0
      %512 = vmatpush1.bf16.msra.mxu0 %v483
      %513 = vmatprep.subr.bf16.mxu0 0
      %514 = vmatpush1.bf16.msra.mxu0 %v482
      %515 = vmatprep.subr.bf16.mxu0 0
      %516 = vmatpush1.bf16.msra.mxu0 %v481
      %517 = vmatprep.subr.bf16.mxu0 0
      %518 = vmatpush2.bf16.msra.mxu0 0
      %519 = vmatprep.subr.bf16.mxu0 0
      %520 = vmatpush2.bf16.msra.mxu0 0
      %521 = vmatprep.subr.bf16.mxu0 0
      %522 = vmatpush2.bf16.msra.mxu0 0
      %523 = vmatprep.subr.bf16.mxu0 0
      %524 = vmatpush2.bf16.msra.mxu0 0
      %525 = vmatprep.subr.bf16.mxu0 0
      %526 = vmatpush2.bf16.msra.mxu0 0
      %527 = vmatprep.subr.bf16.mxu0 0
      %528 = vmatpush2.bf16.msra.mxu0 0
      %529 = vmatprep.subr.bf16.mxu0 0
      %530 = vmatpush2.bf16.msra.mxu0 0
      %531 = vmatprep.subr.bf16.mxu0 0
      %532 = vmatpush2.bf16.msra.mxu0 0
      %533 = vmatprep.mubr.bf16.mxu0 0
      %534 = vmatmul.mubr.bf16.gmra.mxu0 %v490
      %v535 = vpop.f32.mrf.mxu0
      %v536 = vadd.f32 0.0, %v535
      %v537 = vpop.f32.mrf.mxu0
      %v538 = vpop.f32.mrf.mxu0
      %v539 = vadd.f32 0.0, %v538
      %v540 = vpop.f32.mrf.mxu0
      %541 = vmatprep.mubr.bf16.mxu0 0
      %542 = vmatmul.mubr.bf16.gmra.mxu0 %v493
      %v543 = vpop.f32.mrf.mxu0
      %v544 = vadd.f32 0.0, %v543
      %v545 = vpop.f32.mrf.mxu0
      %v546 = vpop.f32.mrf.mxu0
      %v547 = vadd.f32 0.0, %v546
      %v548 = vpop.f32.mrf.mxu0
      %549 = vmatprep.mubr.bf16.mxu0 0
      %550 = vmatmul.mubr.bf16.gmra.mxu0 %v496
      %v551 = vpop.f32.mrf.mxu0
      %v552 = vadd.f32 0.0, %v551
      %v553 = vpop.f32.mrf.mxu0
      %v554 = vpop.f32.mrf.mxu0
      %v555 = vadd.f32 0.0, %v554
      %v556 = vpop.f32.mrf.mxu0
      %557 = vmatprep.mubr.bf16.mxu0 0
      %558 = vmatmul.mubr.bf16.gmra.mxu0 %v499
      %v559 = vpop.f32.mrf.mxu0
      %v560 = vadd.f32 0.0, %v559
      %v561 = vpop.f32.mrf.mxu0
      %v562 = vpop.f32.mrf.mxu0
      %v563 = vadd.f32 0.0, %v562
      %v564 = vpop.f32.mrf.mxu0
      %565 = vdwg.mxu0
      %v566 = vrcp.pop %v439
      %v567 = vrcp.pop %v442
      %v568 = vrcp.pop %v445
      %v569 = vrcp.pop %v448
      %v570 = vrcp.pop %v451
      %v571 = vrcp.pop %v454
      %v572 = vrcp.pop %v457
      %v573 = vrcp.pop %v460
      %v574 = vmul.f32 %v536, %v566
      %v575 = vmul.f32 %v539, %v567
      %v576 = vmul.f32 %v544, %v568
      %v577 = vmul.f32 %v547, %v569
      %v578 = vmul.f32 %v552, %v570
      %v579 = vmul.f32 %v555, %v571
      %v580 = vmul.f32 %v560, %v572
      %v581 = vmul.f32 %v563, %v573
      %v582 = vld [vmem:[%s1] sm:$0xf]
      %v583 = vld [vmem:[%s1 + $0x4] sm:$0xf]
      %v584 = vld [vmem:[%s1 + $0x8] sm:$0xf]
      %v585 = vld [vmem:[%s1 + $0xc] sm:$0xf]
      %v586 = vpack.c.bf16 %v575, %v574
      %v587 = vpack.c.bf16 %v577, %v576
      %v588 = vpack.c.bf16 %v579, %v578
      %v589 = vpack.c.bf16 %v581, %v580
      %v594 = vunpack.c.l.b16 %v582
      %v595 = vunpack.c.l.b16 %v583
      %v596 = vunpack.c.l.b16 %v584
      %v597 = vunpack.c.l.b16 %v585
      %v598 = vpack.c.b16 %v595, %v594
      %v599 = vpack.c.b16 %v597, %v596
      %v603 = vsel %vm290, %v586, 0
      %v606 = vsel %vm290, %v587, 0
      %v609 = vsel %vm290, %v588, 0
      %v612 = vsel %vm290, %v589, 0
      %614 = vmatprep.subr.bf16.mxu0 0
      %615 = vmatpush1.bf16.msra.mxu0 0
      %616 = vmatprep.subr.bf16.mxu0 0
      %617 = vmatpush1.bf16.msra.mxu0 0
      %618 = vmatprep.subr.bf16.mxu0 0
      %619 = vmatpush1.bf16.msra.mxu0 0
      %620 = vmatprep.subr.bf16.mxu0 0
      %621 = vmatpush1.bf16.msra.mxu0 0
      %622 = vmatprep.subr.bf16.mxu0 0
      %623 = vmatpush1.bf16.msra.mxu0 0
      %624 = vmatprep.subr.bf16.mxu0 0
      %625 = vmatpush1.bf16.msra.mxu0 0
      %626 = vmatprep.subr.bf16.mxu0 0
      %627 = vmatpush1.bf16.msra.mxu0 %v599
      %628 = vmatprep.subr.bf16.mxu0 0
      %629 = vmatpush1.bf16.msra.mxu0 %v598
      %630 = vmatprep.subr.bf16.mxu0 0
      %631 = vmatpush2.bf16.msra.mxu0 0
      %632 = vmatprep.subr.bf16.mxu0 0
      %633 = vmatpush2.bf16.msra.mxu0 0
      %634 = vmatprep.subr.bf16.mxu0 0
      %635 = vmatpush2.bf16.msra.mxu0 0
      %636 = vmatprep.subr.bf16.mxu0 0
      %637 = vmatpush2.bf16.msra.mxu0 0
      %638 = vmatprep.subr.bf16.mxu0 0
      %639 = vmatpush2.bf16.msra.mxu0 0
      %640 = vmatprep.subr.bf16.mxu0 0
      %641 = vmatpush2.bf16.msra.mxu0 0
      %642 = vmatprep.subr.bf16.mxu0 0
      %643 = vmatpush2.bf16.msra.mxu0 0
      %644 = vmatprep.subr.bf16.mxu0 0
      %645 = vmatpush2.bf16.msra.mxu0 0
      %646 = vmatprep.mubr.bf16.mxu0 0
      %647 = vmatmul.mubr.bf16.gmra.mxu0 %v603
      %v648 = vpop.f32.mrf.mxu0
      %v649 = vadd.f32 0.0, %v648
      %v650 = vpop.f32.mrf.mxu0
      %v651 = vpop.f32.mrf.mxu0
      %v652 = vadd.f32 0.0, %v651
      %v653 = vpop.f32.mrf.mxu0
      %654 = vmatprep.mubr.bf16.mxu0 0
      %655 = vmatmul.mubr.bf16.gmra.mxu0 %v606
      %v656 = vpop.f32.mrf.mxu0
      %v657 = vadd.f32 0.0, %v656
      %v658 = vpop.f32.mrf.mxu0
      %v659 = vpop.f32.mrf.mxu0
      %v660 = vadd.f32 0.0, %v659
      %v661 = vpop.f32.mrf.mxu0
      %662 = vmatprep.mubr.bf16.mxu0 0
      %663 = vmatmul.mubr.bf16.gmra.mxu0 %v609
      %v664 = vpop.f32.mrf.mxu0
      %v665 = vadd.f32 0.0, %v664
      %v666 = vpop.f32.mrf.mxu0
      %v667 = vpop.f32.mrf.mxu0
      %v668 = vadd.f32 0.0, %v667
      %v669 = vpop.f32.mrf.mxu0
      %670 = vmatprep.mubr.bf16.mxu0 0
      %671 = vmatmul.mubr.bf16.gmra.mxu0 %v612
      %v672 = vpop.f32.mrf.mxu0
      %v673 = vadd.f32 0.0, %v672
      %v674 = vpop.f32.mrf.mxu0
      %v675 = vpop.f32.mrf.mxu0
      %v676 = vadd.f32 0.0, %v675
      %v677 = vpop.f32.mrf.mxu0
      %678 = vdwg.mxu0
      %v679 = vadd.f32 %v250, %v649
      %v680 = vadd.f32 %v251, %v652
      %v681 = vadd.f32 %v252, %v657
      %v682 = vadd.f32 %v253, %v660
      %v683 = vadd.f32 %v254, %v665
      %v684 = vadd.f32 %v255, %v668
      %v685 = vadd.f32 %v256, %v673
      %v686 = vadd.f32 %v257, %v676
      %687 = vrot.lane.b32.xlu0 %v274, 96
      %v688 = vpop.permute.xlu0 %687
      %689 = vrot.lane.b32.xlu0 %v275, 96
      %v690 = vpop.permute.xlu0 %689
      %691 = vrot.lane.b32.xlu0 %v276, 96
      %v692 = vpop.permute.xlu0 %691
      %693 = vrot.lane.b32.xlu0 %v277, 96
      %v694 = vpop.permute.xlu0 %693
      %695 = vrot.lane.b32.xlu0 %v286, 96
      %v696 = vpop.permute.xlu0 %695
      %697 = vrot.lane.b32.xlu0 %v287, 96
      %v698 = vpop.permute.xlu0 %697
      %699 = vrot.lane.b32.xlu0 %v288, 96
      %v700 = vpop.permute.xlu0 %699
      %701 = vrot.lane.b32.xlu0 %v289, 96
      %v702 = vpop.permute.xlu0 %701
      %v704 = vsel %vm290, %v688, 0
      %v707 = vsel %vm290, %v690, 0
      %v710 = vsel %vm290, %v692, 0
      %v713 = vsel %vm290, %v694, 0
      %v716 = vsel %vm290, %v696, 0
      %v719 = vsel %vm290, %v698, 0
      %v722 = vsel %vm290, %v700, 0
      %v725 = vsel %vm290, %v702, 0
      %727 = vmatprep.subr.bf16.mxu0 0
      %728 = vmatpush1.bf16.xpose.msra.mxu0 0
      %729 = vmatprep.subr.bf16.mxu0 0
      %730 = vmatpush1.bf16.xpose.msra.mxu0 0
      %731 = vmatprep.subr.bf16.mxu0 0
      %732 = vmatpush1.bf16.xpose.msra.mxu0 0
      %733 = vmatprep.subr.bf16.mxu0 0
      %734 = vmatpush1.bf16.xpose.msra.mxu0 0
      %735 = vmatprep.subr.bf16.mxu0 0
      %736 = vmatpush1.bf16.xpose.msra.mxu0 %v725
      %737 = vmatprep.subr.bf16.mxu0 0
      %738 = vmatpush1.bf16.xpose.msra.mxu0 %v722
      %739 = vmatprep.subr.bf16.mxu0 0
      %740 = vmatpush1.bf16.xpose.msra.mxu0 %v719
      %741 = vmatprep.subr.bf16.mxu0 0
      %742 = vmatpush1.bf16.xpose.msra.mxu0 %v716
      %743 = vmatprep.subr.bf16.mxu0 0
      %744 = vmatpush2.bf16.xpose.msra.mxu0 0
      %745 = vmatprep.subr.bf16.mxu0 0
      %746 = vmatpush2.bf16.xpose.msra.mxu0 0
      %747 = vmatprep.subr.bf16.mxu0 0
      %748 = vmatpush2.bf16.xpose.msra.mxu0 0
      %749 = vmatprep.subr.bf16.mxu0 0
      %750 = vmatpush2.bf16.xpose.msra.mxu0 0
      %751 = vmatprep.subr.bf16.mxu0 0
      %752 = vmatpush2.bf16.xpose.msra.mxu0 0
      %753 = vmatprep.subr.bf16.mxu0 0
      %754 = vmatpush2.bf16.xpose.msra.mxu0 0
      %755 = vmatprep.subr.bf16.mxu0 0
      %756 = vmatpush2.bf16.xpose.msra.mxu0 0
      %757 = vmatprep.subr.bf16.mxu0 0
      %758 = vmatpush2.bf16.xpose.msra.mxu0 0
      %759 = vmatprep.mubr.bf16.mxu0 0
      %760 = vmatmul.mubr.bf16.gmra.mxu0 %v704
      %v761 = vpop.f32.mrf.mxu0
      %v762 = vadd.f32 0.0, %v761
      %v763 = vpop.f32.mrf.mxu0
      %v764 = vpop.f32.mrf.mxu0
      %v765 = vadd.f32 0.0, %v764
      %v766 = vpop.f32.mrf.mxu0
      %767 = vmatprep.mubr.bf16.mxu0 0
      %768 = vmatmul.mubr.bf16.gmra.mxu0 %v707
      %v769 = vpop.f32.mrf.mxu0
      %v770 = vadd.f32 0.0, %v769
      %v771 = vpop.f32.mrf.mxu0
      %v772 = vpop.f32.mrf.mxu0
      %v773 = vadd.f32 0.0, %v772
      %v774 = vpop.f32.mrf.mxu0
      %775 = vmatprep.mubr.bf16.mxu0 0
      %776 = vmatmul.mubr.bf16.gmra.mxu0 %v710
      %v777 = vpop.f32.mrf.mxu0
      %v778 = vadd.f32 0.0, %v777
      %v779 = vpop.f32.mrf.mxu0
      %v780 = vpop.f32.mrf.mxu0
      %v781 = vadd.f32 0.0, %v780
      %v782 = vpop.f32.mrf.mxu0
      %783 = vmatprep.mubr.bf16.mxu0 0
      %784 = vmatmul.mubr.bf16.gmra.mxu0 %v713
      %v785 = vpop.f32.mrf.mxu0
      %v786 = vadd.f32 0.0, %v785
      %v787 = vpop.f32.mrf.mxu0
      %v788 = vpop.f32.mrf.mxu0
      %v789 = vadd.f32 0.0, %v788
      %v790 = vpop.f32.mrf.mxu0
      %791 = vdwg.mxu0
      %v792 = vmul.f32 %v762, 0.17677669
      %v793 = vmul.f32 %v765, 0.17677669
      %v794 = vmul.f32 %v770, 0.17677669
      %v795 = vmul.f32 %v773, 0.17677669
      %v796 = vmul.f32 %v778, 0.17677669
      %v797 = vmul.f32 %v781, 0.17677669
      %v798 = vmul.f32 %v786, 0.17677669
      %v799 = vmul.f32 %v789, 0.17677669
      %v800 = vsel %vm388, %v792, -inf
      %801 = vmax.xlane.f32.xlu0 %v800
      %v802 = vpop.xlane.xlu0 %801
      %v803 = vsel %vm388, %v793, -inf
      %804 = vmax.xlane.f32.xlu0 %v803
      %v805 = vpop.xlane.xlu0 %804
      %v806 = vsel %vm388, %v794, -inf
      %807 = vmax.xlane.f32.xlu0 %v806
      %v808 = vpop.xlane.xlu0 %807
      %v809 = vsel %vm388, %v795, -inf
      %810 = vmax.xlane.f32.xlu0 %v809
      %v811 = vpop.xlane.xlu0 %810
      %v812 = vsel %vm388, %v796, -inf
      %813 = vmax.xlane.f32.xlu0 %v812
      %v814 = vpop.xlane.xlu0 %813
      %v815 = vsel %vm388, %v797, -inf
      %816 = vmax.xlane.f32.xlu0 %v815
      %v817 = vpop.xlane.xlu0 %816
      %v818 = vsel %vm388, %v798, -inf
      %819 = vmax.xlane.f32.xlu0 %v818
      %v820 = vpop.xlane.xlu0 %819
      %v821 = vsel %vm388, %v799, -inf
      %822 = vmax.xlane.f32.xlu0 %v821
      %v823 = vpop.xlane.xlu0 %822
      %v824 = vsub.f32 %v792, %v802
      %v825 = vsub.f32 %v793, %v805
      %v826 = vsub.f32 %v794, %v808
      %v827 = vsub.f32 %v795, %v811
      %v828 = vsub.f32 %v796, %v814
      %v829 = vsub.f32 %v797, %v817
      %v830 = vsub.f32 %v798, %v820
      %v831 = vsub.f32 %v799, %v823
      %v832 = vmul.f32 %v824, 1.442695
      %v833 = vpow.pop %v832
      %v834 = vmul.f32 %v825, 1.442695
      %v835 = vpow.pop %v834
      %v836 = vmul.f32 %v826, 1.442695
      %v837 = vpow.pop %v836
      %v838 = vmul.f32 %v827, 1.442695
      %v839 = vpow.pop %v838
      %v840 = vmul.f32 %v828, 1.442695
      %v841 = vpow.pop %v840
      %v842 = vmul.f32 %v829, 1.442695
      %v843 = vpow.pop %v842
      %v844 = vmul.f32 %v830, 1.442695
      %v845 = vpow.pop %v844
      %v846 = vmul.f32 %v831, 1.442695
      %v847 = vpow.pop %v846
      %v848 = vsel %vm388, %v833, 0.0
      %849 = vadd.xlane.f32.xlu0 %v848
      %v850 = vpop.xlane.xlu0 %849
      %v851 = vsel %vm388, %v835, 0.0
      %852 = vadd.xlane.f32.xlu0 %v851
      %v853 = vpop.xlane.xlu0 %852
      %v854 = vsel %vm388, %v837, 0.0
      %855 = vadd.xlane.f32.xlu0 %v854
      %v856 = vpop.xlane.xlu0 %855
      %v857 = vsel %vm388, %v839, 0.0
      %858 = vadd.xlane.f32.xlu0 %v857
      %v859 = vpop.xlane.xlu0 %858
      %v860 = vsel %vm388, %v841, 0.0
      %861 = vadd.xlane.f32.xlu0 %v860
      %v862 = vpop.xlane.xlu0 %861
      %v863 = vsel %vm388, %v843, 0.0
      %864 = vadd.xlane.f32.xlu0 %v863
      %v865 = vpop.xlane.xlu0 %864
      %v866 = vsel %vm388, %v845, 0.0
      %867 = vadd.xlane.f32.xlu0 %v866
      %v868 = vpop.xlane.xlu0 %867
      %v869 = vsel %vm388, %v847, 0.0
      %870 = vadd.xlane.f32.xlu0 %v869
      %v871 = vpop.xlane.xlu0 %870
      %v872 = vpack.c.bf16 %v835, %v833
      %v873 = vpack.c.bf16 %v839, %v837
      %v874 = vpack.c.bf16 %v843, %v841
      %v875 = vpack.c.bf16 %v847, %v845
      %876 = vrot.lane.b32.xlu0 %v481, 96
      %v877 = vpop.permute.xlu0 %876
      %878 = vrot.lane.b32.xlu0 %v482, 96
      %v879 = vpop.permute.xlu0 %878
      %880 = vrot.lane.b32.xlu0 %v483, 96
      %v881 = vpop.permute.xlu0 %880
      %882 = vrot.lane.b32.xlu0 %v484, 96
      %v883 = vpop.permute.xlu0 %882
      %v889 = vsel %vm388, %v872, 0
      %v892 = vsel %vm388, %v873, 0
      %v895 = vsel %vm388, %v874, 0
      %v898 = vsel %vm388, %v875, 0
      %900 = vmatprep.subr.bf16.mxu0 0
      %901 = vmatpush1.bf16.msra.mxu0 0
      %902 = vmatprep.subr.bf16.mxu0 0
      %903 = vmatpush1.bf16.msra.mxu0 0
      %904 = vmatprep.subr.bf16.mxu0 0
      %905 = vmatpush1.bf16.msra.mxu0 0
      %906 = vmatprep.subr.bf16.mxu0 0
      %907 = vmatpush1.bf16.msra.mxu0 0
      %908 = vmatprep.subr.bf16.mxu0 0
      %909 = vmatpush1.bf16.msra.mxu0 %v883
      %910 = vmatprep.subr.bf16.mxu0 0
      %911 = vmatpush1.bf16.msra.mxu0 %v881
      %912 = vmatprep.subr.bf16.mxu0 0
      %913 = vmatpush1.bf16.msra.mxu0 %v879
      %914 = vmatprep.subr.bf16.mxu0 0
      %915 = vmatpush1.bf16.msra.mxu0 %v877
      %916 = vmatprep.subr.bf16.mxu0 0
      %917 = vmatpush2.bf16.msra.mxu0 0
      %918 = vmatprep.subr.bf16.mxu0 0
      %919 = vmatpush2.bf16.msra.mxu0 0
      %920 = vmatprep.subr.bf16.mxu0 0
      %921 = vmatpush2.bf16.msra.mxu0 0
      %922 = vmatprep.subr.bf16.mxu0 0
      %923 = vmatpush2.bf16.msra.mxu0 0
      %924 = vmatprep.subr.bf16.mxu0 0
      %925 = vmatpush2.bf16.msra.mxu0 0
      %926 = vmatprep.subr.bf16.mxu0 0
      %927 = vmatpush2.bf16.msra.mxu0 0
      %928 = vmatprep.subr.bf16.mxu0 0
      %929 = vmatpush2.bf16.msra.mxu0 0
      %930 = vmatprep.subr.bf16.mxu0 0
      %931 = vmatpush2.bf16.msra.mxu0 0
      %932 = vmatprep.mubr.bf16.mxu0 0
      %933 = vmatmul.mubr.bf16.gmra.mxu0 %v889
      %v934 = vpop.f32.mrf.mxu0
      %v935 = vadd.f32 0.0, %v934
      %v936 = vpop.f32.mrf.mxu0
      %v937 = vpop.f32.mrf.mxu0
      %v938 = vadd.f32 0.0, %v937
      %v939 = vpop.f32.mrf.mxu0
      %940 = vmatprep.mubr.bf16.mxu0 0
      %941 = vmatmul.mubr.bf16.gmra.mxu0 %v892
      %v942 = vpop.f32.mrf.mxu0
      %v943 = vadd.f32 0.0, %v942
      %v944 = vpop.f32.mrf.mxu0
      %v945 = vpop.f32.mrf.mxu0
      %v946 = vadd.f32 0.0, %v945
      %v947 = vpop.f32.mrf.mxu0
      %948 = vmatprep.mubr.bf16.mxu0 0
      %949 = vmatmul.mubr.bf16.gmra.mxu0 %v895
      %v950 = vpop.f32.mrf.mxu0
      %v951 = vadd.f32 0.0, %v950
      %v952 = vpop.f32.mrf.mxu0
      %v953 = vpop.f32.mrf.mxu0
      %v954 = vadd.f32 0.0, %v953
      %v955 = vpop.f32.mrf.mxu0
      %956 = vmatprep.mubr.bf16.mxu0 0
      %957 = vmatmul.mubr.bf16.gmra.mxu0 %v898
      %v958 = vpop.f32.mrf.mxu0
      %v959 = vadd.f32 0.0, %v958
      %v960 = vpop.f32.mrf.mxu0
      %v961 = vpop.f32.mrf.mxu0
      %v962 = vadd.f32 0.0, %v961
      %v963 = vpop.f32.mrf.mxu0
      %964 = vdwg.mxu0
      %v965 = vrcp.pop %v850
      %v966 = vrcp.pop %v853
      %v967 = vrcp.pop %v856
      %v968 = vrcp.pop %v859
      %v969 = vrcp.pop %v862
      %v970 = vrcp.pop %v865
      %v971 = vrcp.pop %v868
      %v972 = vrcp.pop %v871
      %v973 = vmul.f32 %v935, %v965
      %v974 = vmul.f32 %v938, %v966
      %v975 = vmul.f32 %v943, %v967
      %v976 = vmul.f32 %v946, %v968
      %v977 = vmul.f32 %v951, %v969
      %v978 = vmul.f32 %v954, %v970
      %v979 = vmul.f32 %v959, %v971
      %v980 = vmul.f32 %v962, %v972
      %v981 = vld [vmem:[%s1 + $0x10] sm:$0xf]
      %v982 = vld [vmem:[%s1 + $0x14] sm:$0xf]
      %v983 = vld [vmem:[%s1 + $0x18] sm:$0xf]
      %v984 = vld [vmem:[%s1 + $0x1c] sm:$0xf]
      %v985 = vpack.c.bf16 %v974, %v973
      %v986 = vpack.c.bf16 %v976, %v975
      %v987 = vpack.c.bf16 %v978, %v977
      %v988 = vpack.c.bf16 %v980, %v979
      %v993 = vunpack.c.l.b16 %v981
      %v994 = vunpack.c.l.b16 %v982
      %v995 = vunpack.c.l.b16 %v983
      %v996 = vunpack.c.l.b16 %v984
      %v997 = vpack.c.b16 %v994, %v993
      %v998 = vpack.c.b16 %v996, %v995
      %v1002 = vsel %vm290, %v985, 0
      %v1005 = vsel %vm290, %v986, 0
      %v1008 = vsel %vm290, %v987, 0
      %v1011 = vsel %vm290, %v988, 0
      %1013 = vmatprep.subr.bf16.mxu0 0
      %1014 = vmatpush1.bf16.msra.mxu0 0
      %1015 = vmatprep.subr.bf16.mxu0 0
      %1016 = vmatpush1.bf16.msra.mxu0 0
      %1017 = vmatprep.subr.bf16.mxu0 0
      %1018 = vmatpush1.bf16.msra.mxu0 0
      %1019 = vmatprep.subr.bf16.mxu0 0
      %1020 = vmatpush1.bf16.msra.mxu0 0
      %1021 = vmatprep.subr.bf16.mxu0 0
      %1022 = vmatpush1.bf16.msra.mxu0 0
      %1023 = vmatprep.subr.bf16.mxu0 0
      %1024 = vmatpush1.bf16.msra.mxu0 0
      %1025 = vmatprep.subr.bf16.mxu0 0
      %1026 = vmatpush1.bf16.msra.mxu0 %v998
      %1027 = vmatprep.subr.bf16.mxu0 0
      %1028 = vmatpush1.bf16.msra.mxu0 %v997
      %1029 = vmatprep.subr.bf16.mxu0 0
      %1030 = vmatpush2.bf16.msra.mxu0 0
      %1031 = vmatprep.subr.bf16.mxu0 0
      %1032 = vmatpush2.bf16.msra.mxu0 0
      %1033 = vmatprep.subr.bf16.mxu0 0
      %1034 = vmatpush2.bf16.msra.mxu0 0
      %1035 = vmatprep.subr.bf16.mxu0 0
      %1036 = vmatpush2.bf16.msra.mxu0 0
      %1037 = vmatprep.subr.bf16.mxu0 0
      %1038 = vmatpush2.bf16.msra.mxu0 0
      %1039 = vmatprep.subr.bf16.mxu0 0
      %1040 = vmatpush2.bf16.msra.mxu0 0
      %1041 = vmatprep.subr.bf16.mxu0 0
      %1042 = vmatpush2.bf16.msra.mxu0 0
      %1043 = vmatprep.subr.bf16.mxu0 0
      %1044 = vmatpush2.bf16.msra.mxu0 0
      %1045 = vmatprep.mubr.bf16.mxu0 0
      %1046 = vmatmul.mubr.bf16.gmra.mxu0 %v1002
      %v1047 = vpop.f32.mrf.mxu0
      %v1048 = vadd.f32 0.0, %v1047
      %v1049 = vpop.f32.mrf.mxu0
      %v1050 = vpop.f32.mrf.mxu0
      %v1051 = vadd.f32 0.0, %v1050
      %v1052 = vpop.f32.mrf.mxu0
      %1053 = vmatprep.mubr.bf16.mxu0 0
      %1054 = vmatmul.mubr.bf16.gmra.mxu0 %v1005
      %v1055 = vpop.f32.mrf.mxu0
      %v1056 = vadd.f32 0.0, %v1055
      %v1057 = vpop.f32.mrf.mxu0
      %v1058 = vpop.f32.mrf.mxu0
      %v1059 = vadd.f32 0.0, %v1058
      %v1060 = vpop.f32.mrf.mxu0
      %1061 = vmatprep.mubr.bf16.mxu0 0
      %1062 = vmatmul.mubr.bf16.gmra.mxu0 %v1008
      %v1063 = vpop.f32.mrf.mxu0
      %v1064 = vadd.f32 0.0, %v1063
      %v1065 = vpop.f32.mrf.mxu0
      %v1066 = vpop.f32.mrf.mxu0
      %v1067 = vadd.f32 0.0, %v1066
      %v1068 = vpop.f32.mrf.mxu0
      %1069 = vmatprep.mubr.bf16.mxu0 0
      %1070 = vmatmul.mubr.bf16.gmra.mxu0 %v1011
      %v1071 = vpop.f32.mrf.mxu0
      %v1072 = vadd.f32 0.0, %v1071
      %v1073 = vpop.f32.mrf.mxu0
      %v1074 = vpop.f32.mrf.mxu0
      %v1075 = vadd.f32 0.0, %v1074
      %v1076 = vpop.f32.mrf.mxu0
      %1077 = vdwg.mxu0
      %v1078 = vadd.f32 %v679, %v1048
      %v1079 = vadd.f32 %v680, %v1051
      %v1080 = vadd.f32 %v681, %v1056
      %v1081 = vadd.f32 %v682, %v1059
      %v1082 = vadd.f32 %v683, %v1064
      %v1083 = vadd.f32 %v684, %v1067
      %v1084 = vadd.f32 %v685, %v1072
      %v1085 = vadd.f32 %v686, %v1075
      %1086 = vrot.lane.b32.xlu0 %v274, 64
      %v1087 = vpop.permute.xlu0 %1086
      %1088 = vrot.lane.b32.xlu0 %v275, 64
      %v1089 = vpop.permute.xlu0 %1088
      %1090 = vrot.lane.b32.xlu0 %v276, 64
      %v1091 = vpop.permute.xlu0 %1090
      %1092 = vrot.lane.b32.xlu0 %v277, 64
      %v1093 = vpop.permute.xlu0 %1092
      %1094 = vrot.lane.b32.xlu0 %v286, 64
      %v1095 = vpop.permute.xlu0 %1094
      %1096 = vrot.lane.b32.xlu0 %v287, 64
      %v1097 = vpop.permute.xlu0 %1096
      %1098 = vrot.lane.b32.xlu0 %v288, 64
      %v1099 = vpop.permute.xlu0 %1098
      %1100 = vrot.lane.b32.xlu0 %v289, 64
      %v1101 = vpop.permute.xlu0 %1100
      %v1103 = vsel %vm290, %v1087, 0
      %v1106 = vsel %vm290, %v1089, 0
      %v1109 = vsel %vm290, %v1091, 0
      %v1112 = vsel %vm290, %v1093, 0
      %v1115 = vsel %vm290, %v1095, 0
      %v1118 = vsel %vm290, %v1097, 0
      %v1121 = vsel %vm290, %v1099, 0
      %v1124 = vsel %vm290, %v1101, 0
      %1126 = vmatprep.subr.bf16.mxu0 0
      %1127 = vmatpush1.bf16.xpose.msra.mxu0 0
      %1128 = vmatprep.subr.bf16.mxu0 0
      %1129 = vmatpush1.bf16.xpose.msra.mxu0 0
      %1130 = vmatprep.subr.bf16.mxu0 0
      %1131 = vmatpush1.bf16.xpose.msra.mxu0 0
      %1132 = vmatprep.subr.bf16.mxu0 0
      %1133 = vmatpush1.bf16.xpose.msra.mxu0 0
      %1134 = vmatprep.subr.bf16.mxu0 0
      %1135 = vmatpush1.bf16.xpose.msra.mxu0 %v1124
      %1136 = vmatprep.subr.bf16.mxu0 0
      %1137 = vmatpush1.bf16.xpose.msra.mxu0 %v1121
      %1138 = vmatprep.subr.bf16.mxu0 0
      %1139 = vmatpush1.bf16.xpose.msra.mxu0 %v1118
      %1140 = vmatprep.subr.bf16.mxu0 0
      %1141 = vmatpush1.bf16.xpose.msra.mxu0 %v1115
      %1142 = vmatprep.subr.bf16.mxu0 0
      %1143 = vmatpush2.bf16.xpose.msra.mxu0 0
      %1144 = vmatprep.subr.bf16.mxu0 0
      %1145 = vmatpush2.bf16.xpose.msra.mxu0 0
      %1146 = vmatprep.subr.bf16.mxu0 0
      %1147 = vmatpush2.bf16.xpose.msra.mxu0 0
      %1148 = vmatprep.subr.bf16.mxu0 0
      %1149 = vmatpush2.bf16.xpose.msra.mxu0 0
      %1150 = vmatprep.subr.bf16.mxu0 0
      %1151 = vmatpush2.bf16.xpose.msra.mxu0 0
      %1152 = vmatprep.subr.bf16.mxu0 0
      %1153 = vmatpush2.bf16.xpose.msra.mxu0 0
      %1154 = vmatprep.subr.bf16.mxu0 0
      %1155 = vmatpush2.bf16.xpose.msra.mxu0 0
      %1156 = vmatprep.subr.bf16.mxu0 0
      %1157 = vmatpush2.bf16.xpose.msra.mxu0 0
      %1158 = vmatprep.mubr.bf16.mxu0 0
      %1159 = vmatmul.mubr.bf16.gmra.mxu0 %v1103
      %v1160 = vpop.f32.mrf.mxu0
      %v1161 = vadd.f32 0.0, %v1160
      %v1162 = vpop.f32.mrf.mxu0
      %v1163 = vpop.f32.mrf.mxu0
      %v1164 = vadd.f32 0.0, %v1163
      %v1165 = vpop.f32.mrf.mxu0
      %1166 = vmatprep.mubr.bf16.mxu0 0
      %1167 = vmatmul.mubr.bf16.gmra.mxu0 %v1106
      %v1168 = vpop.f32.mrf.mxu0
      %v1169 = vadd.f32 0.0, %v1168
      %v1170 = vpop.f32.mrf.mxu0
      %v1171 = vpop.f32.mrf.mxu0
      %v1172 = vadd.f32 0.0, %v1171
      %v1173 = vpop.f32.mrf.mxu0
      %1174 = vmatprep.mubr.bf16.mxu0 0
      %1175 = vmatmul.mubr.bf16.gmra.mxu0 %v1109
      %v1176 = vpop.f32.mrf.mxu0
      %v1177 = vadd.f32 0.0, %v1176
      %v1178 = vpop.f32.mrf.mxu0
      %v1179 = vpop.f32.mrf.mxu0
      %v1180 = vadd.f32 0.0, %v1179
      %v1181 = vpop.f32.mrf.mxu0
      %1182 = vmatprep.mubr.bf16.mxu0 0
      %1183 = vmatmul.mubr.bf16.gmra.mxu0 %v1112
      %v1184 = vpop.f32.mrf.mxu0
      %v1185 = vadd.f32 0.0, %v1184
      %v1186 = vpop.f32.mrf.mxu0
      %v1187 = vpop.f32.mrf.mxu0
      %v1188 = vadd.f32 0.0, %v1187
      %v1189 = vpop.f32.mrf.mxu0
      %1190 = vdwg.mxu0
      %v1191 = vmul.f32 %v1161, 0.17677669
      %v1192 = vmul.f32 %v1164, 0.17677669
      %v1193 = vmul.f32 %v1169, 0.17677669
      %v1194 = vmul.f32 %v1172, 0.17677669
      %v1195 = vmul.f32 %v1177, 0.17677669
      %v1196 = vmul.f32 %v1180, 0.17677669
      %v1197 = vmul.f32 %v1185, 0.17677669
      %v1198 = vmul.f32 %v1188, 0.17677669
      %v1199 = vsel %vm388, %v1191, -inf
      %1200 = vmax.xlane.f32.xlu0 %v1199
      %v1201 = vpop.xlane.xlu0 %1200
      %v1202 = vsel %vm388, %v1192, -inf
      %1203 = vmax.xlane.f32.xlu0 %v1202
      %v1204 = vpop.xlane.xlu0 %1203
      %v1205 = vsel %vm388, %v1193, -inf
      %1206 = vmax.xlane.f32.xlu0 %v1205
      %v1207 = vpop.xlane.xlu0 %1206
      %v1208 = vsel %vm388, %v1194, -inf
      %1209 = vmax.xlane.f32.xlu0 %v1208
      %v1210 = vpop.xlane.xlu0 %1209
      %v1211 = vsel %vm388, %v1195, -inf
      %1212 = vmax.xlane.f32.xlu0 %v1211
      %v1213 = vpop.xlane.xlu0 %1212
      %v1214 = vsel %vm388, %v1196, -inf
      %1215 = vmax.xlane.f32.xlu0 %v1214
      %v1216 = vpop.xlane.xlu0 %1215
      %v1217 = vsel %vm388, %v1197, -inf
      %1218 = vmax.xlane.f32.xlu0 %v1217
      %v1219 = vpop.xlane.xlu0 %1218
      %v1220 = vsel %vm388, %v1198, -inf
      %1221 = vmax.xlane.f32.xlu0 %v1220
      %v1222 = vpop.xlane.xlu0 %1221
      %v1223 = vsub.f32 %v1191, %v1201
      %v1224 = vsub.f32 %v1192, %v1204
      %v1225 = vsub.f32 %v1193, %v1207
      %v1226 = vsub.f32 %v1194, %v1210
      %v1227 = vsub.f32 %v1195, %v1213
      %v1228 = vsub.f32 %v1196, %v1216
      %v1229 = vsub.f32 %v1197, %v1219
      %v1230 = vsub.f32 %v1198, %v1222
      %v1231 = vmul.f32 %v1223, 1.442695
      %v1232 = vpow.pop %v1231
      %v1233 = vmul.f32 %v1224, 1.442695
      %v1234 = vpow.pop %v1233
      %v1235 = vmul.f32 %v1225, 1.442695
      %v1236 = vpow.pop %v1235
      %v1237 = vmul.f32 %v1226, 1.442695
      %v1238 = vpow.pop %v1237
      %v1239 = vmul.f32 %v1227, 1.442695
      %v1240 = vpow.pop %v1239
      %v1241 = vmul.f32 %v1228, 1.442695
      %v1242 = vpow.pop %v1241
      %v1243 = vmul.f32 %v1229, 1.442695
      %v1244 = vpow.pop %v1243
      %v1245 = vmul.f32 %v1230, 1.442695
      %v1246 = vpow.pop %v1245
      %v1247 = vsel %vm388, %v1232, 0.0
      %1248 = vadd.xlane.f32.xlu0 %v1247
      %v1249 = vpop.xlane.xlu0 %1248
      %v1250 = vsel %vm388, %v1234, 0.0
      %1251 = vadd.xlane.f32.xlu0 %v1250
      %v1252 = vpop.xlane.xlu0 %1251
      %v1253 = vsel %vm388, %v1236, 0.0
      %1254 = vadd.xlane.f32.xlu0 %v1253
      %v1255 = vpop.xlane.xlu0 %1254
      %v1256 = vsel %vm388, %v1238, 0.0
      %1257 = vadd.xlane.f32.xlu0 %v1256
      %v1258 = vpop.xlane.xlu0 %1257
      %v1259 = vsel %vm388, %v1240, 0.0
      %1260 = vadd.xlane.f32.xlu0 %v1259
      %v1261 = vpop.xlane.xlu0 %1260
      %v1262 = vsel %vm388, %v1242, 0.0
      %1263 = vadd.xlane.f32.xlu0 %v1262
      %v1264 = vpop.xlane.xlu0 %1263
      %v1265 = vsel %vm388, %v1244, 0.0
      %1266 = vadd.xlane.f32.xlu0 %v1265
      %v1267 = vpop.xlane.xlu0 %1266
      %v1268 = vsel %vm388, %v1246, 0.0
      %1269 = vadd.xlane.f32.xlu0 %v1268
      %v1270 = vpop.xlane.xlu0 %1269
      %v1271 = vpack.c.bf16 %v1234, %v1232
      %v1272 = vpack.c.bf16 %v1238, %v1236
      %v1273 = vpack.c.bf16 %v1242, %v1240
      %v1274 = vpack.c.bf16 %v1246, %v1244
      %1275 = vrot.lane.b32.xlu0 %v481, 64
      %v1276 = vpop.permute.xlu0 %1275
      %1277 = vrot.lane.b32.xlu0 %v482, 64
      %v1278 = vpop.permute.xlu0 %1277
      %1279 = vrot.lane.b32.xlu0 %v483, 64
      %v1280 = vpop.permute.xlu0 %1279
      %1281 = vrot.lane.b32.xlu0 %v484, 64
      %v1282 = vpop.permute.xlu0 %1281
      %v1288 = vsel %vm388, %v1271, 0
      %v1291 = vsel %vm388, %v1272, 0
      %v1294 = vsel %vm388, %v1273, 0
      %v1297 = vsel %vm388, %v1274, 0
      %1299 = vmatprep.subr.bf16.mxu0 0
      %1300 = vmatpush1.bf16.msra.mxu0 0
      %1301 = vmatprep.subr.bf16.mxu0 0
      %1302 = vmatpush1.bf16.msra.mxu0 0
      %1303 = vmatprep.subr.bf16.mxu0 0
      %1304 = vmatpush1.bf16.msra.mxu0 0
      %1305 = vmatprep.subr.bf16.mxu0 0
      %1306 = vmatpush1.bf16.msra.mxu0 0
      %1307 = vmatprep.subr.bf16.mxu0 0
      %1308 = vmatpush1.bf16.msra.mxu0 %v1282
      %1309 = vmatprep.subr.bf16.mxu0 0
      %1310 = vmatpush1.bf16.msra.mxu0 %v1280
      %1311 = vmatprep.subr.bf16.mxu0 0
      %1312 = vmatpush1.bf16.msra.mxu0 %v1278
      %1313 = vmatprep.subr.bf16.mxu0 0
      %1314 = vmatpush1.bf16.msra.mxu0 %v1276
      %1315 = vmatprep.subr.bf16.mxu0 0
      %1316 = vmatpush2.bf16.msra.mxu0 0
      %1317 = vmatprep.subr.bf16.mxu0 0
      %1318 = vmatpush2.bf16.msra.mxu0 0
      %1319 = vmatprep.subr.bf16.mxu0 0
      %1320 = vmatpush2.bf16.msra.mxu0 0
      %1321 = vmatprep.subr.bf16.mxu0 0
      %1322 = vmatpush2.bf16.msra.mxu0 0
      %1323 = vmatprep.subr.bf16.mxu0 0
      %1324 = vmatpush2.bf16.msra.mxu0 0
      %1325 = vmatprep.subr.bf16.mxu0 0
      %1326 = vmatpush2.bf16.msra.mxu0 0
      %1327 = vmatprep.subr.bf16.mxu0 0
      %1328 = vmatpush2.bf16.msra.mxu0 0
      %1329 = vmatprep.subr.bf16.mxu0 0
      %1330 = vmatpush2.bf16.msra.mxu0 0
      %1331 = vmatprep.mubr.bf16.mxu0 0
      %1332 = vmatmul.mubr.bf16.gmra.mxu0 %v1288
      %v1333 = vpop.f32.mrf.mxu0
      %v1334 = vadd.f32 0.0, %v1333
      %v1335 = vpop.f32.mrf.mxu0
      %v1336 = vpop.f32.mrf.mxu0
      %v1337 = vadd.f32 0.0, %v1336
      %v1338 = vpop.f32.mrf.mxu0
      %1339 = vmatprep.mubr.bf16.mxu0 0
      %1340 = vmatmul.mubr.bf16.gmra.mxu0 %v1291
      %v1341 = vpop.f32.mrf.mxu0
      %v1342 = vadd.f32 0.0, %v1341
      %v1343 = vpop.f32.mrf.mxu0
      %v1344 = vpop.f32.mrf.mxu0
      %v1345 = vadd.f32 0.0, %v1344
      %v1346 = vpop.f32.mrf.mxu0
      %1347 = vmatprep.mubr.bf16.mxu0 0
      %1348 = vmatmul.mubr.bf16.gmra.mxu0 %v1294
      %v1349 = vpop.f32.mrf.mxu0
      %v1350 = vadd.f32 0.0, %v1349
      %v1351 = vpop.f32.mrf.mxu0
      %v1352 = vpop.f32.mrf.mxu0
      %v1353 = vadd.f32 0.0, %v1352
      %v1354 = vpop.f32.mrf.mxu0
      %1355 = vmatprep.mubr.bf16.mxu0 0
      %1356 = vmatmul.mubr.bf16.gmra.mxu0 %v1297
      %v1357 = vpop.f32.mrf.mxu0
      %v1358 = vadd.f32 0.0, %v1357
      %v1359 = vpop.f32.mrf.mxu0
      %v1360 = vpop.f32.mrf.mxu0
      %v1361 = vadd.f32 0.0, %v1360
      %v1362 = vpop.f32.mrf.mxu0
      %1363 = vdwg.mxu0
      %v1364 = vrcp.pop %v1249
      %v1365 = vrcp.pop %v1252
      %v1366 = vrcp.pop %v1255
      %v1367 = vrcp.pop %v1258
      %v1368 = vrcp.pop %v1261
      %v1369 = vrcp.pop %v1264
      %v1370 = vrcp.pop %v1267
      %v1371 = vrcp.pop %v1270
      %v1372 = vmul.f32 %v1334, %v1364
      %v1373 = vmul.f32 %v1337, %v1365
      %v1374 = vmul.f32 %v1342, %v1366
      %v1375 = vmul.f32 %v1345, %v1367
      %v1376 = vmul.f32 %v1350, %v1368
      %v1377 = vmul.f32 %v1353, %v1369
      %v1378 = vmul.f32 %v1358, %v1370
      %v1379 = vmul.f32 %v1361, %v1371
      %v1380 = vld [vmem:[%s1 + $0x20] sm:$0xf]
      %v1381 = vld [vmem:[%s1 + $0x24] sm:$0xf]
      %v1382 = vld [vmem:[%s1 + $0x28] sm:$0xf]
      %v1383 = vld [vmem:[%s1 + $0x2c] sm:$0xf]
      %v1384 = vpack.c.bf16 %v1373, %v1372
      %v1385 = vpack.c.bf16 %v1375, %v1374
      %v1386 = vpack.c.bf16 %v1377, %v1376
      %v1387 = vpack.c.bf16 %v1379, %v1378
      %v1392 = vunpack.c.l.b16 %v1380
      %v1393 = vunpack.c.l.b16 %v1381
      %v1394 = vunpack.c.l.b16 %v1382
      %v1395 = vunpack.c.l.b16 %v1383
      %v1396 = vpack.c.b16 %v1393, %v1392
      %v1397 = vpack.c.b16 %v1395, %v1394
      %v1401 = vsel %vm290, %v1384, 0
      %v1404 = vsel %vm290, %v1385, 0
      %v1407 = vsel %vm290, %v1386, 0
      %v1410 = vsel %vm290, %v1387, 0
      %1412 = vmatprep.subr.bf16.mxu0 0
      %1413 = vmatpush1.bf16.msra.mxu0 0
      %1414 = vmatprep.subr.bf16.mxu0 0
      %1415 = vmatpush1.bf16.msra.mxu0 0
      %1416 = vmatprep.subr.bf16.mxu0 0
      %1417 = vmatpush1.bf16.msra.mxu0 0
      %1418 = vmatprep.subr.bf16.mxu0 0
      %1419 = vmatpush1.bf16.msra.mxu0 0
      %1420 = vmatprep.subr.bf16.mxu0 0
      %1421 = vmatpush1.bf16.msra.mxu0 0
      %1422 = vmatprep.subr.bf16.mxu0 0
      %1423 = vmatpush1.bf16.msra.mxu0 0
      %1424 = vmatprep.subr.bf16.mxu0 0
      %1425 = vmatpush1.bf16.msra.mxu0 %v1397
      %1426 = vmatprep.subr.bf16.mxu0 0
      %1427 = vmatpush1.bf16.msra.mxu0 %v1396
      %1428 = vmatprep.subr.bf16.mxu0 0
      %1429 = vmatpush2.bf16.msra.mxu0 0
      %1430 = vmatprep.subr.bf16.mxu0 0
      %1431 = vmatpush2.bf16.msra.mxu0 0
      %1432 = vmatprep.subr.bf16.mxu0 0
      %1433 = vmatpush2.bf16.msra.mxu0 0
      %1434 = vmatprep.subr.bf16.mxu0 0
      %1435 = vmatpush2.bf16.msra.mxu0 0
      %1436 = vmatprep.subr.bf16.mxu0 0
      %1437 = vmatpush2.bf16.msra.mxu0 0
      %1438 = vmatprep.subr.bf16.mxu0 0
      %1439 = vmatpush2.bf16.msra.mxu0 0
      %1440 = vmatprep.subr.bf16.mxu0 0
      %1441 = vmatpush2.bf16.msra.mxu0 0
      %1442 = vmatprep.subr.bf16.mxu0 0
      %1443 = vmatpush2.bf16.msra.mxu0 0
      %1444 = vmatprep.mubr.bf16.mxu0 0
      %1445 = vmatmul.mubr.bf16.gmra.mxu0 %v1401
      %v1446 = vpop.f32.mrf.mxu0
      %v1447 = vadd.f32 0.0, %v1446
      %v1448 = vpop.f32.mrf.mxu0
      %v1449 = vpop.f32.mrf.mxu0
      %v1450 = vadd.f32 0.0, %v1449
      %v1451 = vpop.f32.mrf.mxu0
      %1452 = vmatprep.mubr.bf16.mxu0 0
      %1453 = vmatmul.mubr.bf16.gmra.mxu0 %v1404
      %v1454 = vpop.f32.mrf.mxu0
      %v1455 = vadd.f32 0.0, %v1454
      %v1456 = vpop.f32.mrf.mxu0
      %v1457 = vpop.f32.mrf.mxu0
      %v1458 = vadd.f32 0.0, %v1457
      %v1459 = vpop.f32.mrf.mxu0
      %1460 = vmatprep.mubr.bf16.mxu0 0
      %1461 = vmatmul.mubr.bf16.gmra.mxu0 %v1407
      %v1462 = vpop.f32.mrf.mxu0
      %v1463 = vadd.f32 0.0, %v1462
      %v1464 = vpop.f32.mrf.mxu0
      %v1465 = vpop.f32.mrf.mxu0
      %v1466 = vadd.f32 0.0, %v1465
      %v1467 = vpop.f32.mrf.mxu0
      %1468 = vmatprep.mubr.bf16.mxu0 0
      %1469 = vmatmul.mubr.bf16.gmra.mxu0 %v1410
      %v1470 = vpop.f32.mrf.mxu0
      %v1471 = vadd.f32 0.0, %v1470
      %v1472 = vpop.f32.mrf.mxu0
      %v1473 = vpop.f32.mrf.mxu0
      %v1474 = vadd.f32 0.0, %v1473
      %v1475 = vpop.f32.mrf.mxu0
      %1476 = vdwg.mxu0
      %v1477 = vadd.f32 %v1078, %v1447
      %v1478 = vadd.f32 %v1079, %v1450
      %v1479 = vadd.f32 %v1080, %v1455
      %v1480 = vadd.f32 %v1081, %v1458
      %v1481 = vadd.f32 %v1082, %v1463
      %v1482 = vadd.f32 %v1083, %v1466
      %v1483 = vadd.f32 %v1084, %v1471
      %v1484 = vadd.f32 %v1085, %v1474
      %1485 = vrot.lane.b32.xlu0 %v274, 32
      %v1486 = vpop.permute.xlu0 %1485
      %1487 = vrot.lane.b32.xlu0 %v275, 32
      %v1488 = vpop.permute.xlu0 %1487
      %1489 = vrot.lane.b32.xlu0 %v276, 32
      %v1490 = vpop.permute.xlu0 %1489
      %1491 = vrot.lane.b32.xlu0 %v277, 32
      %v1492 = vpop.permute.xlu0 %1491
      %1493 = vrot.lane.b32.xlu0 %v286, 32
      %v1494 = vpop.permute.xlu0 %1493
      %1495 = vrot.lane.b32.xlu0 %v287, 32
      %v1496 = vpop.permute.xlu0 %1495
      %1497 = vrot.lane.b32.xlu0 %v288, 32
      %v1498 = vpop.permute.xlu0 %1497
      %1499 = vrot.lane.b32.xlu0 %v289, 32
      %v1500 = vpop.permute.xlu0 %1499
      %v1502 = vsel %vm290, %v1486, 0
      %v1505 = vsel %vm290, %v1488, 0
      %v1508 = vsel %vm290, %v1490, 0
      %v1511 = vsel %vm290, %v1492, 0
      %v1514 = vsel %vm290, %v1494, 0
      %v1517 = vsel %vm290, %v1496, 0
      %v1520 = vsel %vm290, %v1498, 0
      %v1523 = vsel %vm290, %v1500, 0
      %1525 = vmatprep.subr.bf16.mxu0 0
      %1526 = vmatpush1.bf16.xpose.msra.mxu0 0
      %1527 = vmatprep.subr.bf16.mxu0 0
      %1528 = vmatpush1.bf16.xpose.msra.mxu0 0
      %1529 = vmatprep.subr.bf16.mxu0 0
      %1530 = vmatpush1.bf16.xpose.msra.mxu0 0
      %1531 = vmatprep.subr.bf16.mxu0 0
      %1532 = vmatpush1.bf16.xpose.msra.mxu0 0
      %1533 = vmatprep.subr.bf16.mxu0 0
      %1534 = vmatpush1.bf16.xpose.msra.mxu0 %v1523
      %1535 = vmatprep.subr.bf16.mxu0 0
      %1536 = vmatpush1.bf16.xpose.msra.mxu0 %v1520
      %1537 = vmatprep.subr.bf16.mxu0 0
      %1538 = vmatpush1.bf16.xpose.msra.mxu0 %v1517
      %1539 = vmatprep.subr.bf16.mxu0 0
      %1540 = vmatpush1.bf16.xpose.msra.mxu0 %v1514
      %1541 = vmatprep.subr.bf16.mxu0 0
      %1542 = vmatpush2.bf16.xpose.msra.mxu0 0
      %1543 = vmatprep.subr.bf16.mxu0 0
      %1544 = vmatpush2.bf16.xpose.msra.mxu0 0
      %1545 = vmatprep.subr.bf16.mxu0 0
      %1546 = vmatpush2.bf16.xpose.msra.mxu0 0
      %1547 = vmatprep.subr.bf16.mxu0 0
      %1548 = vmatpush2.bf16.xpose.msra.mxu0 0
      %1549 = vmatprep.subr.bf16.mxu0 0
      %1550 = vmatpush2.bf16.xpose.msra.mxu0 0
      %1551 = vmatprep.subr.bf16.mxu0 0
      %1552 = vmatpush2.bf16.xpose.msra.mxu0 0
      %1553 = vmatprep.subr.bf16.mxu0 0
      %1554 = vmatpush2.bf16.xpose.msra.mxu0 0
      %1555 = vmatprep.subr.bf16.mxu0 0
      %1556 = vmatpush2.bf16.xpose.msra.mxu0 0
      %1557 = vmatprep.mubr.bf16.mxu0 0
      %1558 = vmatmul.mubr.bf16.gmra.mxu0 %v1502
      %v1559 = vpop.f32.mrf.mxu0
      %v1560 = vadd.f32 0.0, %v1559
      %v1561 = vpop.f32.mrf.mxu0
      %v1562 = vpop.f32.mrf.mxu0
      %v1563 = vadd.f32 0.0, %v1562
      %v1564 = vpop.f32.mrf.mxu0
      %1565 = vmatprep.mubr.bf16.mxu0 0
      %1566 = vmatmul.mubr.bf16.gmra.mxu0 %v1505
      %v1567 = vpop.f32.mrf.mxu0
      %v1568 = vadd.f32 0.0, %v1567
      %v1569 = vpop.f32.mrf.mxu0
      %v1570 = vpop.f32.mrf.mxu0
      %v1571 = vadd.f32 0.0, %v1570
      %v1572 = vpop.f32.mrf.mxu0
      %1573 = vmatprep.mubr.bf16.mxu0 0
      %1574 = vmatmul.mubr.bf16.gmra.mxu0 %v1508
      %v1575 = vpop.f32.mrf.mxu0
      %v1576 = vadd.f32 0.0, %v1575
      %v1577 = vpop.f32.mrf.mxu0
      %v1578 = vpop.f32.mrf.mxu0
      %v1579 = vadd.f32 0.0, %v1578
      %v1580 = vpop.f32.mrf.mxu0
      %1581 = vmatprep.mubr.bf16.mxu0 0
      %1582 = vmatmul.mubr.bf16.gmra.mxu0 %v1511
      %v1583 = vpop.f32.mrf.mxu0
      %v1584 = vadd.f32 0.0, %v1583
      %v1585 = vpop.f32.mrf.mxu0
      %v1586 = vpop.f32.mrf.mxu0
      %v1587 = vadd.f32 0.0, %v1586
      %v1588 = vpop.f32.mrf.mxu0
      %1589 = vdwg.mxu0
      %v1590 = vmul.f32 %v1560, 0.17677669
      %v1591 = vmul.f32 %v1563, 0.17677669
      %v1592 = vmul.f32 %v1568, 0.17677669
      %v1593 = vmul.f32 %v1571, 0.17677669
      %v1594 = vmul.f32 %v1576, 0.17677669
      %v1595 = vmul.f32 %v1579, 0.17677669
      %v1596 = vmul.f32 %v1584, 0.17677669
      %v1597 = vmul.f32 %v1587, 0.17677669
      %v1598 = vsel %vm388, %v1590, -inf
      %1599 = vmax.xlane.f32.xlu0 %v1598
      %v1600 = vpop.xlane.xlu0 %1599
      %v1601 = vsel %vm388, %v1591, -inf
      %1602 = vmax.xlane.f32.xlu0 %v1601
      %v1603 = vpop.xlane.xlu0 %1602
      %v1604 = vsel %vm388, %v1592, -inf
      %1605 = vmax.xlane.f32.xlu0 %v1604
      %v1606 = vpop.xlane.xlu0 %1605
      %v1607 = vsel %vm388, %v1593, -inf
      %1608 = vmax.xlane.f32.xlu0 %v1607
      %v1609 = vpop.xlane.xlu0 %1608
      %v1610 = vsel %vm388, %v1594, -inf
      %1611 = vmax.xlane.f32.xlu0 %v1610
      %v1612 = vpop.xlane.xlu0 %1611
      %v1613 = vsel %vm388, %v1595, -inf
      %1614 = vmax.xlane.f32.xlu0 %v1613
      %v1615 = vpop.xlane.xlu0 %1614
      %v1616 = vsel %vm388, %v1596, -inf
      %1617 = vmax.xlane.f32.xlu0 %v1616
      %v1618 = vpop.xlane.xlu0 %1617
      %v1619 = vsel %vm388, %v1597, -inf
      %1620 = vmax.xlane.f32.xlu0 %v1619
      %v1621 = vpop.xlane.xlu0 %1620
      %v1622 = vsub.f32 %v1590, %v1600
      %v1623 = vsub.f32 %v1591, %v1603
      %v1624 = vsub.f32 %v1592, %v1606
      %v1625 = vsub.f32 %v1593, %v1609
      %v1626 = vsub.f32 %v1594, %v1612
      %v1627 = vsub.f32 %v1595, %v1615
      %v1628 = vsub.f32 %v1596, %v1618
      %v1629 = vsub.f32 %v1597, %v1621
      %v1630 = vmul.f32 %v1622, 1.442695
      %v1631 = vpow.pop %v1630
      %v1632 = vmul.f32 %v1623, 1.442695
      %v1633 = vpow.pop %v1632
      %v1634 = vmul.f32 %v1624, 1.442695
      %v1635 = vpow.pop %v1634
      %v1636 = vmul.f32 %v1625, 1.442695
      %v1637 = vpow.pop %v1636
      %v1638 = vmul.f32 %v1626, 1.442695
      %v1639 = vpow.pop %v1638
      %v1640 = vmul.f32 %v1627, 1.442695
      %v1641 = vpow.pop %v1640
      %v1642 = vmul.f32 %v1628, 1.442695
      %v1643 = vpow.pop %v1642
      %v1644 = vmul.f32 %v1629, 1.442695
      %v1645 = vpow.pop %v1644
      %v1646 = vsel %vm388, %v1631, 0.0
      %1647 = vadd.xlane.f32.xlu0 %v1646
      %v1648 = vpop.xlane.xlu0 %1647
      %v1649 = vsel %vm388, %v1633, 0.0
      %1650 = vadd.xlane.f32.xlu0 %v1649
      %v1651 = vpop.xlane.xlu0 %1650
      %v1652 = vsel %vm388, %v1635, 0.0
      %1653 = vadd.xlane.f32.xlu0 %v1652
      %v1654 = vpop.xlane.xlu0 %1653
      %v1655 = vsel %vm388, %v1637, 0.0
      %1656 = vadd.xlane.f32.xlu0 %v1655
      %v1657 = vpop.xlane.xlu0 %1656
      %v1658 = vsel %vm388, %v1639, 0.0
      %1659 = vadd.xlane.f32.xlu0 %v1658
      %v1660 = vpop.xlane.xlu0 %1659
      %v1661 = vsel %vm388, %v1641, 0.0
      %1662 = vadd.xlane.f32.xlu0 %v1661
      %v1663 = vpop.xlane.xlu0 %1662
      %v1664 = vsel %vm388, %v1643, 0.0
      %1665 = vadd.xlane.f32.xlu0 %v1664
      %v1666 = vpop.xlane.xlu0 %1665
      %v1667 = vsel %vm388, %v1645, 0.0
      %1668 = vadd.xlane.f32.xlu0 %v1667
      %v1669 = vpop.xlane.xlu0 %1668
      %v1670 = vpack.c.bf16 %v1633, %v1631
      %v1671 = vpack.c.bf16 %v1637, %v1635
      %v1672 = vpack.c.bf16 %v1641, %v1639
      %v1673 = vpack.c.bf16 %v1645, %v1643
      %1674 = vrot.lane.b32.xlu0 %v481, 32
      %v1675 = vpop.permute.xlu0 %1674
      %1676 = vrot.lane.b32.xlu0 %v482, 32
      %v1677 = vpop.permute.xlu0 %1676
      %1678 = vrot.lane.b32.xlu0 %v483, 32
      %v1679 = vpop.permute.xlu0 %1678
      %1680 = vrot.lane.b32.xlu0 %v484, 32
      %v1681 = vpop.permute.xlu0 %1680
      %v1687 = vsel %vm388, %v1670, 0
      %v1690 = vsel %vm388, %v1671, 0
      %v1693 = vsel %vm388, %v1672, 0
      %v1696 = vsel %vm388, %v1673, 0
      %1698 = vmatprep.subr.bf16.mxu0 0
      %1699 = vmatpush1.bf16.msra.mxu0 0
      %1700 = vmatprep.subr.bf16.mxu0 0
      %1701 = vmatpush1.bf16.msra.mxu0 0
      %1702 = vmatprep.subr.bf16.mxu0 0
      %1703 = vmatpush1.bf16.msra.mxu0 0
      %1704 = vmatprep.subr.bf16.mxu0 0
      %1705 = vmatpush1.bf16.msra.mxu0 0
      %1706 = vmatprep.subr.bf16.mxu0 0
      %1707 = vmatpush1.bf16.msra.mxu0 %v1681
      %1708 = vmatprep.subr.bf16.mxu0 0
      %1709 = vmatpush1.bf16.msra.mxu0 %v1679
      %1710 = vmatprep.subr.bf16.mxu0 0
      %1711 = vmatpush1.bf16.msra.mxu0 %v1677
      %1712 = vmatprep.subr.bf16.mxu0 0
      %1713 = vmatpush1.bf16.msra.mxu0 %v1675
      %1714 = vmatprep.subr.bf16.mxu0 0
      %1715 = vmatpush2.bf16.msra.mxu0 0
      %1716 = vmatprep.subr.bf16.mxu0 0
      %1717 = vmatpush2.bf16.msra.mxu0 0
      %1718 = vmatprep.subr.bf16.mxu0 0
      %1719 = vmatpush2.bf16.msra.mxu0 0
      %1720 = vmatprep.subr.bf16.mxu0 0
      %1721 = vmatpush2.bf16.msra.mxu0 0
      %1722 = vmatprep.subr.bf16.mxu0 0
      %1723 = vmatpush2.bf16.msra.mxu0 0
      %1724 = vmatprep.subr.bf16.mxu0 0
      %1725 = vmatpush2.bf16.msra.mxu0 0
      %1726 = vmatprep.subr.bf16.mxu0 0
      %1727 = vmatpush2.bf16.msra.mxu0 0
      %1728 = vmatprep.subr.bf16.mxu0 0
      %1729 = vmatpush2.bf16.msra.mxu0 0
      %1730 = vmatprep.mubr.bf16.mxu0 0
      %1731 = vmatmul.mubr.bf16.gmra.mxu0 %v1687
      %v1732 = vpop.f32.mrf.mxu0
      %v1733 = vadd.f32 0.0, %v1732
      %v1734 = vpop.f32.mrf.mxu0
      %v1735 = vpop.f32.mrf.mxu0
      %v1736 = vadd.f32 0.0, %v1735
      %v1737 = vpop.f32.mrf.mxu0
      %1738 = vmatprep.mubr.bf16.mxu0 0
      %1739 = vmatmul.mubr.bf16.gmra.mxu0 %v1690
      %v1740 = vpop.f32.mrf.mxu0
      %v1741 = vadd.f32 0.0, %v1740
      %v1742 = vpop.f32.mrf.mxu0
      %v1743 = vpop.f32.mrf.mxu0
      %v1744 = vadd.f32 0.0, %v1743
      %v1745 = vpop.f32.mrf.mxu0
      %1746 = vmatprep.mubr.bf16.mxu0 0
      %1747 = vmatmul.mubr.bf16.gmra.mxu0 %v1693
      %v1748 = vpop.f32.mrf.mxu0
      %v1749 = vadd.f32 0.0, %v1748
      %v1750 = vpop.f32.mrf.mxu0
      %v1751 = vpop.f32.mrf.mxu0
      %v1752 = vadd.f32 0.0, %v1751
      %v1753 = vpop.f32.mrf.mxu0
      %1754 = vmatprep.mubr.bf16.mxu0 0
      %1755 = vmatmul.mubr.bf16.gmra.mxu0 %v1696
      %v1756 = vpop.f32.mrf.mxu0
      %v1757 = vadd.f32 0.0, %v1756
      %v1758 = vpop.f32.mrf.mxu0
      %v1759 = vpop.f32.mrf.mxu0
      %v1760 = vadd.f32 0.0, %v1759
      %v1761 = vpop.f32.mrf.mxu0
      %1762 = vdwg.mxu0
      %v1763 = vrcp.pop %v1648
      %v1764 = vrcp.pop %v1651
      %v1765 = vrcp.pop %v1654
      %v1766 = vrcp.pop %v1657
      %v1767 = vrcp.pop %v1660
      %v1768 = vrcp.pop %v1663
      %v1769 = vrcp.pop %v1666
      %v1770 = vrcp.pop %v1669
      %v1771 = vmul.f32 %v1733, %v1763
      %v1772 = vmul.f32 %v1736, %v1764
      %v1773 = vmul.f32 %v1741, %v1765
      %v1774 = vmul.f32 %v1744, %v1766
      %v1775 = vmul.f32 %v1749, %v1767
      %v1776 = vmul.f32 %v1752, %v1768
      %v1777 = vmul.f32 %v1757, %v1769
      %v1778 = vmul.f32 %v1760, %v1770
      %v1779 = vld [vmem:[%s1 + $0x30] sm:$0xf]
      %v1780 = vld [vmem:[%s1 + $0x34] sm:$0xf]
      %v1781 = vld [vmem:[%s1 + $0x38] sm:$0xf]
      %v1782 = vld [vmem:[%s1 + $0x3c] sm:$0xf]
      %v1783 = vpack.c.bf16 %v1772, %v1771
      %v1784 = vpack.c.bf16 %v1774, %v1773
      %v1785 = vpack.c.bf16 %v1776, %v1775
      %v1786 = vpack.c.bf16 %v1778, %v1777
      %v1791 = vunpack.c.l.b16 %v1779
      %v1792 = vunpack.c.l.b16 %v1780
      %v1793 = vunpack.c.l.b16 %v1781
      %v1794 = vunpack.c.l.b16 %v1782
      %v1795 = vpack.c.b16 %v1792, %v1791
      %v1796 = vpack.c.b16 %v1794, %v1793
      %v1800 = vsel %vm290, %v1783, 0
      %v1803 = vsel %vm290, %v1784, 0
      %v1806 = vsel %vm290, %v1785, 0
      %v1809 = vsel %vm290, %v1786, 0
      %1811 = vmatprep.subr.bf16.mxu0 0
      %1812 = vmatpush1.bf16.msra.mxu0 0
      %1813 = vmatprep.subr.bf16.mxu0 0
      %1814 = vmatpush1.bf16.msra.mxu0 0
      %1815 = vmatprep.subr.bf16.mxu0 0
      %1816 = vmatpush1.bf16.msra.mxu0 0
      %1817 = vmatprep.subr.bf16.mxu0 0
      %1818 = vmatpush1.bf16.msra.mxu0 0
      %1819 = vmatprep.subr.bf16.mxu0 0
      %1820 = vmatpush1.bf16.msra.mxu0 0
      %1821 = vmatprep.subr.bf16.mxu0 0
      %1822 = vmatpush1.bf16.msra.mxu0 0
      %1823 = vmatprep.subr.bf16.mxu0 0
      %1824 = vmatpush1.bf16.msra.mxu0 %v1796
      %1825 = vmatprep.subr.bf16.mxu0 0
      %1826 = vmatpush1.bf16.msra.mxu0 %v1795
      %1827 = vmatprep.subr.bf16.mxu0 0
      %1828 = vmatpush2.bf16.msra.mxu0 0
      %1829 = vmatprep.subr.bf16.mxu0 0
      %1830 = vmatpush2.bf16.msra.mxu0 0
      %1831 = vmatprep.subr.bf16.mxu0 0
      %1832 = vmatpush2.bf16.msra.mxu0 0
      %1833 = vmatprep.subr.bf16.mxu0 0
      %1834 = vmatpush2.bf16.msra.mxu0 0
      %1835 = vmatprep.subr.bf16.mxu0 0
      %1836 = vmatpush2.bf16.msra.mxu0 0
      %1837 = vmatprep.subr.bf16.mxu0 0
      %1838 = vmatpush2.bf16.msra.mxu0 0
      %1839 = vmatprep.subr.bf16.mxu0 0
      %1840 = vmatpush2.bf16.msra.mxu0 0
      %1841 = vmatprep.subr.bf16.mxu0 0
      %1842 = vmatpush2.bf16.msra.mxu0 0
      %1843 = vmatprep.mubr.bf16.mxu0 0
      %1844 = vmatmul.mubr.bf16.gmra.mxu0 %v1800
      %v1845 = vpop.f32.mrf.mxu0
      %v1846 = vadd.f32 0.0, %v1845
      %v1847 = vpop.f32.mrf.mxu0
      %v1848 = vpop.f32.mrf.mxu0
      %v1849 = vadd.f32 0.0, %v1848
      %v1850 = vpop.f32.mrf.mxu0
      %1851 = vmatprep.mubr.bf16.mxu0 0
      %1852 = vmatmul.mubr.bf16.gmra.mxu0 %v1803
      %v1853 = vpop.f32.mrf.mxu0
      %v1854 = vadd.f32 0.0, %v1853
      %v1855 = vpop.f32.mrf.mxu0
      %v1856 = vpop.f32.mrf.mxu0
      %v1857 = vadd.f32 0.0, %v1856
      %v1858 = vpop.f32.mrf.mxu0
      %1859 = vmatprep.mubr.bf16.mxu0 0
      %1860 = vmatmul.mubr.bf16.gmra.mxu0 %v1806
      %v1861 = vpop.f32.mrf.mxu0
      %v1862 = vadd.f32 0.0, %v1861
      %v1863 = vpop.f32.mrf.mxu0
      %v1864 = vpop.f32.mrf.mxu0
      %v1865 = vadd.f32 0.0, %v1864
      %v1866 = vpop.f32.mrf.mxu0
      %1867 = vmatprep.mubr.bf16.mxu0 0
      %1868 = vmatmul.mubr.bf16.gmra.mxu0 %v1809
      %v1869 = vpop.f32.mrf.mxu0
      %v1870 = vadd.f32 0.0, %v1869
      %v1871 = vpop.f32.mrf.mxu0
      %v1872 = vpop.f32.mrf.mxu0
      %v1873 = vadd.f32 0.0, %v1872
      %v1874 = vpop.f32.mrf.mxu0
      %1875 = vdwg.mxu0
      %v1876 = vadd.f32 %v1477, %v1846
      %v1877 = vadd.f32 %v1478, %v1849
      %v1878 = vadd.f32 %v1479, %v1854
      %v1879 = vadd.f32 %v1480, %v1857
      %v1880 = vadd.f32 %v1481, %v1862
      %v1881 = vadd.f32 %v1482, %v1865
      %v1882 = vadd.f32 %v1483, %v1870
      %v1883 = vadd.f32 %v1484, %v1873
      %1884 = vst [vmem:[%s217] sm:$0xff] %v1876
      %1885 = vst [vmem:[%s217 + $0x8] sm:$0xff] %v1877
      %1886 = vst [vmem:[%s217 + $0x10] sm:$0xff] %v1878
      %1887 = vst [vmem:[%s217 + $0x18] sm:$0xff] %v1879
      %1888 = vst [vmem:[%s217 + $0x20] sm:$0xff] %v1880
      %1889 = vst [vmem:[%s217 + $0x28] sm:$0xff] %v1881
      %1890 = vst [vmem:[%s217 + $0x30] sm:$0xff] %v1882
      %1891 = vst [vmem:[%s217 + $0x38] sm:$0xff] %v1883
      %p1892 = scmp.lt.s32.totalorder %s15, 1
      %s1893 = scalar_select %p1892, %s15, 1
      %s1894 = smul.addr %s1893, 8
      %s1895 = smul.addr %s1894, 8
      %s1896 = scalar_lea.vmem %s4, %s1895
      // Predicated region
      $region37: #{sam2_pe_simple_lst_forward.11} parent=35 // pred_check
        %p1897 = pneg %p127
      $region38: #{sam2_pe_simple_lst_forward.11} parent=35 // pred_check_branch
        %1899 = sbr.rel (%p1897) target = $region40
      $region39: #{sam2_pe_simple_lst_forward.11} parent=35 // pred_region
        _
      $region40: #{sam2_pe_simple_lst_forward.11} parent=35 // pred_fallthru
        _
    $region36: #{sam2_pe_simple_lst_forward.11} parent=5 // pred_fallthru
      _
    %p1900 = scmp.le.s32.totalorder 2, %s10
    // Predicated region
    $region41: #{sam2_pe_simple_lst_forward.11} parent=5 // pred_check
      %p1901 = pneg %p1900
    $region42: #{sam2_pe_simple_lst_forward.11} parent=5 // pred_check_branch
      %1903 = sbr.rel (%p1901) target = $region44
    $region43: #{sam2_pe_simple_lst_forward.11} parent=5 // pred_region
      %s1904 = ssub.s32 %s10, 2
      // Predicated region
      $region45: #{sam2_pe_simple_lst_forward.11} parent=43 // pred_check
        %p1905 = pneg %p133
      $region46: #{sam2_pe_simple_lst_forward.11} parent=43 // pred_check_branch
        %1907 = sbr.rel (%p1905) target = $region48
      $region47: #{sam2_pe_simple_lst_forward.11} parent=43 // pred_region
        %p1908 = scmp.lt.s32.totalorder %s16, 1
        %s1909 = scalar_select %p1908, %s16, 1
        %s1910 = smul.addr %s1909, 8
        %s1911 = smul.addr %s1910, 8
        %s1912 = scalar_lea.vmem %s4, %s1911
      $region48: #{sam2_pe_simple_lst_forward.11} parent=43 // pred_fallthru
        _
    $region44: #{sam2_pe_simple_lst_forward.11} parent=5 // pred_fallthru
      _
  $region6: #{sam2_pe_simple_lst_forward.11} parent=0 // loop_footer
    %s14 = sadd.s32 1, %s10
  $region7: #{sam2_pe_simple_lst_forward.11} parent=0 // loop_footer_branch
    %9 = sbr.rel target = $region3
  $region8: #{sam2_pe_simple_lst_forward.11} parent=0 // loop_exit
    _

// kernel: sam2_pe_simple_lst_forward.12
$region0: #{sam2_pe_simple_lst_forward.12}
  #allocation0 [shape = 'u32[]', space=smem, size = 0x4, offset = 0x4, fixed_abs, tag = 'smem constant byte address 0x4 - core index']
  #allocation1 [shape = 'u32[144,128]{1,0:T(1,128)}', space=vmem, size = 0x12000, scoped, tag = 'internal scratch']
  %s0 = inlined_call_operand.vmem [shape: f32[128,128], index: 0, kind: input, shape index: {}]
  %s1 = inlined_call_operand.vmem [shape: f32[1,128], index: 1, kind: input, shape index: {}]
  %s2 = inlined_call_operand.vmem [shape: f32[1,128], index: 2, kind: input, shape index: {}]
  %s3 = inlined_call_operand.vmem [shape: bf16[128,512], index: 3, kind: input, shape index: {}]
  %s4 = inlined_call_operand.vmem [shape: f32[1,512], index: 4, kind: input, shape index: {}]
  %s5 = inlined_call_operand.vmem [shape: bf16[128,512], index: 5, kind: output, shape index: {}]
  %s6 = sld [smem:[#allocation0]]
  $region30: #{sam2_pe_simple_lst_forward.12} parent=0
    _
  %s8 = ssub.s32 1, %s6
  %s9 = scalar_select 0, %s8, %s6
  // Predicated region
  $region2: #{sam2_pe_simple_lst_forward.12} parent=0 // pred_check
    _
  $region3: #{sam2_pe_simple_lst_forward.12} parent=0 // pred_check_branch
    %11 = sbr.rel (0) target = $region5
  $region4: #{sam2_pe_simple_lst_forward.12} parent=0 // pred_region
    _
  $region5: #{sam2_pe_simple_lst_forward.12} parent=0 // pred_fallthru
    _
  // Predicated region
  $region6: #{sam2_pe_simple_lst_forward.12} parent=0 // pred_check
    _
  $region7: #{sam2_pe_simple_lst_forward.12} parent=0 // pred_check_branch
    %13 = sbr.rel (0) target = $region9
  $region8: #{sam2_pe_simple_lst_forward.12} parent=0 // pred_region
    _
  $region9: #{sam2_pe_simple_lst_forward.12} parent=0 // pred_fallthru
    _
  // Predicated region
  $region10: #{sam2_pe_simple_lst_forward.12} parent=0 // pred_check
    _
  $region11: #{sam2_pe_simple_lst_forward.12} parent=0 // pred_check_branch
    %15 = sbr.rel (0) target = $region13
  $region12: #{sam2_pe_simple_lst_forward.12} parent=0 // pred_region
    _
  $region13: #{sam2_pe_simple_lst_forward.12} parent=0 // pred_fallthru
    _
  // Predicated region
  $region14: #{sam2_pe_simple_lst_forward.12} parent=0 // pred_check
    _
  $region15: #{sam2_pe_simple_lst_forward.12} parent=0 // pred_check_branch
    %17 = sbr.rel (0) target = $region17
  $region16: #{sam2_pe_simple_lst_forward.12} parent=0 // pred_region
    _
  $region17: #{sam2_pe_simple_lst_forward.12} parent=0 // pred_fallthru
    _
  // Predicated region
  $region18: #{sam2_pe_simple_lst_forward.12} parent=0 // pred_check
    _
  $region19: #{sam2_pe_simple_lst_forward.12} parent=0 // pred_check_branch
    %19 = sbr.rel (0) target = $region21
  $region20: #{sam2_pe_simple_lst_forward.12} parent=0 // pred_region
    _
  $region21: #{sam2_pe_simple_lst_forward.12} parent=0 // pred_fallthru
    _
  %v21 = vld [vmem:[%s0] sm:$0xff]
  %v22 = vld [vmem:[%s0 + $0x8] sm:$0xff]
  %v23 = vld [vmem:[%s0 + $0x10] sm:$0xff]
  %v24 = vld [vmem:[%s0 + $0x18] sm:$0xff]
  %v25 = vld [vmem:[%s0 + $0x20] sm:$0xff]
  %v26 = vld [vmem:[%s0 + $0x28] sm:$0xff]
  %v27 = vld [vmem:[%s0 + $0x30] sm:$0xff]
  %v28 = vld [vmem:[%s0 + $0x38] sm:$0xff]
  %v29 = vld [vmem:[%s0 + $0x40] sm:$0xff]
  %v30 = vld [vmem:[%s0 + $0x48] sm:$0xff]
  %v31 = vld [vmem:[%s0 + $0x50] sm:$0xff]
  %v32 = vld [vmem:[%s0 + $0x58] sm:$0xff]
  %v33 = vld [vmem:[%s0 + $0x60] sm:$0xff]
  %v34 = vld [vmem:[%s0 + $0x68] sm:$0xff]
  %v35 = vld [vmem:[%s0 + $0x70] sm:$0xff]
  %v36 = vld [vmem:[%s0 + $0x78] sm:$0xff]
  %37 = vadd.xlane.f32.xlu0 %v21
  %v38 = vpop.xlane.xlu0 %37
  %39 = vadd.xlane.f32.xlu0 %v22
  %v40 = vpop.xlane.xlu0 %39
  %41 = vadd.xlane.f32.xlu0 %v23
  %v42 = vpop.xlane.xlu0 %41
  %43 = vadd.xlane.f32.xlu0 %v24
  %v44 = vpop.xlane.xlu0 %43
  %45 = vadd.xlane.f32.xlu0 %v25
  %v46 = vpop.xlane.xlu0 %45
  %47 = vadd.xlane.f32.xlu0 %v26
  %v48 = vpop.xlane.xlu0 %47
  %49 = vadd.xlane.f32.xlu0 %v27
  %v50 = vpop.xlane.xlu0 %49
  %51 = vadd.xlane.f32.xlu0 %v28
  %v52 = vpop.xlane.xlu0 %51
  %53 = vadd.xlane.f32.xlu0 %v29
  %v54 = vpop.xlane.xlu0 %53
  %55 = vadd.xlane.f32.xlu0 %v30
  %v56 = vpop.xlane.xlu0 %55
  %57 = vadd.xlane.f32.xlu0 %v31
  %v58 = vpop.xlane.xlu0 %57
  %59 = vadd.xlane.f32.xlu0 %v32
  %v60 = vpop.xlane.xlu0 %59
  %61 = vadd.xlane.f32.xlu0 %v33
  %v62 = vpop.xlane.xlu0 %61
  %63 = vadd.xlane.f32.xlu0 %v34
  %v64 = vpop.xlane.xlu0 %63
  %65 = vadd.xlane.f32.xlu0 %v35
  %v66 = vpop.xlane.xlu0 %65
  %67 = vadd.xlane.f32.xlu0 %v36
  %v68 = vpop.xlane.xlu0 %67
  %v69 = vrcp.pop 128.0
  %v70 = vmul.f32 %v38, %v69
  %v71 = vmul.f32 %v40, %v69
  %v72 = vmul.f32 %v42, %v69
  %v73 = vmul.f32 %v44, %v69
  %v74 = vmul.f32 %v46, %v69
  %v75 = vmul.f32 %v48, %v69
  %v76 = vmul.f32 %v50, %v69
  %v77 = vmul.f32 %v52, %v69
  %v78 = vmul.f32 %v54, %v69
  %v79 = vmul.f32 %v56, %v69
  %v80 = vmul.f32 %v58, %v69
  %v81 = vmul.f32 %v60, %v69
  %v82 = vmul.f32 %v62, %v69
  %v83 = vmul.f32 %v64, %v69
  %v84 = vmul.f32 %v66, %v69
  %v85 = vmul.f32 %v68, %v69
  %v86 = vsub.f32 %v21, %v70
  %v87 = vsub.f32 %v22, %v71
  %v88 = vsub.f32 %v23, %v72
  %v89 = vsub.f32 %v24, %v73
  %v90 = vsub.f32 %v25, %v74
  %v91 = vsub.f32 %v26, %v75
  %v92 = vsub.f32 %v27, %v76
  %v93 = vsub.f32 %v28, %v77
  %v94 = vsub.f32 %v29, %v78
  %v95 = vsub.f32 %v30, %v79
  %v96 = vsub.f32 %v31, %v80
  %v97 = vsub.f32 %v32, %v81
  %v98 = vsub.f32 %v33, %v82
  %v99 = vsub.f32 %v34, %v83
  %v100 = vsub.f32 %v35, %v84
  %v101 = vsub.f32 %v36, %v85
  %v102 = vmul.f32 %v86, %v86
  %v103 = vmul.f32 %v87, %v87
  %v104 = vmul.f32 %v88, %v88
  %v105 = vmul.f32 %v89, %v89
  %v106 = vmul.f32 %v90, %v90
  %v107 = vmul.f32 %v91, %v91
  %v108 = vmul.f32 %v92, %v92
  %v109 = vmul.f32 %v93, %v93
  %v110 = vmul.f32 %v94, %v94
  %v111 = vmul.f32 %v95, %v95
  %v112 = vmul.f32 %v96, %v96
  %v113 = vmul.f32 %v97, %v97
  %v114 = vmul.f32 %v98, %v98
  %v115 = vmul.f32 %v99, %v99
  %v116 = vmul.f32 %v100, %v100
  %v117 = vmul.f32 %v101, %v101
  %118 = vadd.xlane.f32.xlu0 %v102
  %v119 = vpop.xlane.xlu0 %118
  %120 = vadd.xlane.f32.xlu0 %v103
  %v121 = vpop.xlane.xlu0 %120
  %122 = vadd.xlane.f32.xlu0 %v104
  %v123 = vpop.xlane.xlu0 %122
  %124 = vadd.xlane.f32.xlu0 %v105
  %v125 = vpop.xlane.xlu0 %124
  %126 = vadd.xlane.f32.xlu0 %v106
  %v127 = vpop.xlane.xlu0 %126
  %128 = vadd.xlane.f32.xlu0 %v107
  %v129 = vpop.xlane.xlu0 %128
  %130 = vadd.xlane.f32.xlu0 %v108
  %v131 = vpop.xlane.xlu0 %130
  %132 = vadd.xlane.f32.xlu0 %v109
  %v133 = vpop.xlane.xlu0 %132
  %134 = vadd.xlane.f32.xlu0 %v110
  %v135 = vpop.xlane.xlu0 %134
  %136 = vadd.xlane.f32.xlu0 %v111
  %v137 = vpop.xlane.xlu0 %136
  %138 = vadd.xlane.f32.xlu0 %v112
  %v139 = vpop.xlane.xlu0 %138
  %140 = vadd.xlane.f32.xlu0 %v113
  %v141 = vpop.xlane.xlu0 %140
  %142 = vadd.xlane.f32.xlu0 %v114
  %v143 = vpop.xlane.xlu0 %142
  %144 = vadd.xlane.f32.xlu0 %v115
  %v145 = vpop.xlane.xlu0 %144
  %146 = vadd.xlane.f32.xlu0 %v116
  %v147 = vpop.xlane.xlu0 %146
  %148 = vadd.xlane.f32.xlu0 %v117
  %v149 = vpop.xlane.xlu0 %148
  %v150 = vmul.f32 %v119, %v69
  %v151 = vmul.f32 %v121, %v69
  %v152 = vmul.f32 %v123, %v69
  %v153 = vmul.f32 %v125, %v69
  %v154 = vmul.f32 %v127, %v69
  %v155 = vmul.f32 %v129, %v69
  %v156 = vmul.f32 %v131, %v69
  %v157 = vmul.f32 %v133, %v69
  %v158 = vmul.f32 %v135, %v69
  %v159 = vmul.f32 %v137, %v69
  %v160 = vmul.f32 %v139, %v69
  %v161 = vmul.f32 %v141, %v69
  %v162 = vmul.f32 %v143, %v69
  %v163 = vmul.f32 %v145, %v69
  %v164 = vmul.f32 %v147, %v69
  %v165 = vmul.f32 %v149, %v69
  %v166 = vadd.f32 %v150, 1e-06
  %v167 = vadd.f32 %v151, 1e-06
  %v168 = vadd.f32 %v152, 1e-06
  %v169 = vadd.f32 %v153, 1e-06
  %v170 = vadd.f32 %v154, 1e-06
  %v171 = vadd.f32 %v155, 1e-06
  %v172 = vadd.f32 %v156, 1e-06
  %v173 = vadd.f32 %v157, 1e-06
  %v174 = vadd.f32 %v158, 1e-06
  %v175 = vadd.f32 %v159, 1e-06
  %v176 = vadd.f32 %v160, 1e-06
  %v177 = vadd.f32 %v161, 1e-06
  %v178 = vadd.f32 %v162, 1e-06
  %v179 = vadd.f32 %v163, 1e-06
  %v180 = vadd.f32 %v164, 1e-06
  %v181 = vadd.f32 %v165, 1e-06
  %v182 = vrsqrt.pop %v166
  %v183 = vrsqrt.pop %v167
  %v184 = vrsqrt.pop %v168
  %v185 = vrsqrt.pop %v169
  %v186 = vrsqrt.pop %v170
  %v187 = vrsqrt.pop %v171
  %v188 = vrsqrt.pop %v172
  %v189 = vrsqrt.pop %v173
  %v190 = vrsqrt.pop %v174
  %v191 = vrsqrt.pop %v175
  %v192 = vrsqrt.pop %v176
  %v193 = vrsqrt.pop %v177
  %v194 = vrsqrt.pop %v178
  %v195 = vrsqrt.pop %v179
  %v196 = vrsqrt.pop %v180
  %v197 = vrsqrt.pop %v181
  %v198 = vmul.f32 %v86, %v182
  %v199 = vmul.f32 %v87, %v183
  %v200 = vmul.f32 %v88, %v184
  %v201 = vmul.f32 %v89, %v185
  %v202 = vmul.f32 %v90, %v186
  %v203 = vmul.f32 %v91, %v187
  %v204 = vmul.f32 %v92, %v188
  %v205 = vmul.f32 %v93, %v189
  %v206 = vmul.f32 %v94, %v190
  %v207 = vmul.f32 %v95, %v191
  %v208 = vmul.f32 %v96, %v192
  %v209 = vmul.f32 %v97, %v193
  %v210 = vmul.f32 %v98, %v194
  %v211 = vmul.f32 %v99, %v195
  %v212 = vmul.f32 %v100, %v196
  %v213 = vmul.f32 %v101, %v197
  %v214 = vld [vmem:[%s1] sm:$0x1]
  %v216 = vlaneseq
  %v217 = vshrl.u32 %v216, 7
  %v218 = vsub.s32 0, %v217
  %v219 = vrot.slane %v214, %v218
  %v221 = vmul.f32 %v198, %v219
  %v222 = vmul.f32 %v199, %v219
  %v223 = vmul.f32 %v200, %v219
  %v224 = vmul.f32 %v201, %v219
  %v225 = vmul.f32 %v202, %v219
  %v226 = vmul.f32 %v203, %v219
  %v227 = vmul.f32 %v204, %v219
  %v228 = vmul.f32 %v205, %v219
  %v229 = vmul.f32 %v206, %v219
  %v230 = vmul.f32 %v207, %v219
  %v231 = vmul.f32 %v208, %v219
  %v232 = vmul.f32 %v209, %v219
  %v233 = vmul.f32 %v210, %v219
  %v234 = vmul.f32 %v211, %v219
  %v235 = vmul.f32 %v212, %v219
  %v236 = vmul.f32 %v213, %v219
  %v237 = vld [vmem:[%s2] sm:$0x1]
  %v239 = vlaneseq
  %v240 = vshrl.u32 %v239, 7
  %v241 = vsub.s32 0, %v240
  %v242 = vrot.slane %v237, %v241
  %v244 = vadd.f32 %v221, %v242
  %v245 = vadd.f32 %v222, %v242
  %v246 = vadd.f32 %v223, %v242
  %v247 = vadd.f32 %v224, %v242
  %v248 = vadd.f32 %v225, %v242
  %v249 = vadd.f32 %v226, %v242
  %v250 = vadd.f32 %v227, %v242
  %v251 = vadd.f32 %v228, %v242
  %v252 = vadd.f32 %v229, %v242
  %v253 = vadd.f32 %v230, %v242
  %v254 = vadd.f32 %v231, %v242
  %v255 = vadd.f32 %v232, %v242
  %v256 = vadd.f32 %v233, %v242
  %v257 = vadd.f32 %v234, %v242
  %v258 = vadd.f32 %v235, %v242
  %v259 = vadd.f32 %v236, %v242
  %v260 = vpack.c.bf16 %v245, %v244
  %v261 = vpack.c.bf16 %v247, %v246
  %v262 = vpack.c.bf16 %v249, %v248
  %v263 = vpack.c.bf16 %v251, %v250
  %v264 = vpack.c.bf16 %v253, %v252
  %v265 = vpack.c.bf16 %v255, %v254
  %v266 = vpack.c.bf16 %v257, %v256
  %v267 = vpack.c.bf16 %v259, %v258
  %v268 = vld [vmem:[%s3] sm:$0xff]
  %v269 = vld [vmem:[%s3 + $0x8] sm:$0xff]
  %v270 = vld [vmem:[%s3 + $0x10] sm:$0xff]
  %v271 = vld [vmem:[%s3 + $0x18] sm:$0xff]
  %v272 = vld [vmem:[%s3 + $0x20] sm:$0xff]
  %v273 = vld [vmem:[%s3 + $0x28] sm:$0xff]
  %v274 = vld [vmem:[%s3 + $0x30] sm:$0xff]
  %v275 = vld [vmem:[%s3 + $0x38] sm:$0xff]
  %v276 = vld [vmem:[%s3 + $0x40] sm:$0xff]
  %v277 = vld [vmem:[%s3 + $0x48] sm:$0xff]
  %v278 = vld [vmem:[%s3 + $0x50] sm:$0xff]
  %v279 = vld [vmem:[%s3 + $0x58] sm:$0xff]
  %v280 = vld [vmem:[%s3 + $0x60] sm:$0xff]
  %v281 = vld [vmem:[%s3 + $0x68] sm:$0xff]
  %v282 = vld [vmem:[%s3 + $0x70] sm:$0xff]
  %v283 = vld [vmem:[%s3 + $0x78] sm:$0xff]
  %v284 = vld [vmem:[%s3 + $0x80] sm:$0xff]
  %v285 = vld [vmem:[%s3 + $0x88] sm:$0xff]
  %v286 = vld [vmem:[%s3 + $0x90] sm:$0xff]
  %v287 = vld [vmem:[%s3 + $0x98] sm:$0xff]
  %v288 = vld [vmem:[%s3 + $0xa0] sm:$0xff]
  %v289 = vld [vmem:[%s3 + $0xa8] sm:$0xff]
  %v290 = vld [vmem:[%s3 + $0xb0] sm:$0xff]
  %v291 = vld [vmem:[%s3 + $0xb8] sm:$0xff]
  %v292 = vld [vmem:[%s3 + $0xc0] sm:$0xff]
  %v293 = vld [vmem:[%s3 + $0xc8] sm:$0xff]
  %v294 = vld [vmem:[%s3 + $0xd0] sm:$0xff]
  %v295 = vld [vmem:[%s3 + $0xd8] sm:$0xff]
  %v296 = vld [vmem:[%s3 + $0xe0] sm:$0xff]
  %v297 = vld [vmem:[%s3 + $0xe8] sm:$0xff]
  %v298 = vld [vmem:[%s3 + $0xf0] sm:$0xff]
  %v299 = vld [vmem:[%s3 + $0xf8] sm:$0xff]
  %v300 = vld [vmem:[%s4] sm:$0xf]
  %v302 = vlaneseq
  %v303 = vshrl.u32 %v302, 7
  %v304 = vsub.s32 0, %v303
  %v305 = vrot.slane %v300, %v304
  %v306 = vlaneseq
  %v307 = vshrl.u32 %v306, 7
  %v308 = vsub.s32 1, %v307
  %v309 = vrot.slane %v300, %v308
  %v310 = vlaneseq
  %v311 = vshrl.u32 %v310, 7
  %v312 = vsub.s32 2, %v311
  %v313 = vrot.slane %v300, %v312
  %v314 = vlaneseq
  %v315 = vshrl.u32 %v314, 7
  %v316 = vsub.s32 3, %v315
  %v317 = vrot.slane %v300, %v316
  %v354 = vunpack.c.l.b16 %v268
  %v355 = vunpack.c.h.b16 %v268
  %v356 = vunpack.c.l.b16 %v269
  %v357 = vunpack.c.h.b16 %v269
  %v358 = vunpack.c.l.b16 %v270
  %v359 = vunpack.c.h.b16 %v270
  %v360 = vunpack.c.l.b16 %v271
  %v361 = vunpack.c.h.b16 %v271
  %v362 = vunpack.c.l.b16 %v272
  %v363 = vunpack.c.h.b16 %v272
  %v364 = vunpack.c.l.b16 %v273
  %v365 = vunpack.c.h.b16 %v273
  %v366 = vunpack.c.l.b16 %v274
  %v367 = vunpack.c.h.b16 %v274
  %v368 = vunpack.c.l.b16 %v275
  %v369 = vunpack.c.h.b16 %v275
  %v370 = vunpack.c.l.b16 %v276
  %v371 = vunpack.c.h.b16 %v276
  %v372 = vunpack.c.l.b16 %v277
  %v373 = vunpack.c.h.b16 %v277
  %v374 = vunpack.c.l.b16 %v278
  %v375 = vunpack.c.h.b16 %v278
  %v376 = vunpack.c.l.b16 %v279
  %v377 = vunpack.c.h.b16 %v279
  %v378 = vunpack.c.l.b16 %v280
  %v379 = vunpack.c.h.b16 %v280
  %v380 = vunpack.c.l.b16 %v281
  %v381 = vunpack.c.h.b16 %v281
  %v382 = vunpack.c.l.b16 %v282
  %v383 = vunpack.c.h.b16 %v282
  %v384 = vunpack.c.l.b16 %v283
  %v385 = vunpack.c.h.b16 %v283
  %v386 = vunpack.c.l.b16 %v284
  %v387 = vunpack.c.h.b16 %v284
  %v388 = vunpack.c.l.b16 %v285
  %v389 = vunpack.c.h.b16 %v285
  %v390 = vunpack.c.l.b16 %v286
  %v391 = vunpack.c.h.b16 %v286
  %v392 = vunpack.c.l.b16 %v287
  %v393 = vunpack.c.h.b16 %v287
  %v394 = vunpack.c.l.b16 %v288
  %v395 = vunpack.c.h.b16 %v288
  %v396 = vunpack.c.l.b16 %v289
  %v397 = vunpack.c.h.b16 %v289
  %v398 = vunpack.c.l.b16 %v290
  %v399 = vunpack.c.h.b16 %v290
  %v400 = vunpack.c.l.b16 %v291
  %v401 = vunpack.c.h.b16 %v291
  %v402 = vunpack.c.l.b16 %v292
  %v403 = vunpack.c.h.b16 %v292
  %v404 = vunpack.c.l.b16 %v293
  %v405 = vunpack.c.h.b16 %v293
  %v406 = vunpack.c.l.b16 %v294
  %v407 = vunpack.c.h.b16 %v294
  %v408 = vunpack.c.l.b16 %v295
  %v409 = vunpack.c.h.b16 %v295
  %v410 = vunpack.c.l.b16 %v296
  %v411 = vunpack.c.h.b16 %v296
  %v412 = vunpack.c.l.b16 %v297
  %v413 = vunpack.c.h.b16 %v297
  %v414 = vunpack.c.l.b16 %v298
  %v415 = vunpack.c.h.b16 %v298
  %v416 = vunpack.c.l.b16 %v299
  %v417 = vunpack.c.h.b16 %v299
  %v418 = vpack.c.b16 %v358, %v354
  %v419 = vpack.c.b16 %v359, %v355
  %v420 = vpack.c.b16 %v360, %v356
  %v421 = vpack.c.b16 %v361, %v357
  %v422 = vpack.c.b16 %v366, %v362
  %v423 = vpack.c.b16 %v367, %v363
  %v424 = vpack.c.b16 %v368, %v364
  %v425 = vpack.c.b16 %v369, %v365
  %v426 = vpack.c.b16 %v374, %v370
  %v427 = vpack.c.b16 %v375, %v371
  %v428 = vpack.c.b16 %v376, %v372
  %v429 = vpack.c.b16 %v377, %v373
  %v430 = vpack.c.b16 %v382, %v378
  %v431 = vpack.c.b16 %v383, %v379
  %v432 = vpack.c.b16 %v384, %v380
  %v433 = vpack.c.b16 %v385, %v381
  %v434 = vpack.c.b16 %v390, %v386
  %v435 = vpack.c.b16 %v391, %v387
  %v436 = vpack.c.b16 %v392, %v388
  %v437 = vpack.c.b16 %v393, %v389
  %v438 = vpack.c.b16 %v398, %v394
  %v439 = vpack.c.b16 %v399, %v395
  %v440 = vpack.c.b16 %v400, %v396
  %v441 = vpack.c.b16 %v401, %v397
  %v442 = vpack.c.b16 %v406, %v402
  %v443 = vpack.c.b16 %v407, %v403
  %v444 = vpack.c.b16 %v408, %v404
  %v445 = vpack.c.b16 %v409, %v405
  %v446 = vpack.c.b16 %v414, %v410
  %v447 = vpack.c.b16 %v415, %v411
  %v448 = vpack.c.b16 %v416, %v412
  %v449 = vpack.c.b16 %v417, %v413
  %482 = vmatprep.subr.bf16.mxu0 %v447
  %483 = vmatpush1.bf16.msra.mxu0 %v446
  %484 = vmatprep.subr.bf16.mxu0 %v443
  %485 = vmatpush1.bf16.msra.mxu0 %v442
  %486 = vmatprep.subr.bf16.mxu0 %v439
  %487 = vmatpush1.bf16.msra.mxu0 %v438
  %488 = vmatprep.subr.bf16.mxu0 %v435
  %489 = vmatpush1.bf16.msra.mxu0 %v434
  %490 = vmatprep.subr.bf16.mxu0 %v431
  %491 = vmatpush1.bf16.msra.mxu0 %v430
  %492 = vmatprep.subr.bf16.mxu0 %v427
  %493 = vmatpush1.bf16.msra.mxu0 %v426
  %494 = vmatprep.subr.bf16.mxu0 %v423
  %495 = vmatpush1.bf16.msra.mxu0 %v422
  %496 = vmatprep.subr.bf16.mxu0 %v419
  %497 = vmatpush1.bf16.msra.mxu0 %v418
  %498 = vmatprep.subr.bf16.mxu0 0
  %499 = vmatpush2.bf16.msra.mxu0 0
  %500 = vmatprep.subr.bf16.mxu0 0
  %501 = vmatpush2.bf16.msra.mxu0 0
  %502 = vmatprep.subr.bf16.mxu0 0
  %503 = vmatpush2.bf16.msra.mxu0 0
  %504 = vmatprep.subr.bf16.mxu0 0
  %505 = vmatpush2.bf16.msra.mxu0 0
  %506 = vmatprep.subr.bf16.mxu0 0
  %507 = vmatpush2.bf16.msra.mxu0 0
  %508 = vmatprep.subr.bf16.mxu0 0
  %509 = vmatpush2.bf16.msra.mxu0 0
  %510 = vmatprep.subr.bf16.mxu0 0
  %511 = vmatpush2.bf16.msra.mxu0 0
  %512 = vmatprep.subr.bf16.mxu0 0
  %513 = vmatpush2.bf16.msra.mxu0 0
  %514 = vmatprep.mubr.bf16.mxu0 0
  %515 = vmatmul.mubr.bf16.gmra.mxu0 %v260
  %v516 = vpop.f32.mrf.mxu0
  %v517 = vadd.f32 %v305, %v516
  %v518 = vpop.f32.mrf.mxu0
  %v519 = vadd.f32 %v309, %v518
  %v520 = vpop.f32.mrf.mxu0
  %v521 = vadd.f32 %v305, %v520
  %v522 = vpop.f32.mrf.mxu0
  %v523 = vadd.f32 %v309, %v522
  %524 = vmatprep.mubr.bf16.mxu0 0
  %525 = vmatmul.mubr.bf16.gmra.mxu0 %v261
  %v526 = vpop.f32.mrf.mxu0
  %v527 = vadd.f32 %v305, %v526
  %v528 = vpop.f32.mrf.mxu0
  %v529 = vadd.f32 %v309, %v528
  %v530 = vpop.f32.mrf.mxu0
  %v531 = vadd.f32 %v305, %v530
  %v532 = vpop.f32.mrf.mxu0
  %v533 = vadd.f32 %v309, %v532
  %534 = vmatprep.mubr.bf16.mxu0 0
  %535 = vmatmul.mubr.bf16.gmra.mxu0 %v262
  %v536 = vpop.f32.mrf.mxu0
  %v537 = vadd.f32 %v305, %v536
  %v538 = vpop.f32.mrf.mxu0
  %v539 = vadd.f32 %v309, %v538
  %v540 = vpop.f32.mrf.mxu0
  %v541 = vadd.f32 %v305, %v540
  %v542 = vpop.f32.mrf.mxu0
  %v543 = vadd.f32 %v309, %v542
  %544 = vmatprep.mubr.bf16.mxu0 0
  %545 = vmatmul.mubr.bf16.gmra.mxu0 %v263
  %v546 = vpop.f32.mrf.mxu0
  %v547 = vadd.f32 %v305, %v546
  %v548 = vpop.f32.mrf.mxu0
  %v549 = vadd.f32 %v309, %v548
  %v550 = vpop.f32.mrf.mxu0
  %v551 = vadd.f32 %v305, %v550
  %v552 = vpop.f32.mrf.mxu0
  %v553 = vadd.f32 %v309, %v552
  %554 = vmatprep.mubr.bf16.mxu0 0
  %555 = vmatmul.mubr.bf16.gmra.mxu0 %v264
  %v556 = vpop.f32.mrf.mxu0
  %v557 = vadd.f32 %v305, %v556
  %v558 = vpop.f32.mrf.mxu0
  %v559 = vadd.f32 %v309, %v558
  %v560 = vpop.f32.mrf.mxu0
  %v561 = vadd.f32 %v305, %v560
  %v562 = vpop.f32.mrf.mxu0
  %v563 = vadd.f32 %v309, %v562
  %564 = vmatprep.mubr.bf16.mxu0 0
  %565 = vmatmul.mubr.bf16.gmra.mxu0 %v265
  %v566 = vpop.f32.mrf.mxu0
  %v567 = vadd.f32 %v305, %v566
  %v568 = vpop.f32.mrf.mxu0
  %v569 = vadd.f32 %v309, %v568
  %v570 = vpop.f32.mrf.mxu0
  %v571 = vadd.f32 %v305, %v570
  %v572 = vpop.f32.mrf.mxu0
  %v573 = vadd.f32 %v309, %v572
  %574 = vmatprep.mubr.bf16.mxu0 0
  %575 = vmatmul.mubr.bf16.gmra.mxu0 %v266
  %v576 = vpop.f32.mrf.mxu0
  %v577 = vadd.f32 %v305, %v576
  %v578 = vpop.f32.mrf.mxu0
  %v579 = vadd.f32 %v309, %v578
  %v580 = vpop.f32.mrf.mxu0
  %v581 = vadd.f32 %v305, %v580
  %v582 = vpop.f32.mrf.mxu0
  %v583 = vadd.f32 %v309, %v582
  %584 = vmatprep.mubr.bf16.mxu0 0
  %585 = vmatmul.mubr.bf16.gmra.mxu0 %v267
  %v586 = vpop.f32.mrf.mxu0
  %v587 = vadd.f32 %v305, %v586
  %v588 = vpop.f32.mrf.mxu0
  %v589 = vadd.f32 %v309, %v588
  %v590 = vpop.f32.mrf.mxu0
  %v591 = vadd.f32 %v305, %v590
  %v592 = vpop.f32.mrf.mxu0
  %v593 = vadd.f32 %v309, %v592
  %594 = vdwg.mxu0
  %595 = vmatprep.subr.bf16.mxu0 %v449
  %596 = vmatpush1.bf16.msra.mxu0 %v448
  %597 = vmatprep.subr.bf16.mxu0 %v445
  %598 = vmatpush1.bf16.msra.mxu0 %v444
  %599 = vmatprep.subr.bf16.mxu0 %v441
  %600 = vmatpush1.bf16.msra.mxu0 %v440
  %601 = vmatprep.subr.bf16.mxu0 %v437
  %602 = vmatpush1.bf16.msra.mxu0 %v436
  %603 = vmatprep.subr.bf16.mxu0 %v433
  %604 = vmatpush1.bf16.msra.mxu0 %v432
  %605 = vmatprep.subr.bf16.mxu0 %v429
  %606 = vmatpush1.bf16.msra.mxu0 %v428
  %607 = vmatprep.subr.bf16.mxu0 %v425
  %608 = vmatpush1.bf16.msra.mxu0 %v424
  %609 = vmatprep.subr.bf16.mxu0 %v421
  %610 = vmatpush1.bf16.msra.mxu0 %v420
  %611 = vmatprep.subr.bf16.mxu0 0
  %612 = vmatpush2.bf16.msra.mxu0 0
  %613 = vmatprep.subr.bf16.mxu0 0
  %614 = vmatpush2.bf16.msra.mxu0 0
  %615 = vmatprep.subr.bf16.mxu0 0
  %616 = vmatpush2.bf16.msra.mxu0 0
  %617 = vmatprep.subr.bf16.mxu0 0
  %618 = vmatpush2.bf16.msra.mxu0 0
  %619 = vmatprep.subr.bf16.mxu0 0
  %620 = vmatpush2.bf16.msra.mxu0 0
  %621 = vmatprep.subr.bf16.mxu0 0
  %622 = vmatpush2.bf16.msra.mxu0 0
  %623 = vmatprep.subr.bf16.mxu0 0
  %624 = vmatpush2.bf16.msra.mxu0 0
  %625 = vmatprep.subr.bf16.mxu0 0
  %626 = vmatpush2.bf16.msra.mxu0 0
  %627 = vmatprep.mubr.bf16.mxu0 0
  %628 = vmatmul.mubr.bf16.gmra.mxu0 %v260
  %v629 = vpop.f32.mrf.mxu0
  %v630 = vadd.f32 %v313, %v629
  %v631 = vpop.f32.mrf.mxu0
  %v632 = vadd.f32 %v317, %v631
  %v633 = vpop.f32.mrf.mxu0
  %v634 = vadd.f32 %v313, %v633
  %v635 = vpop.f32.mrf.mxu0
  %v636 = vadd.f32 %v317, %v635
  %637 = vmatprep.mubr.bf16.mxu0 0
  %638 = vmatmul.mubr.bf16.gmra.mxu0 %v261
  %v639 = vpop.f32.mrf.mxu0
  %v640 = vadd.f32 %v313, %v639
  %v641 = vpop.f32.mrf.mxu0
  %v642 = vadd.f32 %v317, %v641
  %v643 = vpop.f32.mrf.mxu0
  %v644 = vadd.f32 %v313, %v643
  %v645 = vpop.f32.mrf.mxu0
  %v646 = vadd.f32 %v317, %v645
  %647 = vmatprep.mubr.bf16.mxu0 0
  %648 = vmatmul.mubr.bf16.gmra.mxu0 %v262
  %v649 = vpop.f32.mrf.mxu0
  %v650 = vadd.f32 %v313, %v649
  %v651 = vpop.f32.mrf.mxu0
  %v652 = vadd.f32 %v317, %v651
  %v653 = vpop.f32.mrf.mxu0
  %v654 = vadd.f32 %v313, %v653
  %v655 = vpop.f32.mrf.mxu0
  %v656 = vadd.f32 %v317, %v655
  %657 = vmatprep.mubr.bf16.mxu0 0
  %658 = vmatmul.mubr.bf16.gmra.mxu0 %v263
  %v659 = vpop.f32.mrf.mxu0
  %v660 = vadd.f32 %v313, %v659
  %v661 = vpop.f32.mrf.mxu0
  %v662 = vadd.f32 %v317, %v661
  %v663 = vpop.f32.mrf.mxu0
  %v664 = vadd.f32 %v313, %v663
  %v665 = vpop.f32.mrf.mxu0
  %v666 = vadd.f32 %v317, %v665
  %667 = vmatprep.mubr.bf16.mxu0 0
  %668 = vmatmul.mubr.bf16.gmra.mxu0 %v264
  %v669 = vpop.f32.mrf.mxu0
  %v670 = vadd.f32 %v313, %v669
  %v671 = vpop.f32.mrf.mxu0
  %v672 = vadd.f32 %v317, %v671
  %v673 = vpop.f32.mrf.mxu0
  %v674 = vadd.f32 %v313, %v673
  %v675 = vpop.f32.mrf.mxu0
  %v676 = vadd.f32 %v317, %v675
  %677 = vmatprep.mubr.bf16.mxu0 0
  %678 = vmatmul.mubr.bf16.gmra.mxu0 %v265
  %v679 = vpop.f32.mrf.mxu0
  %v680 = vadd.f32 %v313, %v679
  %v681 = vpop.f32.mrf.mxu0
  %v682 = vadd.f32 %v317, %v681
  %v683 = vpop.f32.mrf.mxu0
  %v684 = vadd.f32 %v313, %v683
  %v685 = vpop.f32.mrf.mxu0
  %v686 = vadd.f32 %v317, %v685
  %687 = vmatprep.mubr.bf16.mxu0 0
  %688 = vmatmul.mubr.bf16.gmra.mxu0 %v266
  %v689 = vpop.f32.mrf.mxu0
  %v690 = vadd.f32 %v313, %v689
  %v691 = vpop.f32.mrf.mxu0
  %v692 = vadd.f32 %v317, %v691
  %v693 = vpop.f32.mrf.mxu0
  %v694 = vadd.f32 %v313, %v693
  %v695 = vpop.f32.mrf.mxu0
  %v696 = vadd.f32 %v317, %v695
  %697 = vmatprep.mubr.bf16.mxu0 0
  %698 = vmatmul.mubr.bf16.gmra.mxu0 %v267
  %v699 = vpop.f32.mrf.mxu0
  %v700 = vadd.f32 %v313, %v699
  %v701 = vpop.f32.mrf.mxu0
  %v702 = vadd.f32 %v317, %v701
  %v703 = vpop.f32.mrf.mxu0
  %v704 = vadd.f32 %v313, %v703
  %v705 = vpop.f32.mrf.mxu0
  %v706 = vadd.f32 %v317, %v705
  %707 = vdwg.mxu0
  %v708 = vmul.f32 %v517, 0.5
  %v709 = vmul.f32 %v519, 0.5
  %v710 = vmul.f32 %v630, 0.5
  %v711 = vmul.f32 %v632, 0.5
  %v712 = vmul.f32 %v521, 0.5
  %v713 = vmul.f32 %v523, 0.5
  %v714 = vmul.f32 %v634, 0.5
  %v715 = vmul.f32 %v636, 0.5
  %v716 = vmul.f32 %v527, 0.5
  %v717 = vmul.f32 %v529, 0.5
  %v718 = vmul.f32 %v640, 0.5
  %v719 = vmul.f32 %v642, 0.5
  %v720 = vmul.f32 %v531, 0.5
  %v721 = vmul.f32 %v533, 0.5
  %v722 = vmul.f32 %v644, 0.5
  %v723 = vmul.f32 %v646, 0.5
  %v724 = vmul.f32 %v537, 0.5
  %v725 = vmul.f32 %v539, 0.5
  %v726 = vmul.f32 %v650, 0.5
  %v727 = vmul.f32 %v652, 0.5
  %v728 = vmul.f32 %v541, 0.5
  %v729 = vmul.f32 %v543, 0.5
  %v730 = vmul.f32 %v654, 0.5
  %v731 = vmul.f32 %v656, 0.5
  %v732 = vmul.f32 %v547, 0.5
  %v733 = vmul.f32 %v549, 0.5
  %v734 = vmul.f32 %v660, 0.5
  %v735 = vmul.f32 %v662, 0.5
  %v736 = vmul.f32 %v551, 0.5
  %v737 = vmul.f32 %v553, 0.5
  %v738 = vmul.f32 %v664, 0.5
  %v739 = vmul.f32 %v666, 0.5
  %v740 = vmul.f32 %v557, 0.5
  %v741 = vmul.f32 %v559, 0.5
  %v742 = vmul.f32 %v670, 0.5
  %v743 = vmul.f32 %v672, 0.5
  %v744 = vmul.f32 %v561, 0.5
  %v745 = vmul.f32 %v563, 0.5
  %v746 = vmul.f32 %v674, 0.5
  %v747 = vmul.f32 %v676, 0.5
  %v748 = vmul.f32 %v567, 0.5
  %v749 = vmul.f32 %v569, 0.5
  %v750 = vmul.f32 %v680, 0.5
  %v751 = vmul.f32 %v682, 0.5
  %v752 = vmul.f32 %v571, 0.5
  %v753 = vmul.f32 %v573, 0.5
  %v754 = vmul.f32 %v684, 0.5
  %v755 = vmul.f32 %v686, 0.5
  %v756 = vmul.f32 %v577, 0.5
  %v757 = vmul.f32 %v579, 0.5
  %v758 = vmul.f32 %v690, 0.5
  %v759 = vmul.f32 %v692, 0.5
  %v760 = vmul.f32 %v581, 0.5
  %v761 = vmul.f32 %v583, 0.5
  %v762 = vmul.f32 %v694, 0.5
  %v763 = vmul.f32 %v696, 0.5
  %v764 = vmul.f32 %v587, 0.5
  %v765 = vmul.f32 %v589, 0.5
  %v766 = vmul.f32 %v700, 0.5
  %v767 = vmul.f32 %v702, 0.5
  %v768 = vmul.f32 %v591, 0.5
  %v769 = vmul.f32 %v593, 0.5
  %v770 = vmul.f32 %v704, 0.5
  %v771 = vmul.f32 %v706, 0.5
  %v772 = vmul.f32 %v517, 0.70710677
  %v773 = vmul.f32 %v519, 0.70710677
  %v774 = vmul.f32 %v630, 0.70710677
  %v775 = vmul.f32 %v632, 0.70710677
  %v776 = vmul.f32 %v521, 0.70710677
  %v777 = vmul.f32 %v523, 0.70710677
  %v778 = vmul.f32 %v634, 0.70710677
  %v779 = vmul.f32 %v636, 0.70710677
  %v780 = vmul.f32 %v527, 0.70710677
  %v781 = vmul.f32 %v529, 0.70710677
  %v782 = vmul.f32 %v640, 0.70710677
  %v783 = vmul.f32 %v642, 0.70710677
  %v784 = vmul.f32 %v531, 0.70710677
  %v785 = vmul.f32 %v533, 0.70710677
  %v786 = vmul.f32 %v644, 0.70710677
  %v787 = vmul.f32 %v646, 0.70710677
  %v788 = vmul.f32 %v537, 0.70710677
  %v789 = vmul.f32 %v539, 0.70710677
  %v790 = vmul.f32 %v650, 0.70710677
  %v791 = vmul.f32 %v652, 0.70710677
  %v792 = vmul.f32 %v541, 0.70710677
  %v793 = vmul.f32 %v543, 0.70710677
  %v794 = vmul.f32 %v654, 0.70710677
  %v795 = vmul.f32 %v656, 0.70710677
  %v796 = vmul.f32 %v547, 0.70710677
  %v797 = vmul.f32 %v549, 0.70710677
  %v798 = vmul.f32 %v660, 0.70710677
  %v799 = vmul.f32 %v662, 0.70710677
  %v800 = vmul.f32 %v551, 0.70710677
  %v801 = vmul.f32 %v553, 0.70710677
  %v802 = vmul.f32 %v664, 0.70710677
  %v803 = vmul.f32 %v666, 0.70710677
  %v804 = vmul.f32 %v557, 0.70710677
  %v805 = vmul.f32 %v559, 0.70710677
  %v806 = vmul.f32 %v670, 0.70710677
  %v807 = vmul.f32 %v672, 0.70710677
  %v808 = vmul.f32 %v561, 0.70710677
  %v809 = vmul.f32 %v563, 0.70710677
  %v810 = vmul.f32 %v674, 0.70710677
  %v811 = vmul.f32 %v676, 0.70710677
  %v812 = vmul.f32 %v567, 0.70710677
  %v813 = vmul.f32 %v569, 0.70710677
  %v814 = vmul.f32 %v680, 0.70710677
  %v815 = vmul.f32 %v682, 0.70710677
  %v816 = vmul.f32 %v571, 0.70710677
  %v817 = vmul.f32 %v573, 0.70710677
  %v818 = vmul.f32 %v684, 0.70710677
  %v819 = vmul.f32 %v686, 0.70710677
  %v820 = vmul.f32 %v577, 0.70710677
  %v821 = vmul.f32 %v579, 0.70710677
  %v822 = vmul.f32 %v690, 0.70710677
  %v823 = vmul.f32 %v692, 0.70710677
  %v824 = vmul.f32 %v581, 0.70710677
  %v825 = vmul.f32 %v583, 0.70710677
  %v826 = vmul.f32 %v694, 0.70710677
  %v827 = vmul.f32 %v696, 0.70710677
  %v828 = vmul.f32 %v587, 0.70710677
  %v829 = vmul.f32 %v589, 0.70710677
  %v830 = vmul.f32 %v700, 0.70710677
  %v831 = vmul.f32 %v702, 0.70710677
  %v832 = vmul.f32 %v591, 0.70710677
  %v833 = vmul.f32 %v593, 0.70710677
  %v834 = vmul.f32 %v704, 0.70710677
  %v835 = vmul.f32 %v706, 0.70710677
  %v836 = verf.f32.pop %v772
  %v837 = verf.f32.pop %v773
  %v838 = verf.f32.pop %v774
  %v839 = verf.f32.pop %v775
  %v840 = verf.f32.pop %v776
  %v841 = verf.f32.pop %v777
  %v842 = verf.f32.pop %v778
  %v843 = verf.f32.pop %v779
  %v844 = verf.f32.pop %v780
  %v845 = verf.f32.pop %v781
  %v846 = verf.f32.pop %v782
  %v847 = verf.f32.pop %v783
  %v848 = verf.f32.pop %v784
  %v849 = verf.f32.pop %v785
  %v850 = verf.f32.pop %v786
  %v851 = verf.f32.pop %v787
  %v852 = verf.f32.pop %v788
  %v853 = verf.f32.pop %v789
  %v854 = verf.f32.pop %v790
  %v855 = verf.f32.pop %v791
  %v856 = verf.f32.pop %v792
  %v857 = verf.f32.pop %v793
  %v858 = verf.f32.pop %v794
  %v859 = verf.f32.pop %v795
  %v860 = verf.f32.pop %v796
  %v861 = verf.f32.pop %v797
  %v862 = verf.f32.pop %v798
  %v863 = verf.f32.pop %v799
  %v864 = verf.f32.pop %v800
  %v865 = verf.f32.pop %v801
  %v866 = verf.f32.pop %v802
  %v867 = verf.f32.pop %v803
  %v868 = verf.f32.pop %v804
  %v869 = verf.f32.pop %v805
  %v870 = verf.f32.pop %v806
  %v871 = verf.f32.pop %v807
  %v872 = verf.f32.pop %v808
  %v873 = verf.f32.pop %v809
  %v874 = verf.f32.pop %v810
  %v875 = verf.f32.pop %v811
  %v876 = verf.f32.pop %v812
  %v877 = verf.f32.pop %v813
  %v878 = verf.f32.pop %v814
  %v879 = verf.f32.pop %v815
  %v880 = verf.f32.pop %v816
  %v881 = verf.f32.pop %v817
  %v882 = verf.f32.pop %v818
  %v883 = verf.f32.pop %v819
  %v884 = verf.f32.pop %v820
  %v885 = verf.f32.pop %v821
  %v886 = verf.f32.pop %v822
  %v887 = verf.f32.pop %v823
  %v888 = verf.f32.pop %v824
  %v889 = verf.f32.pop %v825
  %v890 = verf.f32.pop %v826
  %v891 = verf.f32.pop %v827
  %v892 = verf.f32.pop %v828
  %v893 = verf.f32.pop %v829
  %v894 = verf.f32.pop %v830
  %v895 = verf.f32.pop %v831
  %v896 = verf.f32.pop %v832
  %v897 = verf.f32.pop %v833
  %v898 = verf.f32.pop %v834
  %v899 = verf.f32.pop %v835
  %v900 = vadd.f32 %v836, 1.0
  %v901 = vadd.f32 %v837, 1.0
  %v902 = vadd.f32 %v838, 1.0
  %v903 = vadd.f32 %v839, 1.0
  %v904 = vadd.f32 %v840, 1.0
  %v905 = vadd.f32 %v841, 1.0
  %v906 = vadd.f32 %v842, 1.0
  %v907 = vadd.f32 %v843, 1.0
  %v908 = vadd.f32 %v844, 1.0
  %v909 = vadd.f32 %v845, 1.0
  %v910 = vadd.f32 %v846, 1.0
  %v911 = vadd.f32 %v847, 1.0
  %v912 = vadd.f32 %v848, 1.0
  %v913 = vadd.f32 %v849, 1.0
  %v914 = vadd.f32 %v850, 1.0
  %v915 = vadd.f32 %v851, 1.0
  %v916 = vadd.f32 %v852, 1.0
  %v917 = vadd.f32 %v853, 1.0
  %v918 = vadd.f32 %v854, 1.0
  %v919 = vadd.f32 %v855, 1.0
  %v920 = vadd.f32 %v856, 1.0
  %v921 = vadd.f32 %v857, 1.0
  %v922 = vadd.f32 %v858, 1.0
  %v923 = vadd.f32 %v859, 1.0
  %v924 = vadd.f32 %v860, 1.0
  %v925 = vadd.f32 %v861, 1.0
  %v926 = vadd.f32 %v862, 1.0
  %v927 = vadd.f32 %v863, 1.0
  %v928 = vadd.f32 %v864, 1.0
  %v929 = vadd.f32 %v865, 1.0
  %v930 = vadd.f32 %v866, 1.0
  %v931 = vadd.f32 %v867, 1.0
  %v932 = vadd.f32 %v868, 1.0
  %v933 = vadd.f32 %v869, 1.0
  %v934 = vadd.f32 %v870, 1.0
  %v935 = vadd.f32 %v871, 1.0
  %v936 = vadd.f32 %v872, 1.0
  %v937 = vadd.f32 %v873, 1.0
  %v938 = vadd.f32 %v874, 1.0
  %v939 = vadd.f32 %v875, 1.0
  %v940 = vadd.f32 %v876, 1.0
  %v941 = vadd.f32 %v877, 1.0
  %v942 = vadd.f32 %v878, 1.0
  %v943 = vadd.f32 %v879, 1.0
  %v944 = vadd.f32 %v880, 1.0
  %v945 = vadd.f32 %v881, 1.0
  %v946 = vadd.f32 %v882, 1.0
  %v947 = vadd.f32 %v883, 1.0
  %v948 = vadd.f32 %v884, 1.0
  %v949 = vadd.f32 %v885, 1.0
  %v950 = vadd.f32 %v886, 1.0
  %v951 = vadd.f32 %v887, 1.0
  %v952 = vadd.f32 %v888, 1.0
  %v953 = vadd.f32 %v889, 1.0
  %v954 = vadd.f32 %v890, 1.0
  %v955 = vadd.f32 %v891, 1.0
  %v956 = vadd.f32 %v892, 1.0
  %v957 = vadd.f32 %v893, 1.0
  %v958 = vadd.f32 %v894, 1.0
  %v959 = vadd.f32 %v895, 1.0
  %v960 = vadd.f32 %v896, 1.0
  %v961 = vadd.f32 %v897, 1.0
  %v962 = vadd.f32 %v898, 1.0
  %v963 = vadd.f32 %v899, 1.0
  %v964 = vmul.f32 %v708, %v900
  %v965 = vmul.f32 %v709, %v901
  %v966 = vmul.f32 %v710, %v902
  %v967 = vmul.f32 %v711, %v903
  %v968 = vmul.f32 %v712, %v904
  %v969 = vmul.f32 %v713, %v905
  %v970 = vmul.f32 %v714, %v906
  %v971 = vmul.f32 %v715, %v907
  %v972 = vmul.f32 %v716, %v908
  %v973 = vmul.f32 %v717, %v909
  %v974 = vmul.f32 %v718, %v910
  %v975 = vmul.f32 %v719, %v911
  %v976 = vmul.f32 %v720, %v912
  %v977 = vmul.f32 %v721, %v913
  %v978 = vmul.f32 %v722, %v914
  %v979 = vmul.f32 %v723, %v915
  %v980 = vmul.f32 %v724, %v916
  %v981 = vmul.f32 %v725, %v917
  %v982 = vmul.f32 %v726, %v918
  %v983 = vmul.f32 %v727, %v919
  %v984 = vmul.f32 %v728, %v920
  %v985 = vmul.f32 %v729, %v921
  %v986 = vmul.f32 %v730, %v922
  %v987 = vmul.f32 %v731, %v923
  %v988 = vmul.f32 %v732, %v924
  %v989 = vmul.f32 %v733, %v925
  %v990 = vmul.f32 %v734, %v926
  %v991 = vmul.f32 %v735, %v927
  %v992 = vmul.f32 %v736, %v928
  %v993 = vmul.f32 %v737, %v929
  %v994 = vmul.f32 %v738, %v930
  %v995 = vmul.f32 %v739, %v931
  %v996 = vmul.f32 %v740, %v932
  %v997 = vmul.f32 %v741, %v933
  %v998 = vmul.f32 %v742, %v934
  %v999 = vmul.f32 %v743, %v935
  %v1000 = vmul.f32 %v744, %v936
  %v1001 = vmul.f32 %v745, %v937
  %v1002 = vmul.f32 %v746, %v938
  %v1003 = vmul.f32 %v747, %v939
  %v1004 = vmul.f32 %v748, %v940
  %v1005 = vmul.f32 %v749, %v941
  %v1006 = vmul.f32 %v750, %v942
  %v1007 = vmul.f32 %v751, %v943
  %v1008 = vmul.f32 %v752, %v944
  %v1009 = vmul.f32 %v753, %v945
  %v1010 = vmul.f32 %v754, %v946
  %v1011 = vmul.f32 %v755, %v947
  %v1012 = vmul.f32 %v756, %v948
  %v1013 = vmul.f32 %v757, %v949
  %v1014 = vmul.f32 %v758, %v950
  %v1015 = vmul.f32 %v759, %v951
  %v1016 = vmul.f32 %v760, %v952
  %v1017 = vmul.f32 %v761, %v953
  %v1018 = vmul.f32 %v762, %v954
  %v1019 = vmul.f32 %v763, %v955
  %v1020 = vmul.f32 %v764, %v956
  %v1021 = vmul.f32 %v765, %v957
  %v1022 = vmul.f32 %v766, %v958
  %v1023 = vmul.f32 %v767, %v959
  %v1024 = vmul.f32 %v768, %v960
  %v1025 = vmul.f32 %v769, %v961
  %v1026 = vmul.f32 %v770, %v962
  %v1027 = vmul.f32 %v771, %v963
  %v1028 = vpack.c.bf16 %v968, %v964
  %v1029 = vpack.c.bf16 %v969, %v965
  %v1030 = vpack.c.bf16 %v970, %v966
  %v1031 = vpack.c.bf16 %v971, %v967
  %v1032 = vpack.c.bf16 %v976, %v972
  %v1033 = vpack.c.bf16 %v977, %v973
  %v1034 = vpack.c.bf16 %v978, %v974
  %v1035 = vpack.c.bf16 %v979, %v975
  %v1036 = vpack.c.bf16 %v984, %v980
  %v1037 = vpack.c.bf16 %v985, %v981
  %v1038 = vpack.c.bf16 %v986, %v982
  %v1039 = vpack.c.bf16 %v987, %v983
  %v1040 = vpack.c.bf16 %v992, %v988
  %v1041 = vpack.c.bf16 %v993, %v989
  %v1042 = vpack.c.bf16 %v994, %v990
  %v1043 = vpack.c.bf16 %v995, %v991
  %v1044 = vpack.c.bf16 %v1000, %v996
  %v1045 = vpack.c.bf16 %v1001, %v997
  %v1046 = vpack.c.bf16 %v1002, %v998
  %v1047 = vpack.c.bf16 %v1003, %v999
  %v1048 = vpack.c.bf16 %v1008, %v1004
  %v1049 = vpack.c.bf16 %v1009, %v1005
  %v1050 = vpack.c.bf16 %v1010, %v1006
  %v1051 = vpack.c.bf16 %v1011, %v1007
  %v1052 = vpack.c.bf16 %v1016, %v1012
  %v1053 = vpack.c.bf16 %v1017, %v1013
  %v1054 = vpack.c.bf16 %v1018, %v1014
  %v1055 = vpack.c.bf16 %v1019, %v1015
  %v1056 = vpack.c.bf16 %v1024, %v1020
  %v1057 = vpack.c.bf16 %v1025, %v1021
  %v1058 = vpack.c.bf16 %v1026, %v1022
  %v1059 = vpack.c.bf16 %v1027, %v1023
  %v1092 = vunpack.c.l.b16 %v1028
  %v1093 = vunpack.c.l.b16 %v1029
  %v1094 = vunpack.c.l.b16 %v1030
  %v1095 = vunpack.c.l.b16 %v1031
  %v1096 = vunpack.c.h.b16 %v1028
  %v1097 = vunpack.c.h.b16 %v1029
  %v1098 = vunpack.c.h.b16 %v1030
  %v1099 = vunpack.c.h.b16 %v1031
  %v1100 = vunpack.c.l.b16 %v1032
  %v1101 = vunpack.c.l.b16 %v1033
  %v1102 = vunpack.c.l.b16 %v1034
  %v1103 = vunpack.c.l.b16 %v1035
  %v1104 = vunpack.c.h.b16 %v1032
  %v1105 = vunpack.c.h.b16 %v1033
  %v1106 = vunpack.c.h.b16 %v1034
  %v1107 = vunpack.c.h.b16 %v1035
  %v1108 = vunpack.c.l.b16 %v1036
  %v1109 = vunpack.c.l.b16 %v1037
  %v1110 = vunpack.c.l.b16 %v1038
  %v1111 = vunpack.c.l.b16 %v1039
  %v1112 = vunpack.c.h.b16 %v1036
  %v1113 = vunpack.c.h.b16 %v1037
  %v1114 = vunpack.c.h.b16 %v1038
  %v1115 = vunpack.c.h.b16 %v1039
  %v1116 = vunpack.c.l.b16 %v1040
  %v1117 = vunpack.c.l.b16 %v1041
  %v1118 = vunpack.c.l.b16 %v1042
  %v1119 = vunpack.c.l.b16 %v1043
  %v1120 = vunpack.c.h.b16 %v1040
  %v1121 = vunpack.c.h.b16 %v1041
  %v1122 = vunpack.c.h.b16 %v1042
  %v1123 = vunpack.c.h.b16 %v1043
  %v1124 = vunpack.c.l.b16 %v1044
  %v1125 = vunpack.c.l.b16 %v1045
  %v1126 = vunpack.c.l.b16 %v1046
  %v1127 = vunpack.c.l.b16 %v1047
  %v1128 = vunpack.c.h.b16 %v1044
  %v1129 = vunpack.c.h.b16 %v1045
  %v1130 = vunpack.c.h.b16 %v1046
  %v1131 = vunpack.c.h.b16 %v1047
  %v1132 = vunpack.c.l.b16 %v1048
  %v1133 = vunpack.c.l.b16 %v1049
  %v1134 = vunpack.c.l.b16 %v1050
  %v1135 = vunpack.c.l.b16 %v1051
  %v1136 = vunpack.c.h.b16 %v1048
  %v1137 = vunpack.c.h.b16 %v1049
  %v1138 = vunpack.c.h.b16 %v1050
  %v1139 = vunpack.c.h.b16 %v1051
  %v1140 = vunpack.c.l.b16 %v1052
  %v1141 = vunpack.c.l.b16 %v1053
  %v1142 = vunpack.c.l.b16 %v1054
  %v1143 = vunpack.c.l.b16 %v1055
  %v1144 = vunpack.c.h.b16 %v1052
  %v1145 = vunpack.c.h.b16 %v1053
  %v1146 = vunpack.c.h.b16 %v1054
  %v1147 = vunpack.c.h.b16 %v1055
  %v1148 = vunpack.c.l.b16 %v1056
  %v1149 = vunpack.c.l.b16 %v1057
  %v1150 = vunpack.c.l.b16 %v1058
  %v1151 = vunpack.c.l.b16 %v1059
  %v1152 = vunpack.c.h.b16 %v1056
  %v1153 = vunpack.c.h.b16 %v1057
  %v1154 = vunpack.c.h.b16 %v1058
  %v1155 = vunpack.c.h.b16 %v1059
  %v1156 = vpack.c.b16 %v1093, %v1092
  %v1157 = vpack.c.b16 %v1095, %v1094
  %v1158 = vpack.c.b16 %v1097, %v1096
  %v1159 = vpack.c.b16 %v1099, %v1098
  %v1160 = vpack.c.b16 %v1101, %v1100
  %v1161 = vpack.c.b16 %v1103, %v1102
  %v1162 = vpack.c.b16 %v1105, %v1104
  %v1163 = vpack.c.b16 %v1107, %v1106
  %v1164 = vpack.c.b16 %v1109, %v1108
  %v1165 = vpack.c.b16 %v1111, %v1110
  %v1166 = vpack.c.b16 %v1113, %v1112
  %v1167 = vpack.c.b16 %v1115, %v1114
  %v1168 = vpack.c.b16 %v1117, %v1116
  %v1169 = vpack.c.b16 %v1119, %v1118
  %v1170 = vpack.c.b16 %v1121, %v1120
  %v1171 = vpack.c.b16 %v1123, %v1122
  %v1172 = vpack.c.b16 %v1125, %v1124
  %v1173 = vpack.c.b16 %v1127, %v1126
  %v1174 = vpack.c.b16 %v1129, %v1128
  %v1175 = vpack.c.b16 %v1131, %v1130
  %v1176 = vpack.c.b16 %v1133, %v1132
  %v1177 = vpack.c.b16 %v1135, %v1134
  %v1178 = vpack.c.b16 %v1137, %v1136
  %v1179 = vpack.c.b16 %v1139, %v1138
  %v1180 = vpack.c.b16 %v1141, %v1140
  %v1181 = vpack.c.b16 %v1143, %v1142
  %v1182 = vpack.c.b16 %v1145, %v1144
  %v1183 = vpack.c.b16 %v1147, %v1146
  %v1184 = vpack.c.b16 %v1149, %v1148
  %v1185 = vpack.c.b16 %v1151, %v1150
  %v1186 = vpack.c.b16 %v1153, %v1152
  %v1187 = vpack.c.b16 %v1155, %v1154
  %1220 = vst [vmem:[%s5] sm:$0xff] %v1156
  %1221 = vst [vmem:[%s5 + $0x8] sm:$0xff] %v1157
  %1222 = vst [vmem:[%s5 + $0x10] sm:$0xff] %v1158
  %1223 = vst [vmem:[%s5 + $0x18] sm:$0xff] %v1159
  %1224 = vst [vmem:[%s5 + $0x20] sm:$0xff] %v1160
  %1225 = vst [vmem:[%s5 + $0x28] sm:$0xff] %v1161
  %1226 = vst [vmem:[%s5 + $0x30] sm:$0xff] %v1162
  %1227 = vst [vmem:[%s5 + $0x38] sm:$0xff] %v1163
  %1228 = vst [vmem:[%s5 + $0x40] sm:$0xff] %v1164
  %1229 = vst [vmem:[%s5 + $0x48] sm:$0xff] %v1165
  %1230 = vst [vmem:[%s5 + $0x50] sm:$0xff] %v1166
  %1231 = vst [vmem:[%s5 + $0x58] sm:$0xff] %v1167
  %1232 = vst [vmem:[%s5 + $0x60] sm:$0xff] %v1168
  %1233 = vst [vmem:[%s5 + $0x68] sm:$0xff] %v1169
  %1234 = vst [vmem:[%s5 + $0x70] sm:$0xff] %v1170
  %1235 = vst [vmem:[%s5 + $0x78] sm:$0xff] %v1171
  %1236 = vst [vmem:[%s5 + $0x80] sm:$0xff] %v1172
  %1237 = vst [vmem:[%s5 + $0x88] sm:$0xff] %v1173
  %1238 = vst [vmem:[%s5 + $0x90] sm:$0xff] %v1174
  %1239 = vst [vmem:[%s5 + $0x98] sm:$0xff] %v1175
  %1240 = vst [vmem:[%s5 + $0xa0] sm:$0xff] %v1176
  %1241 = vst [vmem:[%s5 + $0xa8] sm:$0xff] %v1177
  %1242 = vst [vmem:[%s5 + $0xb0] sm:$0xff] %v1178
  %1243 = vst [vmem:[%s5 + $0xb8] sm:$0xff] %v1179
  %1244 = vst [vmem:[%s5 + $0xc0] sm:$0xff] %v1180
  %1245 = vst [vmem:[%s5 + $0xc8] sm:$0xff] %v1181
  %1246 = vst [vmem:[%s5 + $0xd0] sm:$0xff] %v1182
  %1247 = vst [vmem:[%s5 + $0xd8] sm:$0xff] %v1183
  %1248 = vst [vmem:[%s5 + $0xe0] sm:$0xff] %v1184
  %1249 = vst [vmem:[%s5 + $0xe8] sm:$0xff] %v1185
  %1250 = vst [vmem:[%s5 + $0xf0] sm:$0xff] %v1186
  %1251 = vst [vmem:[%s5 + $0xf8] sm:$0xff] %v1187
  // Predicated region
  $region22: #{sam2_pe_simple_lst_forward.12} parent=0 // pred_check
    _
  $region23: #{sam2_pe_simple_lst_forward.12} parent=0 // pred_check_branch
    %1253 = sbr.rel (0) target = $region25
  $region24: #{sam2_pe_simple_lst_forward.12} parent=0 // pred_region
    _
  $region25: #{sam2_pe_simple_lst_forward.12} parent=0 // pred_fallthru
    _
  // Predicated region
  $region26: #{sam2_pe_simple_lst_forward.12} parent=0 // pred_check
    _
  $region27: #{sam2_pe_simple_lst_forward.12} parent=0 // pred_check_branch
    %1255 = sbr.rel (0) target = $region29
  $region28: #{sam2_pe_simple_lst_forward.12} parent=0 // pred_region
    _
  $region29: #{sam2_pe_simple_lst_forward.12} parent=0 // pred_fallthru
    _

// kernel: sam2_pe_simple_lst_forward.13
$region0: #{sam2_pe_simple_lst_forward.13}
  #allocation0 [shape = 'u32[]', space=smem, size = 0x4, offset = 0x4, fixed_abs, tag = 'smem constant byte address 0x4 - core index']
  #allocation1 [shape = 'u32[144,128]{1,0:T(1,128)}', space=vmem, size = 0x12000, scoped, tag = 'internal scratch']
  %s0 = inlined_call_operand.vmem [shape: bf16[128,512], index: 0, kind: input, shape index: {}]
  %s1 = inlined_call_operand.vmem [shape: bf16[512,128], index: 1, kind: input, shape index: {}]
  %s2 = inlined_call_operand.vmem [shape: f32[1,128], index: 2, kind: input, shape index: {}]
  %s3 = inlined_call_operand.vmem [shape: f32[128,128], index: 3, kind: input, shape index: {}]
  %s4 = inlined_call_operand.vmem [shape: f32[128,128], index: 4, kind: output, shape index: {}]
  %s5 = sld [smem:[#allocation0]]
  $region26: #{sam2_pe_simple_lst_forward.13} parent=0
    _
  %s7 = ssub.s32 1, %s5
  %s8 = scalar_select 0, %s7, %s5
  // Predicated region
  $region2: #{sam2_pe_simple_lst_forward.13} parent=0 // pred_check
    _
  $region3: #{sam2_pe_simple_lst_forward.13} parent=0 // pred_check_branch
    %10 = sbr.rel (0) target = $region5
  $region4: #{sam2_pe_simple_lst_forward.13} parent=0 // pred_region
    _
  $region5: #{sam2_pe_simple_lst_forward.13} parent=0 // pred_fallthru
    _
  // Predicated region
  $region6: #{sam2_pe_simple_lst_forward.13} parent=0 // pred_check
    _
  $region7: #{sam2_pe_simple_lst_forward.13} parent=0 // pred_check_branch
    %12 = sbr.rel (0) target = $region9
  $region8: #{sam2_pe_simple_lst_forward.13} parent=0 // pred_region
    _
  $region9: #{sam2_pe_simple_lst_forward.13} parent=0 // pred_fallthru
    _
  // Predicated region
  $region10: #{sam2_pe_simple_lst_forward.13} parent=0 // pred_check
    _
  $region11: #{sam2_pe_simple_lst_forward.13} parent=0 // pred_check_branch
    %14 = sbr.rel (0) target = $region13
  $region12: #{sam2_pe_simple_lst_forward.13} parent=0 // pred_region
    _
  $region13: #{sam2_pe_simple_lst_forward.13} parent=0 // pred_fallthru
    _
  // Predicated region
  $region14: #{sam2_pe_simple_lst_forward.13} parent=0 // pred_check
    _
  $region15: #{sam2_pe_simple_lst_forward.13} parent=0 // pred_check_branch
    %16 = sbr.rel (0) target = $region17
  $region16: #{sam2_pe_simple_lst_forward.13} parent=0 // pred_region
    _
  $region17: #{sam2_pe_simple_lst_forward.13} parent=0 // pred_fallthru
    _
  %v18 = vld [vmem:[%s0] sm:$0xff]
  %v19 = vld [vmem:[%s0 + $0x8] sm:$0xff]
  %v20 = vld [vmem:[%s0 + $0x10] sm:$0xff]
  %v21 = vld [vmem:[%s0 + $0x18] sm:$0xff]
  %v22 = vld [vmem:[%s0 + $0x20] sm:$0xff]
  %v23 = vld [vmem:[%s0 + $0x28] sm:$0xff]
  %v24 = vld [vmem:[%s0 + $0x30] sm:$0xff]
  %v25 = vld [vmem:[%s0 + $0x38] sm:$0xff]
  %v26 = vld [vmem:[%s0 + $0x40] sm:$0xff]
  %v27 = vld [vmem:[%s0 + $0x48] sm:$0xff]
  %v28 = vld [vmem:[%s0 + $0x50] sm:$0xff]
  %v29 = vld [vmem:[%s0 + $0x58] sm:$0xff]
  %v30 = vld [vmem:[%s0 + $0x60] sm:$0xff]
  %v31 = vld [vmem:[%s0 + $0x68] sm:$0xff]
  %v32 = vld [vmem:[%s0 + $0x70] sm:$0xff]
  %v33 = vld [vmem:[%s0 + $0x78] sm:$0xff]
  %v34 = vld [vmem:[%s0 + $0x80] sm:$0xff]
  %v35 = vld [vmem:[%s0 + $0x88] sm:$0xff]
  %v36 = vld [vmem:[%s0 + $0x90] sm:$0xff]
  %v37 = vld [vmem:[%s0 + $0x98] sm:$0xff]
  %v38 = vld [vmem:[%s0 + $0xa0] sm:$0xff]
  %v39 = vld [vmem:[%s0 + $0xa8] sm:$0xff]
  %v40 = vld [vmem:[%s0 + $0xb0] sm:$0xff]
  %v41 = vld [vmem:[%s0 + $0xb8] sm:$0xff]
  %v42 = vld [vmem:[%s0 + $0xc0] sm:$0xff]
  %v43 = vld [vmem:[%s0 + $0xc8] sm:$0xff]
  %v44 = vld [vmem:[%s0 + $0xd0] sm:$0xff]
  %v45 = vld [vmem:[%s0 + $0xd8] sm:$0xff]
  %v46 = vld [vmem:[%s0 + $0xe0] sm:$0xff]
  %v47 = vld [vmem:[%s0 + $0xe8] sm:$0xff]
  %v48 = vld [vmem:[%s0 + $0xf0] sm:$0xff]
  %v49 = vld [vmem:[%s0 + $0xf8] sm:$0xff]
  %v50 = vld [vmem:[%s1] sm:$0xf]
  %v51 = vld [vmem:[%s1 + $0x4] sm:$0xf]
  %v52 = vld [vmem:[%s1 + $0x8] sm:$0xf]
  %v53 = vld [vmem:[%s1 + $0xc] sm:$0xf]
  %v54 = vld [vmem:[%s1 + $0x10] sm:$0xf]
  %v55 = vld [vmem:[%s1 + $0x14] sm:$0xf]
  %v56 = vld [vmem:[%s1 + $0x18] sm:$0xf]
  %v57 = vld [vmem:[%s1 + $0x1c] sm:$0xf]
  %v58 = vld [vmem:[%s1 + $0x20] sm:$0xf]
  %v59 = vld [vmem:[%s1 + $0x24] sm:$0xf]
  %v60 = vld [vmem:[%s1 + $0x28] sm:$0xf]
  %v61 = vld [vmem:[%s1 + $0x2c] sm:$0xf]
  %v62 = vld [vmem:[%s1 + $0x30] sm:$0xf]
  %v63 = vld [vmem:[%s1 + $0x34] sm:$0xf]
  %v64 = vld [vmem:[%s1 + $0x38] sm:$0xf]
  %v65 = vld [vmem:[%s1 + $0x3c] sm:$0xf]
  %v66 = vld [vmem:[%s1 + $0x40] sm:$0xf]
  %v67 = vld [vmem:[%s1 + $0x44] sm:$0xf]
  %v68 = vld [vmem:[%s1 + $0x48] sm:$0xf]
  %v69 = vld [vmem:[%s1 + $0x4c] sm:$0xf]
  %v70 = vld [vmem:[%s1 + $0x50] sm:$0xf]
  %v71 = vld [vmem:[%s1 + $0x54] sm:$0xf]
  %v72 = vld [vmem:[%s1 + $0x58] sm:$0xf]
  %v73 = vld [vmem:[%s1 + $0x5c] sm:$0xf]
  %v74 = vld [vmem:[%s1 + $0x60] sm:$0xf]
  %v75 = vld [vmem:[%s1 + $0x64] sm:$0xf]
  %v76 = vld [vmem:[%s1 + $0x68] sm:$0xf]
  %v77 = vld [vmem:[%s1 + $0x6c] sm:$0xf]
  %v78 = vld [vmem:[%s1 + $0x70] sm:$0xf]
  %v79 = vld [vmem:[%s1 + $0x74] sm:$0xf]
  %v80 = vld [vmem:[%s1 + $0x78] sm:$0xf]
  %v81 = vld [vmem:[%s1 + $0x7c] sm:$0xf]
  %v82 = vld [vmem:[%s1 + $0x80] sm:$0xf]
  %v83 = vld [vmem:[%s1 + $0x84] sm:$0xf]
  %v84 = vld [vmem:[%s1 + $0x88] sm:$0xf]
  %v85 = vld [vmem:[%s1 + $0x8c] sm:$0xf]
  %v86 = vld [vmem:[%s1 + $0x90] sm:$0xf]
  %v87 = vld [vmem:[%s1 + $0x94] sm:$0xf]
  %v88 = vld [vmem:[%s1 + $0x98] sm:$0xf]
  %v89 = vld [vmem:[%s1 + $0x9c] sm:$0xf]
  %v90 = vld [vmem:[%s1 + $0xa0] sm:$0xf]
  %v91 = vld [vmem:[%s1 + $0xa4] sm:$0xf]
  %v92 = vld [vmem:[%s1 + $0xa8] sm:$0xf]
  %v93 = vld [vmem:[%s1 + $0xac] sm:$0xf]
  %v94 = vld [vmem:[%s1 + $0xb0] sm:$0xf]
  %v95 = vld [vmem:[%s1 + $0xb4] sm:$0xf]
  %v96 = vld [vmem:[%s1 + $0xb8] sm:$0xf]
  %v97 = vld [vmem:[%s1 + $0xbc] sm:$0xf]
  %v98 = vld [vmem:[%s1 + $0xc0] sm:$0xf]
  %v99 = vld [vmem:[%s1 + $0xc4] sm:$0xf]
  %v100 = vld [vmem:[%s1 + $0xc8] sm:$0xf]
  %v101 = vld [vmem:[%s1 + $0xcc] sm:$0xf]
  %v102 = vld [vmem:[%s1 + $0xd0] sm:$0xf]
  %v103 = vld [vmem:[%s1 + $0xd4] sm:$0xf]
  %v104 = vld [vmem:[%s1 + $0xd8] sm:$0xf]
  %v105 = vld [vmem:[%s1 + $0xdc] sm:$0xf]
  %v106 = vld [vmem:[%s1 + $0xe0] sm:$0xf]
  %v107 = vld [vmem:[%s1 + $0xe4] sm:$0xf]
  %v108 = vld [vmem:[%s1 + $0xe8] sm:$0xf]
  %v109 = vld [vmem:[%s1 + $0xec] sm:$0xf]
  %v110 = vld [vmem:[%s1 + $0xf0] sm:$0xf]
  %v111 = vld [vmem:[%s1 + $0xf4] sm:$0xf]
  %v112 = vld [vmem:[%s1 + $0xf8] sm:$0xf]
  %v113 = vld [vmem:[%s1 + $0xfc] sm:$0xf]
  %v114 = vld [vmem:[%s2] sm:$0x1]
  %v116 = vlaneseq
  %v117 = vshrl.u32 %v116, 7
  %v118 = vsub.s32 0, %v117
  %v119 = vrot.slane %v114, %v118
  %v153 = vunpack.c.l.b16 %v18
  %v154 = vunpack.c.h.b16 %v18
  %v155 = vunpack.c.l.b16 %v19
  %v156 = vunpack.c.h.b16 %v19
  %v157 = vunpack.c.l.b16 %v20
  %v158 = vunpack.c.h.b16 %v20
  %v159 = vunpack.c.l.b16 %v21
  %v160 = vunpack.c.h.b16 %v21
  %v161 = vunpack.c.l.b16 %v22
  %v162 = vunpack.c.h.b16 %v22
  %v163 = vunpack.c.l.b16 %v23
  %v164 = vunpack.c.h.b16 %v23
  %v165 = vunpack.c.l.b16 %v24
  %v166 = vunpack.c.h.b16 %v24
  %v167 = vunpack.c.l.b16 %v25
  %v168 = vunpack.c.h.b16 %v25
  %v169 = vunpack.c.l.b16 %v26
  %v170 = vunpack.c.h.b16 %v26
  %v171 = vunpack.c.l.b16 %v27
  %v172 = vunpack.c.h.b16 %v27
  %v173 = vunpack.c.l.b16 %v28
  %v174 = vunpack.c.h.b16 %v28
  %v175 = vunpack.c.l.b16 %v29
  %v176 = vunpack.c.h.b16 %v29
  %v177 = vunpack.c.l.b16 %v30
  %v178 = vunpack.c.h.b16 %v30
  %v179 = vunpack.c.l.b16 %v31
  %v180 = vunpack.c.h.b16 %v31
  %v181 = vunpack.c.l.b16 %v32
  %v182 = vunpack.c.h.b16 %v32
  %v183 = vunpack.c.l.b16 %v33
  %v184 = vunpack.c.h.b16 %v33
  %v185 = vunpack.c.l.b16 %v34
  %v186 = vunpack.c.h.b16 %v34
  %v187 = vunpack.c.l.b16 %v35
  %v188 = vunpack.c.h.b16 %v35
  %v189 = vunpack.c.l.b16 %v36
  %v190 = vunpack.c.h.b16 %v36
  %v191 = vunpack.c.l.b16 %v37
  %v192 = vunpack.c.h.b16 %v37
  %v193 = vunpack.c.l.b16 %v38
  %v194 = vunpack.c.h.b16 %v38
  %v195 = vunpack.c.l.b16 %v39
  %v196 = vunpack.c.h.b16 %v39
  %v197 = vunpack.c.l.b16 %v40
  %v198 = vunpack.c.h.b16 %v40
  %v199 = vunpack.c.l.b16 %v41
  %v200 = vunpack.c.h.b16 %v41
  %v201 = vunpack.c.l.b16 %v42
  %v202 = vunpack.c.h.b16 %v42
  %v203 = vunpack.c.l.b16 %v43
  %v204 = vunpack.c.h.b16 %v43
  %v205 = vunpack.c.l.b16 %v44
  %v206 = vunpack.c.h.b16 %v44
  %v207 = vunpack.c.l.b16 %v45
  %v208 = vunpack.c.h.b16 %v45
  %v209 = vunpack.c.l.b16 %v46
  %v210 = vunpack.c.h.b16 %v46
  %v211 = vunpack.c.l.b16 %v47
  %v212 = vunpack.c.h.b16 %v47
  %v213 = vunpack.c.l.b16 %v48
  %v214 = vunpack.c.h.b16 %v48
  %v215 = vunpack.c.l.b16 %v49
  %v216 = vunpack.c.h.b16 %v49
  %v217 = vpack.c.b16 %v157, %v153
  %v218 = vpack.c.b16 %v158, %v154
  %v219 = vpack.c.b16 %v159, %v155
  %v220 = vpack.c.b16 %v160, %v156
  %v221 = vpack.c.b16 %v165, %v161
  %v222 = vpack.c.b16 %v166, %v162
  %v223 = vpack.c.b16 %v167, %v163
  %v224 = vpack.c.b16 %v168, %v164
  %v225 = vpack.c.b16 %v173, %v169
  %v226 = vpack.c.b16 %v174, %v170
  %v227 = vpack.c.b16 %v175, %v171
  %v228 = vpack.c.b16 %v176, %v172
  %v229 = vpack.c.b16 %v181, %v177
  %v230 = vpack.c.b16 %v182, %v178
  %v231 = vpack.c.b16 %v183, %v179
  %v232 = vpack.c.b16 %v184, %v180
  %v233 = vpack.c.b16 %v189, %v185
  %v234 = vpack.c.b16 %v190, %v186
  %v235 = vpack.c.b16 %v191, %v187
  %v236 = vpack.c.b16 %v192, %v188
  %v237 = vpack.c.b16 %v197, %v193
  %v238 = vpack.c.b16 %v198, %v194
  %v239 = vpack.c.b16 %v199, %v195
  %v240 = vpack.c.b16 %v200, %v196
  %v241 = vpack.c.b16 %v205, %v201
  %v242 = vpack.c.b16 %v206, %v202
  %v243 = vpack.c.b16 %v207, %v203
  %v244 = vpack.c.b16 %v208, %v204
  %v245 = vpack.c.b16 %v213, %v209
  %v246 = vpack.c.b16 %v214, %v210
  %v247 = vpack.c.b16 %v215, %v211
  %v248 = vpack.c.b16 %v216, %v212
  %v345 = vunpack.c.l.b16 %v50
  %v346 = vunpack.c.l.b16 %v51
  %v347 = vunpack.c.l.b16 %v52
  %v348 = vunpack.c.l.b16 %v53
  %v349 = vunpack.c.l.b16 %v54
  %v350 = vunpack.c.l.b16 %v55
  %v351 = vunpack.c.l.b16 %v56
  %v352 = vunpack.c.l.b16 %v57
  %v353 = vunpack.c.l.b16 %v58
  %v354 = vunpack.c.l.b16 %v59
  %v355 = vunpack.c.l.b16 %v60
  %v356 = vunpack.c.l.b16 %v61
  %v357 = vunpack.c.l.b16 %v62
  %v358 = vunpack.c.l.b16 %v63
  %v359 = vunpack.c.l.b16 %v64
  %v360 = vunpack.c.l.b16 %v65
  %v361 = vunpack.c.l.b16 %v66
  %v362 = vunpack.c.l.b16 %v67
  %v363 = vunpack.c.l.b16 %v68
  %v364 = vunpack.c.l.b16 %v69
  %v365 = vunpack.c.l.b16 %v70
  %v366 = vunpack.c.l.b16 %v71
  %v367 = vunpack.c.l.b16 %v72
  %v368 = vunpack.c.l.b16 %v73
  %v369 = vunpack.c.l.b16 %v74
  %v370 = vunpack.c.l.b16 %v75
  %v371 = vunpack.c.l.b16 %v76
  %v372 = vunpack.c.l.b16 %v77
  %v373 = vunpack.c.l.b16 %v78
  %v374 = vunpack.c.l.b16 %v79
  %v375 = vunpack.c.l.b16 %v80
  %v376 = vunpack.c.l.b16 %v81
  %v377 = vunpack.c.l.b16 %v82
  %v378 = vunpack.c.l.b16 %v83
  %v379 = vunpack.c.l.b16 %v84
  %v380 = vunpack.c.l.b16 %v85
  %v381 = vunpack.c.l.b16 %v86
  %v382 = vunpack.c.l.b16 %v87
  %v383 = vunpack.c.l.b16 %v88
  %v384 = vunpack.c.l.b16 %v89
  %v385 = vunpack.c.l.b16 %v90
  %v386 = vunpack.c.l.b16 %v91
  %v387 = vunpack.c.l.b16 %v92
  %v388 = vunpack.c.l.b16 %v93
  %v389 = vunpack.c.l.b16 %v94
  %v390 = vunpack.c.l.b16 %v95
  %v391 = vunpack.c.l.b16 %v96
  %v392 = vunpack.c.l.b16 %v97
  %v393 = vunpack.c.l.b16 %v98
  %v394 = vunpack.c.l.b16 %v99
  %v395 = vunpack.c.l.b16 %v100
  %v396 = vunpack.c.l.b16 %v101
  %v397 = vunpack.c.l.b16 %v102
  %v398 = vunpack.c.l.b16 %v103
  %v399 = vunpack.c.l.b16 %v104
  %v400 = vunpack.c.l.b16 %v105
  %v401 = vunpack.c.l.b16 %v106
  %v402 = vunpack.c.l.b16 %v107
  %v403 = vunpack.c.l.b16 %v108
  %v404 = vunpack.c.l.b16 %v109
  %v405 = vunpack.c.l.b16 %v110
  %v406 = vunpack.c.l.b16 %v111
  %v407 = vunpack.c.l.b16 %v112
  %v408 = vunpack.c.l.b16 %v113
  %v409 = vpack.c.b16 %v346, %v345
  %v410 = vpack.c.b16 %v348, %v347
  %v411 = vpack.c.b16 %v350, %v349
  %v412 = vpack.c.b16 %v352, %v351
  %v413 = vpack.c.b16 %v354, %v353
  %v414 = vpack.c.b16 %v356, %v355
  %v415 = vpack.c.b16 %v358, %v357
  %v416 = vpack.c.b16 %v360, %v359
  %v417 = vpack.c.b16 %v362, %v361
  %v418 = vpack.c.b16 %v364, %v363
  %v419 = vpack.c.b16 %v366, %v365
  %v420 = vpack.c.b16 %v368, %v367
  %v421 = vpack.c.b16 %v370, %v369
  %v422 = vpack.c.b16 %v372, %v371
  %v423 = vpack.c.b16 %v374, %v373
  %v424 = vpack.c.b16 %v376, %v375
  %v425 = vpack.c.b16 %v378, %v377
  %v426 = vpack.c.b16 %v380, %v379
  %v427 = vpack.c.b16 %v382, %v381
  %v428 = vpack.c.b16 %v384, %v383
  %v429 = vpack.c.b16 %v386, %v385
  %v430 = vpack.c.b16 %v388, %v387
  %v431 = vpack.c.b16 %v390, %v389
  %v432 = vpack.c.b16 %v392, %v391
  %v433 = vpack.c.b16 %v394, %v393
  %v434 = vpack.c.b16 %v396, %v395
  %v435 = vpack.c.b16 %v398, %v397
  %v436 = vpack.c.b16 %v400, %v399
  %v437 = vpack.c.b16 %v402, %v401
  %v438 = vpack.c.b16 %v404, %v403
  %v439 = vpack.c.b16 %v406, %v405
  %v440 = vpack.c.b16 %v408, %v407
  %473 = vmatprep.subr.bf16.mxu0 0
  %474 = vmatpush1.bf16.msra.mxu0 %v416
  %475 = vmatprep.subr.bf16.mxu0 0
  %476 = vmatpush1.bf16.msra.mxu0 %v415
  %477 = vmatprep.subr.bf16.mxu0 0
  %478 = vmatpush1.bf16.msra.mxu0 %v414
  %479 = vmatprep.subr.bf16.mxu0 0
  %480 = vmatpush1.bf16.msra.mxu0 %v413
  %481 = vmatprep.subr.bf16.mxu0 0
  %482 = vmatpush1.bf16.msra.mxu0 %v412
  %483 = vmatprep.subr.bf16.mxu0 0
  %484 = vmatpush1.bf16.msra.mxu0 %v411
  %485 = vmatprep.subr.bf16.mxu0 0
  %486 = vmatpush1.bf16.msra.mxu0 %v410
  %487 = vmatprep.subr.bf16.mxu0 0
  %488 = vmatpush1.bf16.msra.mxu0 %v409
  %489 = vmatprep.subr.bf16.mxu0 0
  %490 = vmatpush2.bf16.msra.mxu0 %v424
  %491 = vmatprep.subr.bf16.mxu0 0
  %492 = vmatpush2.bf16.msra.mxu0 %v423
  %493 = vmatprep.subr.bf16.mxu0 0
  %494 = vmatpush2.bf16.msra.mxu0 %v422
  %495 = vmatprep.subr.bf16.mxu0 0
  %496 = vmatpush2.bf16.msra.mxu0 %v421
  %497 = vmatprep.subr.bf16.mxu0 0
  %498 = vmatpush2.bf16.msra.mxu0 %v420
  %499 = vmatprep.subr.bf16.mxu0 0
  %500 = vmatpush2.bf16.msra.mxu0 %v419
  %501 = vmatprep.subr.bf16.mxu0 0
  %502 = vmatpush2.bf16.msra.mxu0 %v418
  %503 = vmatprep.subr.bf16.mxu0 0
  %504 = vmatpush2.bf16.msra.mxu0 %v417
  %505 = vmatprep.mubr.bf16.mxu0 %v218
  %506 = vmatmul.mubr.bf16.gmra.mxu0 %v217
  %v507 = vpop.f32.mrf.mxu0
  %v508 = vadd.f32 %v119, %v507
  %v509 = vpop.f32.mrf.mxu0
  %v510 = vpop.f32.mrf.mxu0
  %v511 = vadd.f32 %v119, %v510
  %v512 = vpop.f32.mrf.mxu0
  %513 = vmatprep.mubr.bf16.mxu0 %v222
  %514 = vmatmul.mubr.bf16.gmra.mxu0 %v221
  %v515 = vpop.f32.mrf.mxu0
  %v516 = vadd.f32 %v119, %v515
  %v517 = vpop.f32.mrf.mxu0
  %v518 = vpop.f32.mrf.mxu0
  %v519 = vadd.f32 %v119, %v518
  %v520 = vpop.f32.mrf.mxu0
  %521 = vmatprep.mubr.bf16.mxu0 %v226
  %522 = vmatmul.mubr.bf16.gmra.mxu0 %v225
  %v523 = vpop.f32.mrf.mxu0
  %v524 = vadd.f32 %v119, %v523
  %v525 = vpop.f32.mrf.mxu0
  %v526 = vpop.f32.mrf.mxu0
  %v527 = vadd.f32 %v119, %v526
  %v528 = vpop.f32.mrf.mxu0
  %529 = vmatprep.mubr.bf16.mxu0 %v230
  %530 = vmatmul.mubr.bf16.gmra.mxu0 %v229
  %v531 = vpop.f32.mrf.mxu0
  %v532 = vadd.f32 %v119, %v531
  %v533 = vpop.f32.mrf.mxu0
  %v534 = vpop.f32.mrf.mxu0
  %v535 = vadd.f32 %v119, %v534
  %v536 = vpop.f32.mrf.mxu0
  %537 = vmatprep.mubr.bf16.mxu0 %v234
  %538 = vmatmul.mubr.bf16.gmra.mxu0 %v233
  %v539 = vpop.f32.mrf.mxu0
  %v540 = vadd.f32 %v119, %v539
  %v541 = vpop.f32.mrf.mxu0
  %v542 = vpop.f32.mrf.mxu0
  %v543 = vadd.f32 %v119, %v542
  %v544 = vpop.f32.mrf.mxu0
  %545 = vmatprep.mubr.bf16.mxu0 %v238
  %546 = vmatmul.mubr.bf16.gmra.mxu0 %v237
  %v547 = vpop.f32.mrf.mxu0
  %v548 = vadd.f32 %v119, %v547
  %v549 = vpop.f32.mrf.mxu0
  %v550 = vpop.f32.mrf.mxu0
  %v551 = vadd.f32 %v119, %v550
  %v552 = vpop.f32.mrf.mxu0
  %553 = vmatprep.mubr.bf16.mxu0 %v242
  %554 = vmatmul.mubr.bf16.gmra.mxu0 %v241
  %v555 = vpop.f32.mrf.mxu0
  %v556 = vadd.f32 %v119, %v555
  %v557 = vpop.f32.mrf.mxu0
  %v558 = vpop.f32.mrf.mxu0
  %v559 = vadd.f32 %v119, %v558
  %v560 = vpop.f32.mrf.mxu0
  %561 = vmatprep.mubr.bf16.mxu0 %v246
  %562 = vmatmul.mubr.bf16.gmra.mxu0 %v245
  %v563 = vpop.f32.mrf.mxu0
  %v564 = vadd.f32 %v119, %v563
  %v565 = vpop.f32.mrf.mxu0
  %v566 = vpop.f32.mrf.mxu0
  %v567 = vadd.f32 %v119, %v566
  %v568 = vpop.f32.mrf.mxu0
  %569 = vdwg.mxu0
  %570 = vmatprep.subr.bf16.mxu0 0
  %571 = vmatpush1.bf16.msra.mxu0 %v432
  %572 = vmatprep.subr.bf16.mxu0 0
  %573 = vmatpush1.bf16.msra.mxu0 %v431
  %574 = vmatprep.subr.bf16.mxu0 0
  %575 = vmatpush1.bf16.msra.mxu0 %v430
  %576 = vmatprep.subr.bf16.mxu0 0
  %577 = vmatpush1.bf16.msra.mxu0 %v429
  %578 = vmatprep.subr.bf16.mxu0 0
  %579 = vmatpush1.bf16.msra.mxu0 %v428
  %580 = vmatprep.subr.bf16.mxu0 0
  %581 = vmatpush1.bf16.msra.mxu0 %v427
  %582 = vmatprep.subr.bf16.mxu0 0
  %583 = vmatpush1.bf16.msra.mxu0 %v426
  %584 = vmatprep.subr.bf16.mxu0 0
  %585 = vmatpush1.bf16.msra.mxu0 %v425
  %586 = vmatprep.subr.bf16.mxu0 0
  %587 = vmatpush2.bf16.msra.mxu0 %v440
  %588 = vmatprep.subr.bf16.mxu0 0
  %589 = vmatpush2.bf16.msra.mxu0 %v439
  %590 = vmatprep.subr.bf16.mxu0 0
  %591 = vmatpush2.bf16.msra.mxu0 %v438
  %592 = vmatprep.subr.bf16.mxu0 0
  %593 = vmatpush2.bf16.msra.mxu0 %v437
  %594 = vmatprep.subr.bf16.mxu0 0
  %595 = vmatpush2.bf16.msra.mxu0 %v436
  %596 = vmatprep.subr.bf16.mxu0 0
  %597 = vmatpush2.bf16.msra.mxu0 %v435
  %598 = vmatprep.subr.bf16.mxu0 0
  %599 = vmatpush2.bf16.msra.mxu0 %v434
  %600 = vmatprep.subr.bf16.mxu0 0
  %601 = vmatpush2.bf16.msra.mxu0 %v433
  %602 = vmatprep.mubr.bf16.mxu0 %v220
  %603 = vmatmul.mubr.bf16.gmra.mxu0 %v219
  %v604 = vpop.f32.mrf.mxu0
  %v605 = vadd.f32 %v508, %v604
  %v606 = vpop.f32.mrf.mxu0
  %v607 = vpop.f32.mrf.mxu0
  %v608 = vadd.f32 %v511, %v607
  %v609 = vpop.f32.mrf.mxu0
  %610 = vmatprep.mubr.bf16.mxu0 %v224
  %611 = vmatmul.mubr.bf16.gmra.mxu0 %v223
  %v612 = vpop.f32.mrf.mxu0
  %v613 = vadd.f32 %v516, %v612
  %v614 = vpop.f32.mrf.mxu0
  %v615 = vpop.f32.mrf.mxu0
  %v616 = vadd.f32 %v519, %v615
  %v617 = vpop.f32.mrf.mxu0
  %618 = vmatprep.mubr.bf16.mxu0 %v228
  %619 = vmatmul.mubr.bf16.gmra.mxu0 %v227
  %v620 = vpop.f32.mrf.mxu0
  %v621 = vadd.f32 %v524, %v620
  %v622 = vpop.f32.mrf.mxu0
  %v623 = vpop.f32.mrf.mxu0
  %v624 = vadd.f32 %v527, %v623
  %v625 = vpop.f32.mrf.mxu0
  %626 = vmatprep.mubr.bf16.mxu0 %v232
  %627 = vmatmul.mubr.bf16.gmra.mxu0 %v231
  %v628 = vpop.f32.mrf.mxu0
  %v629 = vadd.f32 %v532, %v628
  %v630 = vpop.f32.mrf.mxu0
  %v631 = vpop.f32.mrf.mxu0
  %v632 = vadd.f32 %v535, %v631
  %v633 = vpop.f32.mrf.mxu0
  %634 = vmatprep.mubr.bf16.mxu0 %v236
  %635 = vmatmul.mubr.bf16.gmra.mxu0 %v235
  %v636 = vpop.f32.mrf.mxu0
  %v637 = vadd.f32 %v540, %v636
  %v638 = vpop.f32.mrf.mxu0
  %v639 = vpop.f32.mrf.mxu0
  %v640 = vadd.f32 %v543, %v639
  %v641 = vpop.f32.mrf.mxu0
  %642 = vmatprep.mubr.bf16.mxu0 %v240
  %643 = vmatmul.mubr.bf16.gmra.mxu0 %v239
  %v644 = vpop.f32.mrf.mxu0
  %v645 = vadd.f32 %v548, %v644
  %v646 = vpop.f32.mrf.mxu0
  %v647 = vpop.f32.mrf.mxu0
  %v648 = vadd.f32 %v551, %v647
  %v649 = vpop.f32.mrf.mxu0
  %650 = vmatprep.mubr.bf16.mxu0 %v244
  %651 = vmatmul.mubr.bf16.gmra.mxu0 %v243
  %v652 = vpop.f32.mrf.mxu0
  %v653 = vadd.f32 %v556, %v652
  %v654 = vpop.f32.mrf.mxu0
  %v655 = vpop.f32.mrf.mxu0
  %v656 = vadd.f32 %v559, %v655
  %v657 = vpop.f32.mrf.mxu0
  %658 = vmatprep.mubr.bf16.mxu0 %v248
  %659 = vmatmul.mubr.bf16.gmra.mxu0 %v247
  %v660 = vpop.f32.mrf.mxu0
  %v661 = vadd.f32 %v564, %v660
  %v662 = vpop.f32.mrf.mxu0
  %v663 = vpop.f32.mrf.mxu0
  %v664 = vadd.f32 %v567, %v663
  %v665 = vpop.f32.mrf.mxu0
  %666 = vdwg.mxu0
  %v667 = vld [vmem:[%s3] sm:$0xff]
  %v668 = vld [vmem:[%s3 + $0x8] sm:$0xff]
  %v669 = vld [vmem:[%s3 + $0x10] sm:$0xff]
  %v670 = vld [vmem:[%s3 + $0x18] sm:$0xff]
  %v671 = vld [vmem:[%s3 + $0x20] sm:$0xff]
  %v672 = vld [vmem:[%s3 + $0x28] sm:$0xff]
  %v673 = vld [vmem:[%s3 + $0x30] sm:$0xff]
  %v674 = vld [vmem:[%s3 + $0x38] sm:$0xff]
  %v675 = vld [vmem:[%s3 + $0x40] sm:$0xff]
  %v676 = vld [vmem:[%s3 + $0x48] sm:$0xff]
  %v677 = vld [vmem:[%s3 + $0x50] sm:$0xff]
  %v678 = vld [vmem:[%s3 + $0x58] sm:$0xff]
  %v679 = vld [vmem:[%s3 + $0x60] sm:$0xff]
  %v680 = vld [vmem:[%s3 + $0x68] sm:$0xff]
  %v681 = vld [vmem:[%s3 + $0x70] sm:$0xff]
  %v682 = vld [vmem:[%s3 + $0x78] sm:$0xff]
  %v683 = vadd.f32 %v605, %v667
  %v684 = vadd.f32 %v608, %v668
  %v685 = vadd.f32 %v613, %v669
  %v686 = vadd.f32 %v616, %v670
  %v687 = vadd.f32 %v621, %v671
  %v688 = vadd.f32 %v624, %v672
  %v689 = vadd.f32 %v629, %v673
  %v690 = vadd.f32 %v632, %v674
  %v691 = vadd.f32 %v637, %v675
  %v692 = vadd.f32 %v640, %v676
  %v693 = vadd.f32 %v645, %v677
  %v694 = vadd.f32 %v648, %v678
  %v695 = vadd.f32 %v653, %v679
  %v696 = vadd.f32 %v656, %v680
  %v697 = vadd.f32 %v661, %v681
  %v698 = vadd.f32 %v664, %v682
  %699 = vst [vmem:[%s4] sm:$0xff] %v683
  %700 = vst [vmem:[%s4 + $0x8] sm:$0xff] %v684
  %701 = vst [vmem:[%s4 + $0x10] sm:$0xff] %v685
  %702 = vst [vmem:[%s4 + $0x18] sm:$0xff] %v686
  %703 = vst [vmem:[%s4 + $0x20] sm:$0xff] %v687
  %704 = vst [vmem:[%s4 + $0x28] sm:$0xff] %v688
  %705 = vst [vmem:[%s4 + $0x30] sm:$0xff] %v689
  %706 = vst [vmem:[%s4 + $0x38] sm:$0xff] %v690
  %707 = vst [vmem:[%s4 + $0x40] sm:$0xff] %v691
  %708 = vst [vmem:[%s4 + $0x48] sm:$0xff] %v692
  %709 = vst [vmem:[%s4 + $0x50] sm:$0xff] %v693
  %710 = vst [vmem:[%s4 + $0x58] sm:$0xff] %v694
  %711 = vst [vmem:[%s4 + $0x60] sm:$0xff] %v695
  %712 = vst [vmem:[%s4 + $0x68] sm:$0xff] %v696
  %713 = vst [vmem:[%s4 + $0x70] sm:$0xff] %v697
  %714 = vst [vmem:[%s4 + $0x78] sm:$0xff] %v698
  // Predicated region
  $region18: #{sam2_pe_simple_lst_forward.13} parent=0 // pred_check
    _
  $region19: #{sam2_pe_simple_lst_forward.13} parent=0 // pred_check_branch
    %716 = sbr.rel (0) target = $region21
  $region20: #{sam2_pe_simple_lst_forward.13} parent=0 // pred_region
    _
  $region21: #{sam2_pe_simple_lst_forward.13} parent=0 // pred_fallthru
    _
  // Predicated region
  $region22: #{sam2_pe_simple_lst_forward.13} parent=0 // pred_check
    _
  $region23: #{sam2_pe_simple_lst_forward.13} parent=0 // pred_check_branch
    %718 = sbr.rel (0) target = $region25
  $region24: #{sam2_pe_simple_lst_forward.13} parent=0 // pred_region
    _
  $region25: #{sam2_pe_simple_lst_forward.13} parent=0 // pred_fallthru
    _

// kernel: sam2_pe_simple_lst_forward.17
$region0: #{sam2_pe_simple_lst_forward.17}
  #allocation0 [shape = 'u32[]', space=smem, size = 0x4, offset = 0x4, fixed_abs, tag = 'smem constant byte address 0x4 - core index']
  #allocation1 [shape = 'u32[144,128]{1,0:T(1,128)}', space=vmem, size = 0x12000, scoped, tag = 'internal scratch']
  %s0 = inlined_call_operand.vmem [shape: bf16[128,512], index: 0, kind: input, shape index: {}]
  %s1 = inlined_call_operand.vmem [shape: bf16[512,128], index: 1, kind: input, shape index: {}]
  %s2 = inlined_call_operand.vmem [shape: f32[1,128], index: 2, kind: input, shape index: {}]
  %s3 = inlined_call_operand.vmem [shape: f32[128,128], index: 3, kind: input, shape index: {}]
  %s4 = inlined_call_operand.hbm [shape: f32[128,128], index: 4, kind: output, shape index: {}]
  %s5 = sld [smem:[#allocation0]]
  $region26: #{sam2_pe_simple_lst_forward.17} parent=0
    _
  %s7 = ssub.s32 1, %s5
  %s8 = scalar_select 0, %s7, %s5
  $region1: #{sam2_pe_simple_lst_forward.17} parent=0
    #allocation2 [shape = 'u8[65536]{0}', space=vmem, size = 0x10000, scoped, tag = 'output window, operand 0, single buffered']
    #allocation3 [shape = 's32[1]{0}', space=sflag, size = 0x4, scoped, tag = 'scoped memory for sam2_pe_simple_lst_forward.17']
    %9 = vsyncpa [#allocation3], 0
    // Predicated region
    $region2: #{sam2_pe_simple_lst_forward.17} parent=1 // pred_check
      _
    $region3: #{sam2_pe_simple_lst_forward.17} parent=1 // pred_check_branch
      %11 = sbr.rel (0) target = $region5
    $region4: #{sam2_pe_simple_lst_forward.17} parent=1 // pred_region
      _
    $region5: #{sam2_pe_simple_lst_forward.17} parent=1 // pred_fallthru
      _
    // Predicated region
    $region6: #{sam2_pe_simple_lst_forward.17} parent=1 // pred_check
      _
    $region7: #{sam2_pe_simple_lst_forward.17} parent=1 // pred_check_branch
      %13 = sbr.rel (0) target = $region9
    $region8: #{sam2_pe_simple_lst_forward.17} parent=1 // pred_region
      _
    $region9: #{sam2_pe_simple_lst_forward.17} parent=1 // pred_fallthru
      _
    // Predicated region
    $region10: #{sam2_pe_simple_lst_forward.17} parent=1 // pred_check
      _
    $region11: #{sam2_pe_simple_lst_forward.17} parent=1 // pred_check_branch
      %15 = sbr.rel (0) target = $region13
    $region12: #{sam2_pe_simple_lst_forward.17} parent=1 // pred_region
      _
    $region13: #{sam2_pe_simple_lst_forward.17} parent=1 // pred_fallthru
      _
    // Predicated region
    $region14: #{sam2_pe_simple_lst_forward.17} parent=1 // pred_check
      _
    $region15: #{sam2_pe_simple_lst_forward.17} parent=1 // pred_check_branch
      %17 = sbr.rel (0) target = $region17
    $region16: #{sam2_pe_simple_lst_forward.17} parent=1 // pred_region
      _
    $region17: #{sam2_pe_simple_lst_forward.17} parent=1 // pred_fallthru
      _
    %v19 = vld [vmem:[%s0] sm:$0xff]
    %v20 = vld [vmem:[%s0 + $0x8] sm:$0xff]
    %v21 = vld [vmem:[%s0 + $0x10] sm:$0xff]
    %v22 = vld [vmem:[%s0 + $0x18] sm:$0xff]
    %v23 = vld [vmem:[%s0 + $0x20] sm:$0xff]
    %v24 = vld [vmem:[%s0 + $0x28] sm:$0xff]
    %v25 = vld [vmem:[%s0 + $0x30] sm:$0xff]
    %v26 = vld [vmem:[%s0 + $0x38] sm:$0xff]
    %v27 = vld [vmem:[%s0 + $0x40] sm:$0xff]
    %v28 = vld [vmem:[%s0 + $0x48] sm:$0xff]
    %v29 = vld [vmem:[%s0 + $0x50] sm:$0xff]
    %v30 = vld [vmem:[%s0 + $0x58] sm:$0xff]
    %v31 = vld [vmem:[%s0 + $0x60] sm:$0xff]
    %v32 = vld [vmem:[%s0 + $0x68] sm:$0xff]
    %v33 = vld [vmem:[%s0 + $0x70] sm:$0xff]
    %v34 = vld [vmem:[%s0 + $0x78] sm:$0xff]
    %v35 = vld [vmem:[%s0 + $0x80] sm:$0xff]
    %v36 = vld [vmem:[%s0 + $0x88] sm:$0xff]
    %v37 = vld [vmem:[%s0 + $0x90] sm:$0xff]
    %v38 = vld [vmem:[%s0 + $0x98] sm:$0xff]
    %v39 = vld [vmem:[%s0 + $0xa0] sm:$0xff]
    %v40 = vld [vmem:[%s0 + $0xa8] sm:$0xff]
    %v41 = vld [vmem:[%s0 + $0xb0] sm:$0xff]
    %v42 = vld [vmem:[%s0 + $0xb8] sm:$0xff]
    %v43 = vld [vmem:[%s0 + $0xc0] sm:$0xff]
    %v44 = vld [vmem:[%s0 + $0xc8] sm:$0xff]
    %v45 = vld [vmem:[%s0 + $0xd0] sm:$0xff]
    %v46 = vld [vmem:[%s0 + $0xd8] sm:$0xff]
    %v47 = vld [vmem:[%s0 + $0xe0] sm:$0xff]
    %v48 = vld [vmem:[%s0 + $0xe8] sm:$0xff]
    %v49 = vld [vmem:[%s0 + $0xf0] sm:$0xff]
    %v50 = vld [vmem:[%s0 + $0xf8] sm:$0xff]
    %v51 = vld [vmem:[%s1] sm:$0xf]
    %v52 = vld [vmem:[%s1 + $0x4] sm:$0xf]
    %v53 = vld [vmem:[%s1 + $0x8] sm:$0xf]
    %v54 = vld [vmem:[%s1 + $0xc] sm:$0xf]
    %v55 = vld [vmem:[%s1 + $0x10] sm:$0xf]
    %v56 = vld [vmem:[%s1 + $0x14] sm:$0xf]
    %v57 = vld [vmem:[%s1 + $0x18] sm:$0xf]
    %v58 = vld [vmem:[%s1 + $0x1c] sm:$0xf]
    %v59 = vld [vmem:[%s1 + $0x20] sm:$0xf]
    %v60 = vld [vmem:[%s1 + $0x24] sm:$0xf]
    %v61 = vld [vmem:[%s1 + $0x28] sm:$0xf]
    %v62 = vld [vmem:[%s1 + $0x2c] sm:$0xf]
    %v63 = vld [vmem:[%s1 + $0x30] sm:$0xf]
    %v64 = vld [vmem:[%s1 + $0x34] sm:$0xf]
    %v65 = vld [vmem:[%s1 + $0x38] sm:$0xf]
    %v66 = vld [vmem:[%s1 + $0x3c] sm:$0xf]
    %v67 = vld [vmem:[%s1 + $0x40] sm:$0xf]
    %v68 = vld [vmem:[%s1 + $0x44] sm:$0xf]
    %v69 = vld [vmem:[%s1 + $0x48] sm:$0xf]
    %v70 = vld [vmem:[%s1 + $0x4c] sm:$0xf]
    %v71 = vld [vmem:[%s1 + $0x50] sm:$0xf]
    %v72 = vld [vmem:[%s1 + $0x54] sm:$0xf]
    %v73 = vld [vmem:[%s1 + $0x58] sm:$0xf]
    %v74 = vld [vmem:[%s1 + $0x5c] sm:$0xf]
    %v75 = vld [vmem:[%s1 + $0x60] sm:$0xf]
    %v76 = vld [vmem:[%s1 + $0x64] sm:$0xf]
    %v77 = vld [vmem:[%s1 + $0x68] sm:$0xf]
    %v78 = vld [vmem:[%s1 + $0x6c] sm:$0xf]
    %v79 = vld [vmem:[%s1 + $0x70] sm:$0xf]
    %v80 = vld [vmem:[%s1 + $0x74] sm:$0xf]
    %v81 = vld [vmem:[%s1 + $0x78] sm:$0xf]
    %v82 = vld [vmem:[%s1 + $0x7c] sm:$0xf]
    %v83 = vld [vmem:[%s1 + $0x80] sm:$0xf]
    %v84 = vld [vmem:[%s1 + $0x84] sm:$0xf]
    %v85 = vld [vmem:[%s1 + $0x88] sm:$0xf]
    %v86 = vld [vmem:[%s1 + $0x8c] sm:$0xf]
    %v87 = vld [vmem:[%s1 + $0x90] sm:$0xf]
    %v88 = vld [vmem:[%s1 + $0x94] sm:$0xf]
    %v89 = vld [vmem:[%s1 + $0x98] sm:$0xf]
    %v90 = vld [vmem:[%s1 + $0x9c] sm:$0xf]
    %v91 = vld [vmem:[%s1 + $0xa0] sm:$0xf]
    %v92 = vld [vmem:[%s1 + $0xa4] sm:$0xf]
    %v93 = vld [vmem:[%s1 + $0xa8] sm:$0xf]
    %v94 = vld [vmem:[%s1 + $0xac] sm:$0xf]
    %v95 = vld [vmem:[%s1 + $0xb0] sm:$0xf]
    %v96 = vld [vmem:[%s1 + $0xb4] sm:$0xf]
    %v97 = vld [vmem:[%s1 + $0xb8] sm:$0xf]
    %v98 = vld [vmem:[%s1 + $0xbc] sm:$0xf]
    %v99 = vld [vmem:[%s1 + $0xc0] sm:$0xf]
    %v100 = vld [vmem:[%s1 + $0xc4] sm:$0xf]
    %v101 = vld [vmem:[%s1 + $0xc8] sm:$0xf]
    %v102 = vld [vmem:[%s1 + $0xcc] sm:$0xf]
    %v103 = vld [vmem:[%s1 + $0xd0] sm:$0xf]
    %v104 = vld [vmem:[%s1 + $0xd4] sm:$0xf]
    %v105 = vld [vmem:[%s1 + $0xd8] sm:$0xf]
    %v106 = vld [vmem:[%s1 + $0xdc] sm:$0xf]
    %v107 = vld [vmem:[%s1 + $0xe0] sm:$0xf]
    %v108 = vld [vmem:[%s1 + $0xe4] sm:$0xf]
    %v109 = vld [vmem:[%s1 + $0xe8] sm:$0xf]
    %v110 = vld [vmem:[%s1 + $0xec] sm:$0xf]
    %v111 = vld [vmem:[%s1 + $0xf0] sm:$0xf]
    %v112 = vld [vmem:[%s1 + $0xf4] sm:$0xf]
    %v113 = vld [vmem:[%s1 + $0xf8] sm:$0xf]
    %v114 = vld [vmem:[%s1 + $0xfc] sm:$0xf]
    %v115 = vld [vmem:[%s2] sm:$0x1]
    %v117 = vlaneseq
    %v118 = vshrl.u32 %v117, 7
    %v119 = vsub.s32 0, %v118
    %v120 = vrot.slane %v115, %v119
    %v154 = vunpack.c.l.b16 %v19
    %v155 = vunpack.c.h.b16 %v19
    %v156 = vunpack.c.l.b16 %v20
    %v157 = vunpack.c.h.b16 %v20
    %v158 = vunpack.c.l.b16 %v21
    %v159 = vunpack.c.h.b16 %v21
    %v160 = vunpack.c.l.b16 %v22
    %v161 = vunpack.c.h.b16 %v22
    %v162 = vunpack.c.l.b16 %v23
    %v163 = vunpack.c.h.b16 %v23
    %v164 = vunpack.c.l.b16 %v24
    %v165 = vunpack.c.h.b16 %v24
    %v166 = vunpack.c.l.b16 %v25
    %v167 = vunpack.c.h.b16 %v25
    %v168 = vunpack.c.l.b16 %v26
    %v169 = vunpack.c.h.b16 %v26
    %v170 = vunpack.c.l.b16 %v27
    %v171 = vunpack.c.h.b16 %v27
    %v172 = vunpack.c.l.b16 %v28
    %v173 = vunpack.c.h.b16 %v28
    %v174 = vunpack.c.l.b16 %v29
    %v175 = vunpack.c.h.b16 %v29
    %v176 = vunpack.c.l.b16 %v30
    %v177 = vunpack.c.h.b16 %v30
    %v178 = vunpack.c.l.b16 %v31
    %v179 = vunpack.c.h.b16 %v31
    %v180 = vunpack.c.l.b16 %v32
    %v181 = vunpack.c.h.b16 %v32
    %v182 = vunpack.c.l.b16 %v33
    %v183 = vunpack.c.h.b16 %v33
    %v184 = vunpack.c.l.b16 %v34
    %v185 = vunpack.c.h.b16 %v34
    %v186 = vunpack.c.l.b16 %v35
    %v187 = vunpack.c.h.b16 %v35
    %v188 = vunpack.c.l.b16 %v36
    %v189 = vunpack.c.h.b16 %v36
    %v190 = vunpack.c.l.b16 %v37
    %v191 = vunpack.c.h.b16 %v37
    %v192 = vunpack.c.l.b16 %v38
    %v193 = vunpack.c.h.b16 %v38
    %v194 = vunpack.c.l.b16 %v39
    %v195 = vunpack.c.h.b16 %v39
    %v196 = vunpack.c.l.b16 %v40
    %v197 = vunpack.c.h.b16 %v40
    %v198 = vunpack.c.l.b16 %v41
    %v199 = vunpack.c.h.b16 %v41
    %v200 = vunpack.c.l.b16 %v42
    %v201 = vunpack.c.h.b16 %v42
    %v202 = vunpack.c.l.b16 %v43
    %v203 = vunpack.c.h.b16 %v43
    %v204 = vunpack.c.l.b16 %v44
    %v205 = vunpack.c.h.b16 %v44
    %v206 = vunpack.c.l.b16 %v45
    %v207 = vunpack.c.h.b16 %v45
    %v208 = vunpack.c.l.b16 %v46
    %v209 = vunpack.c.h.b16 %v46
    %v210 = vunpack.c.l.b16 %v47
    %v211 = vunpack.c.h.b16 %v47
    %v212 = vunpack.c.l.b16 %v48
    %v213 = vunpack.c.h.b16 %v48
    %v214 = vunpack.c.l.b16 %v49
    %v215 = vunpack.c.h.b16 %v49
    %v216 = vunpack.c.l.b16 %v50
    %v217 = vunpack.c.h.b16 %v50
    %v218 = vpack.c.b16 %v158, %v154
    %v219 = vpack.c.b16 %v159, %v155
    %v220 = vpack.c.b16 %v160, %v156
    %v221 = vpack.c.b16 %v161, %v157
    %v222 = vpack.c.b16 %v166, %v162
    %v223 = vpack.c.b16 %v167, %v163
    %v224 = vpack.c.b16 %v168, %v164
    %v225 = vpack.c.b16 %v169, %v165
    %v226 = vpack.c.b16 %v174, %v170
    %v227 = vpack.c.b16 %v175, %v171
    %v228 = vpack.c.b16 %v176, %v172
    %v229 = vpack.c.b16 %v177, %v173
    %v230 = vpack.c.b16 %v182, %v178
    %v231 = vpack.c.b16 %v183, %v179
    %v232 = vpack.c.b16 %v184, %v180
    %v233 = vpack.c.b16 %v185, %v181
    %v234 = vpack.c.b16 %v190, %v186
    %v235 = vpack.c.b16 %v191, %v187
    %v236 = vpack.c.b16 %v192, %v188
    %v237 = vpack.c.b16 %v193, %v189
    %v238 = vpack.c.b16 %v198, %v194
    %v239 = vpack.c.b16 %v199, %v195
    %v240 = vpack.c.b16 %v200, %v196
    %v241 = vpack.c.b16 %v201, %v197
    %v242 = vpack.c.b16 %v206, %v202
    %v243 = vpack.c.b16 %v207, %v203
    %v244 = vpack.c.b16 %v208, %v204
    %v245 = vpack.c.b16 %v209, %v205
    %v246 = vpack.c.b16 %v214, %v210
    %v247 = vpack.c.b16 %v215, %v211
    %v248 = vpack.c.b16 %v216, %v212
    %v249 = vpack.c.b16 %v217, %v213
    %v346 = vunpack.c.l.b16 %v51
    %v347 = vunpack.c.l.b16 %v52
    %v348 = vunpack.c.l.b16 %v53
    %v349 = vunpack.c.l.b16 %v54
    %v350 = vunpack.c.l.b16 %v55
    %v351 = vunpack.c.l.b16 %v56
    %v352 = vunpack.c.l.b16 %v57
    %v353 = vunpack.c.l.b16 %v58
    %v354 = vunpack.c.l.b16 %v59
    %v355 = vunpack.c.l.b16 %v60
    %v356 = vunpack.c.l.b16 %v61
    %v357 = vunpack.c.l.b16 %v62
    %v358 = vunpack.c.l.b16 %v63
    %v359 = vunpack.c.l.b16 %v64
    %v360 = vunpack.c.l.b16 %v65
    %v361 = vunpack.c.l.b16 %v66
    %v362 = vunpack.c.l.b16 %v67
    %v363 = vunpack.c.l.b16 %v68
    %v364 = vunpack.c.l.b16 %v69
    %v365 = vunpack.c.l.b16 %v70
    %v366 = vunpack.c.l.b16 %v71
    %v367 = vunpack.c.l.b16 %v72
    %v368 = vunpack.c.l.b16 %v73
    %v369 = vunpack.c.l.b16 %v74
    %v370 = vunpack.c.l.b16 %v75
    %v371 = vunpack.c.l.b16 %v76
    %v372 = vunpack.c.l.b16 %v77
    %v373 = vunpack.c.l.b16 %v78
    %v374 = vunpack.c.l.b16 %v79
    %v375 = vunpack.c.l.b16 %v80
    %v376 = vunpack.c.l.b16 %v81
    %v377 = vunpack.c.l.b16 %v82
    %v378 = vunpack.c.l.b16 %v83
    %v379 = vunpack.c.l.b16 %v84
    %v380 = vunpack.c.l.b16 %v85
    %v381 = vunpack.c.l.b16 %v86
    %v382 = vunpack.c.l.b16 %v87
    %v383 = vunpack.c.l.b16 %v88
    %v384 = vunpack.c.l.b16 %v89
    %v385 = vunpack.c.l.b16 %v90
    %v386 = vunpack.c.l.b16 %v91
    %v387 = vunpack.c.l.b16 %v92
    %v388 = vunpack.c.l.b16 %v93
    %v389 = vunpack.c.l.b16 %v94
    %v390 = vunpack.c.l.b16 %v95
    %v391 = vunpack.c.l.b16 %v96
    %v392 = vunpack.c.l.b16 %v97
    %v393 = vunpack.c.l.b16 %v98
    %v394 = vunpack.c.l.b16 %v99
    %v395 = vunpack.c.l.b16 %v100
    %v396 = vunpack.c.l.b16 %v101
    %v397 = vunpack.c.l.b16 %v102
    %v398 = vunpack.c.l.b16 %v103
    %v399 = vunpack.c.l.b16 %v104
    %v400 = vunpack.c.l.b16 %v105
    %v401 = vunpack.c.l.b16 %v106
    %v402 = vunpack.c.l.b16 %v107
    %v403 = vunpack.c.l.b16 %v108
    %v404 = vunpack.c.l.b16 %v109
    %v405 = vunpack.c.l.b16 %v110
    %v406 = vunpack.c.l.b16 %v111
    %v407 = vunpack.c.l.b16 %v112
    %v408 = vunpack.c.l.b16 %v113
    %v409 = vunpack.c.l.b16 %v114
    %v410 = vpack.c.b16 %v347, %v346
    %v411 = vpack.c.b16 %v349, %v348
    %v412 = vpack.c.b16 %v351, %v350
    %v413 = vpack.c.b16 %v353, %v352
    %v414 = vpack.c.b16 %v355, %v354
    %v415 = vpack.c.b16 %v357, %v356
    %v416 = vpack.c.b16 %v359, %v358
    %v417 = vpack.c.b16 %v361, %v360
    %v418 = vpack.c.b16 %v363, %v362
    %v419 = vpack.c.b16 %v365, %v364
    %v420 = vpack.c.b16 %v367, %v366
    %v421 = vpack.c.b16 %v369, %v368
    %v422 = vpack.c.b16 %v371, %v370
    %v423 = vpack.c.b16 %v373, %v372
    %v424 = vpack.c.b16 %v375, %v374
    %v425 = vpack.c.b16 %v377, %v376
    %v426 = vpack.c.b16 %v379, %v378
    %v427 = vpack.c.b16 %v381, %v380
    %v428 = vpack.c.b16 %v383, %v382
    %v429 = vpack.c.b16 %v385, %v384
    %v430 = vpack.c.b16 %v387, %v386
    %v431 = vpack.c.b16 %v389, %v388
    %v432 = vpack.c.b16 %v391, %v390
    %v433 = vpack.c.b16 %v393, %v392
    %v434 = vpack.c.b16 %v395, %v394
    %v435 = vpack.c.b16 %v397, %v396
    %v436 = vpack.c.b16 %v399, %v398
    %v437 = vpack.c.b16 %v401, %v400
    %v438 = vpack.c.b16 %v403, %v402
    %v439 = vpack.c.b16 %v405, %v404
    %v440 = vpack.c.b16 %v407, %v406
    %v441 = vpack.c.b16 %v409, %v408
    %474 = vmatprep.subr.bf16.mxu0 0
    %475 = vmatpush1.bf16.msra.mxu0 %v417
    %476 = vmatprep.subr.bf16.mxu0 0
    %477 = vmatpush1.bf16.msra.mxu0 %v416
    %478 = vmatprep.subr.bf16.mxu0 0
    %479 = vmatpush1.bf16.msra.mxu0 %v415
    %480 = vmatprep.subr.bf16.mxu0 0
    %481 = vmatpush1.bf16.msra.mxu0 %v414
    %482 = vmatprep.subr.bf16.mxu0 0
    %483 = vmatpush1.bf16.msra.mxu0 %v413
    %484 = vmatprep.subr.bf16.mxu0 0
    %485 = vmatpush1.bf16.msra.mxu0 %v412
    %486 = vmatprep.subr.bf16.mxu0 0
    %487 = vmatpush1.bf16.msra.mxu0 %v411
    %488 = vmatprep.subr.bf16.mxu0 0
    %489 = vmatpush1.bf16.msra.mxu0 %v410
    %490 = vmatprep.subr.bf16.mxu0 0
    %491 = vmatpush2.bf16.msra.mxu0 %v425
    %492 = vmatprep.subr.bf16.mxu0 0
    %493 = vmatpush2.bf16.msra.mxu0 %v424
    %494 = vmatprep.subr.bf16.mxu0 0
    %495 = vmatpush2.bf16.msra.mxu0 %v423
    %496 = vmatprep.subr.bf16.mxu0 0
    %497 = vmatpush2.bf16.msra.mxu0 %v422
    %498 = vmatprep.subr.bf16.mxu0 0
    %499 = vmatpush2.bf16.msra.mxu0 %v421
    %500 = vmatprep.subr.bf16.mxu0 0
    %501 = vmatpush2.bf16.msra.mxu0 %v420
    %502 = vmatprep.subr.bf16.mxu0 0
    %503 = vmatpush2.bf16.msra.mxu0 %v419
    %504 = vmatprep.subr.bf16.mxu0 0
    %505 = vmatpush2.bf16.msra.mxu0 %v418
    %506 = vmatprep.mubr.bf16.mxu0 %v219
    %507 = vmatmul.mubr.bf16.gmra.mxu0 %v218
    %v508 = vpop.f32.mrf.mxu0
    %v509 = vadd.f32 %v120, %v508
    %v510 = vpop.f32.mrf.mxu0
    %v511 = vpop.f32.mrf.mxu0
    %v512 = vadd.f32 %v120, %v511
    %v513 = vpop.f32.mrf.mxu0
    %514 = vmatprep.mubr.bf16.mxu0 %v223
    %515 = vmatmul.mubr.bf16.gmra.mxu0 %v222
    %v516 = vpop.f32.mrf.mxu0
    %v517 = vadd.f32 %v120, %v516
    %v518 = vpop.f32.mrf.mxu0
    %v519 = vpop.f32.mrf.mxu0
    %v520 = vadd.f32 %v120, %v519
    %v521 = vpop.f32.mrf.mxu0
    %522 = vmatprep.mubr.bf16.mxu0 %v227
    %523 = vmatmul.mubr.bf16.gmra.mxu0 %v226
    %v524 = vpop.f32.mrf.mxu0
    %v525 = vadd.f32 %v120, %v524
    %v526 = vpop.f32.mrf.mxu0
    %v527 = vpop.f32.mrf.mxu0
    %v528 = vadd.f32 %v120, %v527
    %v529 = vpop.f32.mrf.mxu0
    %530 = vmatprep.mubr.bf16.mxu0 %v231
    %531 = vmatmul.mubr.bf16.gmra.mxu0 %v230
    %v532 = vpop.f32.mrf.mxu0
    %v533 = vadd.f32 %v120, %v532
    %v534 = vpop.f32.mrf.mxu0
    %v535 = vpop.f32.mrf.mxu0
    %v536 = vadd.f32 %v120, %v535
    %v537 = vpop.f32.mrf.mxu0
    %538 = vmatprep.mubr.bf16.mxu0 %v235
    %539 = vmatmul.mubr.bf16.gmra.mxu0 %v234
    %v540 = vpop.f32.mrf.mxu0
    %v541 = vadd.f32 %v120, %v540
    %v542 = vpop.f32.mrf.mxu0
    %v543 = vpop.f32.mrf.mxu0
    %v544 = vadd.f32 %v120, %v543
    %v545 = vpop.f32.mrf.mxu0
    %546 = vmatprep.mubr.bf16.mxu0 %v239
    %547 = vmatmul.mubr.bf16.gmra.mxu0 %v238
    %v548 = vpop.f32.mrf.mxu0
    %v549 = vadd.f32 %v120, %v548
    %v550 = vpop.f32.mrf.mxu0
    %v551 = vpop.f32.mrf.mxu0
    %v552 = vadd.f32 %v120, %v551
    %v553 = vpop.f32.mrf.mxu0
    %554 = vmatprep.mubr.bf16.mxu0 %v243
    %555 = vmatmul.mubr.bf16.gmra.mxu0 %v242
    %v556 = vpop.f32.mrf.mxu0
    %v557 = vadd.f32 %v120, %v556
    %v558 = vpop.f32.mrf.mxu0
    %v559 = vpop.f32.mrf.mxu0
    %v560 = vadd.f32 %v120, %v559
    %v561 = vpop.f32.mrf.mxu0
    %562 = vmatprep.mubr.bf16.mxu0 %v247
    %563 = vmatmul.mubr.bf16.gmra.mxu0 %v246
    %v564 = vpop.f32.mrf.mxu0
    %v565 = vadd.f32 %v120, %v564
    %v566 = vpop.f32.mrf.mxu0
    %v567 = vpop.f32.mrf.mxu0
    %v568 = vadd.f32 %v120, %v567
    %v569 = vpop.f32.mrf.mxu0
    %570 = vdwg.mxu0
    %571 = vmatprep.subr.bf16.mxu0 0
    %572 = vmatpush1.bf16.msra.mxu0 %v433
    %573 = vmatprep.subr.bf16.mxu0 0
    %574 = vmatpush1.bf16.msra.mxu0 %v432
    %575 = vmatprep.subr.bf16.mxu0 0
    %576 = vmatpush1.bf16.msra.mxu0 %v431
    %577 = vmatprep.subr.bf16.mxu0 0
    %578 = vmatpush1.bf16.msra.mxu0 %v430
    %579 = vmatprep.subr.bf16.mxu0 0
    %580 = vmatpush1.bf16.msra.mxu0 %v429
    %581 = vmatprep.subr.bf16.mxu0 0
    %582 = vmatpush1.bf16.msra.mxu0 %v428
    %583 = vmatprep.subr.bf16.mxu0 0
    %584 = vmatpush1.bf16.msra.mxu0 %v427
    %585 = vmatprep.subr.bf16.mxu0 0
    %586 = vmatpush1.bf16.msra.mxu0 %v426
    %587 = vmatprep.subr.bf16.mxu0 0
    %588 = vmatpush2.bf16.msra.mxu0 %v441
    %589 = vmatprep.subr.bf16.mxu0 0
    %590 = vmatpush2.bf16.msra.mxu0 %v440
    %591 = vmatprep.subr.bf16.mxu0 0
    %592 = vmatpush2.bf16.msra.mxu0 %v439
    %593 = vmatprep.subr.bf16.mxu0 0
    %594 = vmatpush2.bf16.msra.mxu0 %v438
    %595 = vmatprep.subr.bf16.mxu0 0
    %596 = vmatpush2.bf16.msra.mxu0 %v437
    %597 = vmatprep.subr.bf16.mxu0 0
    %598 = vmatpush2.bf16.msra.mxu0 %v436
    %599 = vmatprep.subr.bf16.mxu0 0
    %600 = vmatpush2.bf16.msra.mxu0 %v435
    %601 = vmatprep.subr.bf16.mxu0 0
    %602 = vmatpush2.bf16.msra.mxu0 %v434
    %603 = vmatprep.mubr.bf16.mxu0 %v221
    %604 = vmatmul.mubr.bf16.gmra.mxu0 %v220
    %v605 = vpop.f32.mrf.mxu0
    %v606 = vadd.f32 %v509, %v605
    %v607 = vpop.f32.mrf.mxu0
    %v608 = vpop.f32.mrf.mxu0
    %v609 = vadd.f32 %v512, %v608
    %v610 = vpop.f32.mrf.mxu0
    %611 = vmatprep.mubr.bf16.mxu0 %v225
    %612 = vmatmul.mubr.bf16.gmra.mxu0 %v224
    %v613 = vpop.f32.mrf.mxu0
    %v614 = vadd.f32 %v517, %v613
    %v615 = vpop.f32.mrf.mxu0
    %v616 = vpop.f32.mrf.mxu0
    %v617 = vadd.f32 %v520, %v616
    %v618 = vpop.f32.mrf.mxu0
    %619 = vmatprep.mubr.bf16.mxu0 %v229
    %620 = vmatmul.mubr.bf16.gmra.mxu0 %v228
    %v621 = vpop.f32.mrf.mxu0
    %v622 = vadd.f32 %v525, %v621
    %v623 = vpop.f32.mrf.mxu0
    %v624 = vpop.f32.mrf.mxu0
    %v625 = vadd.f32 %v528, %v624
    %v626 = vpop.f32.mrf.mxu0
    %627 = vmatprep.mubr.bf16.mxu0 %v233
    %628 = vmatmul.mubr.bf16.gmra.mxu0 %v232
    %v629 = vpop.f32.mrf.mxu0
    %v630 = vadd.f32 %v533, %v629
    %v631 = vpop.f32.mrf.mxu0
    %v632 = vpop.f32.mrf.mxu0
    %v633 = vadd.f32 %v536, %v632
    %v634 = vpop.f32.mrf.mxu0
    %635 = vmatprep.mubr.bf16.mxu0 %v237
    %636 = vmatmul.mubr.bf16.gmra.mxu0 %v236
    %v637 = vpop.f32.mrf.mxu0
    %v638 = vadd.f32 %v541, %v637
    %v639 = vpop.f32.mrf.mxu0
    %v640 = vpop.f32.mrf.mxu0
    %v641 = vadd.f32 %v544, %v640
    %v642 = vpop.f32.mrf.mxu0
    %643 = vmatprep.mubr.bf16.mxu0 %v241
    %644 = vmatmul.mubr.bf16.gmra.mxu0 %v240
    %v645 = vpop.f32.mrf.mxu0
    %v646 = vadd.f32 %v549, %v645
    %v647 = vpop.f32.mrf.mxu0
    %v648 = vpop.f32.mrf.mxu0
    %v649 = vadd.f32 %v552, %v648
    %v650 = vpop.f32.mrf.mxu0
    %651 = vmatprep.mubr.bf16.mxu0 %v245
    %652 = vmatmul.mubr.bf16.gmra.mxu0 %v244
    %v653 = vpop.f32.mrf.mxu0
    %v654 = vadd.f32 %v557, %v653
    %v655 = vpop.f32.mrf.mxu0
    %v656 = vpop.f32.mrf.mxu0
    %v657 = vadd.f32 %v560, %v656
    %v658 = vpop.f32.mrf.mxu0
    %659 = vmatprep.mubr.bf16.mxu0 %v249
    %660 = vmatmul.mubr.bf16.gmra.mxu0 %v248
    %v661 = vpop.f32.mrf.mxu0
    %v662 = vadd.f32 %v565, %v661
    %v663 = vpop.f32.mrf.mxu0
    %v664 = vpop.f32.mrf.mxu0
    %v665 = vadd.f32 %v568, %v664
    %v666 = vpop.f32.mrf.mxu0
    %667 = vdwg.mxu0
    %v668 = vld [vmem:[%s3] sm:$0xff]
    %v669 = vld [vmem:[%s3 + $0x8] sm:$0xff]
    %v670 = vld [vmem:[%s3 + $0x10] sm:$0xff]
    %v671 = vld [vmem:[%s3 + $0x18] sm:$0xff]
    %v672 = vld [vmem:[%s3 + $0x20] sm:$0xff]
    %v673 = vld [vmem:[%s3 + $0x28] sm:$0xff]
    %v674 = vld [vmem:[%s3 + $0x30] sm:$0xff]
    %v675 = vld [vmem:[%s3 + $0x38] sm:$0xff]
    %v676 = vld [vmem:[%s3 + $0x40] sm:$0xff]
    %v677 = vld [vmem:[%s3 + $0x48] sm:$0xff]
    %v678 = vld [vmem:[%s3 + $0x50] sm:$0xff]
    %v679 = vld [vmem:[%s3 + $0x58] sm:$0xff]
    %v680 = vld [vmem:[%s3 + $0x60] sm:$0xff]
    %v681 = vld [vmem:[%s3 + $0x68] sm:$0xff]
    %v682 = vld [vmem:[%s3 + $0x70] sm:$0xff]
    %v683 = vld [vmem:[%s3 + $0x78] sm:$0xff]
    %v684 = vadd.f32 %v606, %v668
    %v685 = vadd.f32 %v609, %v669
    %v686 = vadd.f32 %v614, %v670
    %v687 = vadd.f32 %v617, %v671
    %v688 = vadd.f32 %v622, %v672
    %v689 = vadd.f32 %v625, %v673
    %v690 = vadd.f32 %v630, %v674
    %v691 = vadd.f32 %v633, %v675
    %v692 = vadd.f32 %v638, %v676
    %v693 = vadd.f32 %v641, %v677
    %v694 = vadd.f32 %v646, %v678
    %v695 = vadd.f32 %v649, %v679
    %v696 = vadd.f32 %v654, %v680
    %v697 = vadd.f32 %v657, %v681
    %v698 = vadd.f32 %v662, %v682
    %v699 = vadd.f32 %v665, %v683
    %700 = vst [vmem:[#allocation2] sm:$0xff] %v684
    %701 = vst [vmem:[#allocation2 + $0x8] sm:$0xff] %v685
    %702 = vst [vmem:[#allocation2 + $0x10] sm:$0xff] %v686
    %703 = vst [vmem:[#allocation2 + $0x18] sm:$0xff] %v687
    %704 = vst [vmem:[#allocation2 + $0x20] sm:$0xff] %v688
    %705 = vst [vmem:[#allocation2 + $0x28] sm:$0xff] %v689
    %706 = vst [vmem:[#allocation2 + $0x30] sm:$0xff] %v690
    %707 = vst [vmem:[#allocation2 + $0x38] sm:$0xff] %v691
    %708 = vst [vmem:[#allocation2 + $0x40] sm:$0xff] %v692
    %709 = vst [vmem:[#allocation2 + $0x48] sm:$0xff] %v693
    %710 = vst [vmem:[#allocation2 + $0x50] sm:$0xff] %v694
    %711 = vst [vmem:[#allocation2 + $0x58] sm:$0xff] %v695
    %712 = vst [vmem:[#allocation2 + $0x60] sm:$0xff] %v696
    %713 = vst [vmem:[#allocation2 + $0x68] sm:$0xff] %v697
    %714 = vst [vmem:[#allocation2 + $0x70] sm:$0xff] %v698
    %715 = vst [vmem:[#allocation2 + $0x78] sm:$0xff] %v699
    // Predicated region
    $region18: #{sam2_pe_simple_lst_forward.17} parent=1 // pred_check
      _
    $region19: #{sam2_pe_simple_lst_forward.17} parent=1 // pred_check_branch
      %717 = sbr.rel (0) target = $region21
    $region20: #{sam2_pe_simple_lst_forward.17} parent=1 // pred_region
      %s719 = ssub.s32 2048, 2048
      %720 = vsyncadd [#allocation3], %s719
      %s721 = sshll.u32 [#allocation2], 4
      %s722 = int_to_ptr.vmem [resolvable:$true] %s721
      %727 = dma.vmem_to_hbm [thread:$0]  %s722, 2048, %s4, [#allocation3], 128, 128, 8
    $region21: #{sam2_pe_simple_lst_forward.17} parent=1 // pred_fallthru
      _
    // Predicated region
    $region22: #{sam2_pe_simple_lst_forward.17} parent=1 // pred_check
      _
    $region23: #{sam2_pe_simple_lst_forward.17} parent=1 // pred_check_branch
      %729 = sbr.rel (0) target = $region25
    $region24: #{sam2_pe_simple_lst_forward.17} parent=1 // pred_region
      %730 = dma.done [#allocation3], 2048
    $region25: #{sam2_pe_simple_lst_forward.17} parent=1 // pred_fallthru
      _
    %731 = vsyncpa [#allocation3], 1

</llo_original>
